<compile_context>
chip_gen: v7x
topology: tpu7x:2x2x1
jax: 0.10.0
libtpu: 0.0.40
codegen_flags: <defaults>
</compile_context>

<pallas_src>
import math
from functools import partial

import jax
import jax.numpy as jnp
from jax import lax
from jax.experimental import pallas as pl
from jax.experimental.pallas import tpu as pltpu

VMEM_SPEC = pl.BlockSpec(memory_space=pltpu.MemorySpace.VMEM)
BN_EPS = 1e-5


def _pick_tile_m(m, cap=2048):
    """Largest lane-dense (multiple-of-128) tile <= cap dividing m; else the full extent."""
    if m <= cap:
        return m
    t = (cap // 128) * 128
    while t >= 128:
        if m % t == 0:
            return t
        t -= 128
    return m


# ----------------------------------------------------------------------------
# Encoder building blocks (transposed / lane-dense layout):
#   out^T (Cout, M) = W (Cout, 9Cin) @ col^T (9Cin, M), tiled over M (lane axis).
# ----------------------------------------------------------------------------
def _matmulT_stats_kernel(w_ref, x_ref, z_ref, s_ref, s2_ref):
    # pass 1: tiled matmul (bf16 in, f32 acc); per-tile per-channel sum / sumsq partials.
    z = jnp.dot(w_ref[...], x_ref[...], preferred_element_type=jnp.float32)  # (Cout, tile_m)
    z_ref[...] = z.astype(z_ref.dtype)                                       # bf16 intermediate
    s_ref[...] = jnp.sum(z, axis=1, keepdims=True)[None]                     # (1, Cout, 1)
    s2_ref[...] = jnp.sum(z * z, axis=1, keepdims=True)[None]


def matmulT_with_stats(wT, colT, tile_m):
    cout, k = wT.shape
    m = colT.shape[1]
    nt = m // tile_m
    return pl.pallas_call(
        _matmulT_stats_kernel,
        out_shape=(jax.ShapeDtypeStruct((cout, m), jnp.bfloat16),
                   jax.ShapeDtypeStruct((nt, cout, 1), jnp.float32),
                   jax.ShapeDtypeStruct((nt, cout, 1), jnp.float32)),
        grid=(nt,),
        in_specs=[pl.BlockSpec((cout, k), lambda i: (0, 0)),
                  pl.BlockSpec((k, tile_m), lambda i: (0, i))],
        out_specs=(pl.BlockSpec((cout, tile_m), lambda i: (0, i)),
                   pl.BlockSpec((1, cout, 1), lambda i: (i, 0, 0)),
                   pl.BlockSpec((1, cout, 1), lambda i: (i, 0, 0))),
        compiler_params=pltpu.CompilerParams(
            dimension_semantics=("parallel",),         # stats are per-tile partials -> both TCs
            vmem_limit_bytes=32 * 1024 * 1024),
    )(wT, colT)


def _affine_actT_kernel(z_ref, a_ref, b_ref, o_ref, *, activation):
    # pass 2: per-channel affine (folded BN) + activation; lane-dense stores.
    z = z_ref[...].astype(jnp.float32) * a_ref[...] + b_ref[...]
    if activation == "relu":
        z = jnp.maximum(z, 0.0)
    elif activation == "sigmoid":
        z = 1.0 / (1.0 + jnp.exp(-z))                  # exact (argmin ties must not flip)
    o_ref[...] = z


def affine_actT(z, a, b, activation, tile_m):
    cout, m = z.shape
    return pl.pallas_call(
        partial(_affine_actT_kernel, activation=activation),
        out_shape=jax.ShapeDtypeStruct((cout, m), jnp.float32),
        grid=(m // tile_m,),
        in_specs=[pl.BlockSpec((cout, tile_m), lambda i: (0, i)),
                  pl.BlockSpec((cout, 1), lambda i: (0, 0)),
                  pl.BlockSpec((cout, 1), lambda i: (0, 0))],
        out_specs=pl.BlockSpec((cout, tile_m), lambda i: (0, i)),
        compiler_params=pltpu.CompilerParams(
            dimension_semantics=("parallel",),
            vmem_limit_bytes=32 * 1024 * 1024),
    )(z, a, b)


def _matmulT_affine_act_kernel(w_ref, x_ref, a_ref, b_ref, o_ref, *, activation):
    # fused single pass for layers without BN (the sigmoid head).
    z = jnp.dot(w_ref[...], x_ref[...], preferred_element_type=jnp.float32)
    z = z * a_ref[...] + b_ref[...]
    if activation == "relu":
        z = jnp.maximum(z, 0.0)
    elif activation == "sigmoid":
        z = 1.0 / (1.0 + jnp.exp(-z))
    o_ref[...] = z


def matmulT_affine_act(wT, colT, a, b, activation, tile_m):
    cout, k = wT.shape
    m = colT.shape[1]
    return pl.pallas_call(
        partial(_matmulT_affine_act_kernel, activation=activation),
        out_shape=jax.ShapeDtypeStruct((cout, m), jnp.float32),
        grid=(m // tile_m,),
        in_specs=[pl.BlockSpec((cout, k), lambda i: (0, 0)),
                  pl.BlockSpec((k, tile_m), lambda i: (0, i)),
                  pl.BlockSpec((cout, 1), lambda i: (0, 0)),
                  pl.BlockSpec((cout, 1), lambda i: (0, 0))],
        out_specs=pl.BlockSpec((cout, tile_m), lambda i: (0, i)),
        compiler_params=pltpu.CompilerParams(
            dimension_semantics=("parallel",),
            vmem_limit_bytes=32 * 1024 * 1024),
    )(wT, colT, a, b)


def im2col3x3_T(x):
    """(C,B,H,W) -> (9*C, B*H*W) bf16; pure-JAX layout glue feeding the Pallas matmuls."""
    c, b, h, w = x.shape
    xp = jnp.pad(x, ((0, 0), (0, 0), (1, 1), (1, 1)))
    taps = [xp[:, :, dh:dh + h, dw:dw + w] for dh in range(3) for dw in range(3)]
    col = jnp.stack(taps, axis=0)                      # (9, C, B, H, W)
    return col.reshape(9 * c, b * h * w)


def conv3x3(x, p, *, use_bn=True, activation="relu"):
    c, b, h, w = x.shape
    colT = im2col3x3_T(x.astype(jnp.bfloat16))
    wT = p["w"].astype(jnp.bfloat16)
    m = colT.shape[1]
    tile_m = _pick_tile_m(m)
    if use_bn:
        z, s_p, s2_p = matmulT_with_stats(wT, colT, tile_m)
        s = jnp.sum(s_p, axis=0)                       # (Cout, 1)
        s2 = jnp.sum(s2_p, axis=0)
        mean = s / m
        var = jnp.maximum(s2 / m - mean * mean, 0.0)   # training-mode (biased) variance
        a = p["scale"] * lax.rsqrt(var + BN_EPS)
        bb = p["bias"] - mean * a
        out = affine_actT(z, a, bb, activation, tile_m)
    else:
        out = matmulT_affine_act(wT, colT, p["scale"], p["bias"], activation, tile_m)
    return out.reshape(-1, b, h, w)                    # (Cout, B, H, W)


def maxpool2(x):
    c, b, h, w = x.shape
    return x.reshape(c, b, h // 2, 2, w // 2, 2).max(axis=(3, 5))


def upsample2(x):
    return jnp.repeat(jnp.repeat(x, 2, axis=2), 2, axis=3)


def _init_conv(key, cin, cout, *, bn=True):
    kw, ka, kb = jax.random.split(key, 3)
    w = jax.random.normal(kw, (cout, 9 * cin), jnp.float32) * math.sqrt(2.0 / (9 * cin))
    if bn:
        scale = 1.0 + 0.1 * jax.random.normal(ka, (cout, 1), jnp.float32)
    else:
        scale = jnp.ones((cout, 1), jnp.float32)
    bias = 0.1 * jax.random.normal(kb, (cout, 1), jnp.float32)
    return {"w": w, "scale": scale, "bias": bias}


def init_encoder_params(key, in_ch=2, c0=8, c1=16, c2=32):
    keys = jax.random.split(key, 7)
    return {
        "x00": _init_conv(keys[0], in_ch, c0),
        "x10": _init_conv(keys[1], c0, c1),
        "x20": _init_conv(keys[2], c1, c2),
        "x01": _init_conv(keys[3], c0 + c1, c0),
        "x11": _init_conv(keys[4], c1 + c2, c1),
        "x02": _init_conv(keys[5], 2 * c0 + c1, c0),
        "head": _init_conv(keys[6], c0, 1, bn=False),
    }


# TODO(synk): the exact segmentation_models_pytorch UnetPlusPlus('vgg16_bn', depth=4) backbone
# is not reproduced; this is a reduced-width depth-2 UNet++ (same nested dense-skip topology,
# train-mode BatchNorm, sigmoid head) with deterministic synthetic weights.
def encoder_forward(params, x_cbhw):
    x00 = conv3x3(x_cbhw, params["x00"])
    x10 = conv3x3(maxpool2(x00), params["x10"])
    x20 = conv3x3(maxpool2(x10), params["x20"])
    x01 = conv3x3(jnp.concatenate([x00, upsample2(x10)], axis=0), params["x01"])
    x11 = conv3x3(jnp.concatenate([x10, upsample2(x20)], axis=0), params["x11"])
    x02 = conv3x3(jnp.concatenate([x00, x01, upsample2(x11)], axis=0), params["x02"])
    pred = conv3x3(x02, params["head"], use_bn=False, activation="sigmoid")
    return pred                                        # (1, B, H, W), values in (0, 1)


# ----------------------------------------------------------------------------
# Differentiable A* (forward semantics) — one Pallas kernel: search + backtrack
# State is lane-dense (B, H*W); neighbour expansion is pure elementwise work.
# ----------------------------------------------------------------------------
def _make_astar_kernel(batch, hw, width, t_max, g_ratio):
    big = 1e30
    width_f = float(width)

    def kernel(cost_ref, heur_ref, start_ref, goal_ref, obst_ref,
               row_ref, col_ref, gidx_ref, hist_ref, path_ref):
        cost = cost_ref[...]
        heur = heur_ref[...]
        start = start_ref[...]
        goal = goal_ref[...]
        obst = obst_ref[...]
        row_f = row_ref[...]
        col_f = col_ref[...]
        goal_idx = gidx_ref[...]                                   # (B,1) int32

        shape = (batch, hw)
        flat_i = lax.broadcasted_iota(jnp.int32, shape, 1)         # flat cell index

        h_total = heur + cost

        hist0 = jnp.zeros(shape, jnp.float32)
        open0 = start
        g0 = jnp.zeros(shape, jnp.float32)
        parents0 = jnp.broadcast_to(goal_idx.astype(jnp.float32), shape)

        def cond_fn(carry):
            _h, _o, _g, _p, t, done = carry
            return jnp.logical_and(t < t_max, done < 0.5)

        def body_fn(carry):
            hist, open_m, g, parents, t, _done = carry

            # exp-free node selection: argmin of f over OPEN cells, first-index tie-break
            # (forward-equivalent to argmax(exp(-f/sqrt(W)) * open) of the reference).
            f = g_ratio * g + (1.0 - g_ratio) * h_total
            fo = jnp.where(open_m > 0.5, f, big)
            fmin = jnp.min(fo, axis=1, keepdims=True)              # (B,1)
            cand = jnp.where(fo <= fmin, flat_i, hw)
            sel_idx = jnp.min(cand, axis=1, keepdims=True)         # (B,1) int32
            sel = (flat_i == sel_idx).astype(jnp.float32)          # one-hot selection

            # goal test via scalar index comparison (no map reduction)
            is_unsolved = (sel_idx != goal_idx).astype(jnp.float32)  # (B,1)

            hist = jnp.clip(hist + sel, 0.0, 1.0)
            open_m = jnp.clip(open_m - is_unsolved * sel, 0.0, 1.0)

            # 8-connected (Moore) neighbour mask of the selected node, purely elementwise:
            sel_f = sel_idx.astype(jnp.float32)
            sel_r = jnp.sum(row_f * sel, axis=1, keepdims=True)    # row of selected cell
            sel_c = sel_f - sel_r * width_f                        # col of selected cell
            nbr = ((jnp.abs(row_f - sel_r) <= 1.5)
                   & (jnp.abs(col_f - sel_c) <= 1.5)
                   & (flat_i != sel_idx)).astype(jnp.float32)

            neighbor = nbr * obst
            sel_val = jnp.sum((g + cost) * sel, axis=1, keepdims=True)   # (g+cost) at selection
            g2 = sel_val * nbr

            idx = ((1.0 - open_m) * (1.0 - hist)
                   + open_m * (g > g2).astype(jnp.float32)) * neighbor
            g = g2 * idx + g * (1.0 - idx)
            open_m = jnp.clip(open_m + idx, 0.0, 1.0)
            parents = sel_f * idx + parents * (1.0 - idx)

            unsolved_cnt = jnp.sum(is_unsolved)                    # batch-coupled break flag
            done = jnp.where(unsolved_cnt < 0.5, 1.0, 0.0).astype(jnp.float32)
            return hist, open_m, g, parents, t + 1, done

        hist, _open_m, _g, parents, t_end, _done = lax.while_loop(
            cond_fn, body_fn,
            (hist0, open0, g0, parents0, jnp.int32(0), jnp.float32(0.0)))

        hist_ref[...] = hist

        # backtracking: follow parent pointers from the goal for (t_end - 1) steps
        bt_steps = t_end - 1
        loc0 = jnp.sum(parents * goal, axis=1, keepdims=True)      # parents[goal_idx]

        def bt_cond(carry):
            _path, _loc, j = carry
            return j < bt_steps

        def bt_body(carry):
            path, loc, j = carry
            onehot = (flat_i == loc.astype(jnp.int32)).astype(jnp.float32)
            path = jnp.maximum(path, onehot)
            loc = jnp.sum(parents * onehot, axis=1, keepdims=True)
            return path, loc, j + 1

        path, _loc, _j = lax.while_loop(bt_cond, bt_body, (goal, loc0, jnp.int32(0)))
        path_ref[...] = path

    return kernel


def differentiable_astar(pred_cost_maps, start_maps, goal_maps, obstacles_maps,
                         *, g_ratio=0.5, t_max_ratio=0.25, tb_factor=0.001):
    b, _, h, w = pred_cost_maps.shape
    hw = h * w
    cost = pred_cost_maps[:, 0].astype(jnp.float32)    # (B,H,W)
    start = start_maps[:, 0].astype(jnp.float32)
    goal = goal_maps[:, 0].astype(jnp.float32)
    obst = obstacles_maps[:, 0].astype(jnp.float32)

    # Moore-mechanism heuristic: chebyshev + tb_factor * euclidean (one-time setup glue)
    grid_r = jnp.broadcast_to(jnp.arange(h, dtype=jnp.float32)[None, :, None], (b, h, w))
    grid_c = jnp.broadcast_to(jnp.arange(w, dtype=jnp.float32)[None, None, :], (b, h, w))
    goal_r = jnp.sum(goal * grid_r, axis=(1, 2), keepdims=True)
    goal_c = jnp.sum(goal * grid_c, axis=(1, 2), keepdims=True)
    dr = jnp.abs(grid_r - goal_r)
    dc = jnp.abs(grid_c - goal_c)
    heur = (jnp.maximum(dr, dc) + tb_factor * jnp.sqrt(dr * dr + dc * dc)).astype(jnp.float32)

    # flatten everything to lane-dense (B, H*W); precompute row/col maps and goal index
    costf, heurf = cost.reshape(b, hw), heur.reshape(b, hw)
    startf, goalf, obstf = start.reshape(b, hw), goal.reshape(b, hw), obst.reshape(b, hw)
    rowf, colf = grid_r.reshape(b, hw), grid_c.reshape(b, hw)
    goal_idx = jnp.argmax(goalf, axis=1)[:, None].astype(jnp.int32)

    t_max = int(t_max_ratio * h * w)                   # module default is training mode: 0.25
    kernel = _make_astar_kernel(b, hw, w, t_max, g_ratio)
    hist, path = pl.pallas_call(
        kernel,
        out_shape=(jax.ShapeDtypeStruct((b, hw), jnp.float32),
                   jax.ShapeDtypeStruct((b, hw), jnp.float32)),
        in_specs=[VMEM_SPEC] * 8,
        out_specs=(VMEM_SPEC, VMEM_SPEC),
        compiler_params=pltpu.CompilerParams(vmem_limit_bytes=32 * 1024 * 1024),
    )(costf, heurf, startf, goalf, obstf, rowf, colf, goal_idx)

    histories = hist.reshape(b, 1, h, w)
    path_maps = path.reshape(b, 1, h, w).astype(jnp.int32)   # torch returns long; int32 here
    return histories, path_maps


# ----------------------------------------------------------------------------
# BBAstar.forward
# ----------------------------------------------------------------------------
def bbastar_forward(params, map_designs, start_maps, goal_maps):
    """encoder_input='m+', ignore_obstacles=True, learn_obstacles=False.
    BBAstarFunc.forward simply returns `histories` (bbastar_lambda only affects backward)."""
    inputs = jnp.concatenate([map_designs, start_maps + goal_maps], axis=1)   # NCHW (B,2,H,W)
    x = jnp.transpose(inputs, (1, 0, 2, 3))                                   # -> (C,B,H,W)
    pred = encoder_forward(params, x)                                         # (1,B,H,W)
    pred_cost_maps = jnp.transpose(pred, (1, 0, 2, 3))                        # NCHW (B,1,H,W)
    obstacles_maps = map_designs
    histories, paths = differentiable_astar(pred_cost_maps, start_maps, goal_maps,
                                            obstacles_maps)
    return histories, paths, pred_cost_maps


if __name__ == "__main__":
    key = jax.random.PRNGKey(0)
    k_par, k_map, k_s, k_g = jax.random.split(key, 4)
    B, H, W = 2, 16, 16
    HW = H * W

    params = init_encoder_params(k_par)

    map_designs = (jax.random.uniform(k_map, (B, 1, H, W)) > 0.25).astype(jnp.float32)
    sidx = jax.random.randint(k_s, (B,), 0, HW)
    gidx = jax.random.randint(k_g, (B,), 0, HW)
    start_maps = jax.nn.one_hot(sidx, HW, dtype=jnp.float32).reshape(B, 1, H, W)
    goal_maps = jax.nn.one_hot(gidx, HW, dtype=jnp.float32).reshape(B, 1, H, W)
    map_designs = jnp.clip(map_designs + start_maps + goal_maps, 0.0, 1.0)

    fwd = jax.jit(partial(bbastar_forward, params))
    histories, paths, pred_cost_maps = fwd(map_designs, start_maps, goal_maps)
    jax.block_until_ready((histories, paths, pred_cost_maps))

    assert histories.shape == (B, 1, H, W)
    assert paths.shape == (B, 1, H, W)
    assert pred_cost_maps.shape == (B, 1, H, W)
    print("KERNEL_OK")
</pallas_src>

<mosaic_0001>
module attributes {stable_mosaic.version = 11 : i64} {
  func.func @_affine_actT_kernel(%arg0: i32, %arg1: memref<8x512xbf16, #tpu.memory_space<vmem>>, %arg2: memref<8x1xf32, #tpu.memory_space<vmem>>, %arg3: memref<8x1xf32, #tpu.memory_space<vmem>>, %arg4: memref<8x512xf32, #tpu.memory_space<vmem>>) attributes {dimension_semantics = [#tpu.dimension_semantics<parallel>], iteration_bounds = array<i64: 1>, scalar_prefetch = 0 : i64, scratch_operands = 0 : i64, tpu.core_type = #tpu.core_type<tc>, window_params = [{transform_indices = @transform_0, window_bounds = array<i64: 8, 512>}, {pipeline_mode = #tpu.pipeline_mode<synchronous>, transform_indices = @transform_1, window_bounds = array<i64: 8, 1>}, {pipeline_mode = #tpu.pipeline_mode<synchronous>, transform_indices = @transform_2, window_bounds = array<i64: 8, 1>}, {transform_indices = @transform_3, window_bounds = array<i64: 8, 512>}]} {
    %c0 = arith.constant 0 : index
    %c0_0 = arith.constant 0 : index
    %0 = vector.load %arg1[%c0, %c0_0] : memref<8x512xbf16, #tpu.memory_space<vmem>>, vector<8x512xbf16>
    %1 = arith.extf %0 : vector<8x512xbf16> to vector<8x512xf32>
    %c0_1 = arith.constant 0 : index
    %c0_2 = arith.constant 0 : index
    %2 = vector.load %arg2[%c0_1, %c0_2] : memref<8x1xf32, #tpu.memory_space<vmem>>, vector<8x1xf32>
    %3 = vector.broadcast %2 : vector<8x1xf32> to vector<8x512xf32>
    %4 = arith.mulf %1, %3 : vector<8x512xf32>
    %c0_3 = arith.constant 0 : index
    %c0_4 = arith.constant 0 : index
    %5 = vector.load %arg3[%c0_3, %c0_4] : memref<8x1xf32, #tpu.memory_space<vmem>>, vector<8x1xf32>
    %6 = vector.broadcast %5 : vector<8x1xf32> to vector<8x512xf32>
    %7 = arith.addf %4, %6 : vector<8x512xf32>
    %cst = arith.constant 0.000000e+00 : f32
    %8 = vector.broadcast %cst : f32 to vector<8x512xf32>
    %9 = arith.maximumf %7, %8 : vector<8x512xf32>
    %c0_5 = arith.constant 0 : index
    %c0_6 = arith.constant 0 : index
    %10 = vector.load %arg4[%c0_5, %c0_6] : memref<8x512xf32, #tpu.memory_space<vmem>>, vector<8x512xf32>
    tpu.vector_store %arg4[%c0_5, %c0_6], %9 {strides = array<i32>} : memref<8x512xf32, #tpu.memory_space<vmem>>, vector<8x512xf32>,
    return
  }
  func.func @transform_0(%arg0: i32) -> (i32, i32) {
    %c0_i32 = arith.constant 0 : i32
    %c0_i32_0 = arith.constant 0 : i32
    return %c0_i32, %arg0 : i32, i32
  }
  func.func @transform_1(%arg0: i32) -> (i32, i32) {
    %c0_i32 = arith.constant 0 : i32
    %c0_i32_0 = arith.constant 0 : i32
    %c0_i32_1 = arith.constant 0 : i32
    return %c0_i32, %c0_i32_0 : i32, i32
  }
  func.func @transform_2(%arg0: i32) -> (i32, i32) {
    %c0_i32 = arith.constant 0 : i32
    %c0_i32_0 = arith.constant 0 : i32
    %c0_i32_1 = arith.constant 0 : i32
    return %c0_i32, %c0_i32_0 : i32, i32
  }
  func.func @transform_3(%arg0: i32) -> (i32, i32) {
    %c0_i32 = arith.constant 0 : i32
    %c0_i32_0 = arith.constant 0 : i32
    return %c0_i32, %arg0 : i32, i32
  }
}

module attributes {stable_mosaic.version = 11 : i64} {
  func.func @_matmulT_stats_kernel(%arg0: i32, %arg1: memref<8x18xbf16, #tpu.memory_space<vmem>>, %arg2: memref<18x512xbf16, #tpu.memory_space<vmem>>, %arg3: memref<8x512xbf16, #tpu.memory_space<vmem>>, %arg4: memref<1x8x1xf32, #tpu.memory_space<vmem>>, %arg5: memref<1x8x1xf32, #tpu.memory_space<vmem>>) attributes {dimension_semantics = [#tpu.dimension_semantics<parallel>], iteration_bounds = array<i64: 1>, scalar_prefetch = 0 : i64, scratch_operands = 0 : i64, tpu.core_type = #tpu.core_type<tc>, window_params = [{pipeline_mode = #tpu.pipeline_mode<synchronous>, transform_indices = @transform_0, window_bounds = array<i64: 8, 18>}, {transform_indices = @transform_1, window_bounds = array<i64: 18, 512>}, {transform_indices = @transform_2, window_bounds = array<i64: 8, 512>}, {transform_indices = @transform_3, window_bounds = array<i64: 1, 8, 1>}, {transform_indices = @transform_4, window_bounds = array<i64: 1, 8, 1>}]} {
    %c0 = arith.constant 0 : index
    %c0_0 = arith.constant 0 : index
    %0 = vector.load %arg1[%c0, %c0_0] : memref<8x18xbf16, #tpu.memory_space<vmem>>, vector<8x18xbf16>
    %c0_1 = arith.constant 0 : index
    %c0_2 = arith.constant 0 : index
    %1 = vector.load %arg2[%c0_1, %c0_2] : memref<18x512xbf16, #tpu.memory_space<vmem>>, vector<18x512xbf16>
    %cst = arith.constant dense<0.000000e+00> : vector<8x512xf32>
    %2 = tpu.matmul %0, %1, %cst {dimension_numbers = #tpu.dot_dimension_numbers<[1], [0], [0], [1], [0, 0, 1, 1], [], []>} : vector<8x18xbf16>, vector<18x512xbf16>, vector<8x512xf32> -> vector<8x512xf32>
    %3 = arith.truncf %2 : vector<8x512xf32> to vector<8x512xbf16>
    %c0_3 = arith.constant 0 : index
    %c0_4 = arith.constant 0 : index
    %4 = vector.load %arg3[%c0_3, %c0_4] : memref<8x512xbf16, #tpu.memory_space<vmem>>, vector<8x512xbf16>
    tpu.vector_store %arg3[%c0_3, %c0_4], %3 {strides = array<i32>} : memref<8x512xbf16, #tpu.memory_space<vmem>>, vector<8x512xbf16>,
    %cst_5 = arith.constant dense<0.000000e+00> : vector<8xf32>
    %5 = vector.multi_reduction <add>, %2, %cst_5 [1] : vector<8x512xf32> to vector<8xf32>
    %6 = vector.shape_cast %5 : vector<8xf32> to vector<8x1xf32>
    %7 = vector.shape_cast %6 : vector<8x1xf32> to vector<1x8x1xf32>
    %c0_6 = arith.constant 0 : index
    %c0_7 = arith.constant 0 : index
    %c0_8 = arith.constant 0 : index
    %8 = vector.load %arg4[%c0_6, %c0_7, %c0_8] : memref<1x8x1xf32, #tpu.memory_space<vmem>>, vector<1x8x1xf32>
    tpu.vector_store %arg4[%c0_6, %c0_7, %c0_8], %7 {strides = array<i32>} : memref<1x8x1xf32, #tpu.memory_space<vmem>>, vector<1x8x1xf32>,
    %9 = arith.mulf %2, %2 : vector<8x512xf32>
    %cst_9 = arith.constant dense<0.000000e+00> : vector<8xf32>
    %10 = vector.multi_reduction <add>, %9, %cst_9 [1] : vector<8x512xf32> to vector<8xf32>
    %11 = vector.shape_cast %10 : vector<8xf32> to vector<8x1xf32>
    %12 = vector.shape_cast %11 : vector<8x1xf32> to vector<1x8x1xf32>
    %c0_10 = arith.constant 0 : index
    %c0_11 = arith.constant 0 : index
    %c0_12 = arith.constant 0 : index
    %13 = vector.load %arg5[%c0_10, %c0_11, %c0_12] : memref<1x8x1xf32, #tpu.memory_space<vmem>>, vector<1x8x1xf32>
    tpu.vector_store %arg5[%c0_10, %c0_11, %c0_12], %12 {strides = array<i32>} : memref<1x8x1xf32, #tpu.memory_space<vmem>>, vector<1x8x1xf32>,
    return
  }
  func.func @transform_0(%arg0: i32) -> (i32, i32) {
    %c0_i32 = arith.constant 0 : i32
    %c0_i32_0 = arith.constant 0 : i32
    %c0_i32_1 = arith.constant 0 : i32
    return %c0_i32, %c0_i32_0 : i32, i32
  }
  func.func @transform_1(%arg0: i32) -> (i32, i32) {
    %c0_i32 = arith.constant 0 : i32
    %c0_i32_0 = arith.constant 0 : i32
    return %c0_i32, %arg0 : i32, i32
  }
  func.func @transform_2(%arg0: i32) -> (i32, i32) {
    %c0_i32 = arith.constant 0 : i32
    %c0_i32_0 = arith.constant 0 : i32
    return %c0_i32, %arg0 : i32, i32
  }
  func.func @transform_3(%arg0: i32) -> (i32, i32, i32) {
    %c0_i32 = arith.constant 0 : i32
    %c0_i32_0 = arith.constant 0 : i32
    %c0_i32_1 = arith.constant 0 : i32
    return %arg0, %c0_i32, %c0_i32_0 : i32, i32, i32
  }
  func.func @transform_4(%arg0: i32) -> (i32, i32, i32) {
    %c0_i32 = arith.constant 0 : i32
    %c0_i32_0 = arith.constant 0 : i32
    %c0_i32_1 = arith.constant 0 : i32
    return %arg0, %c0_i32, %c0_i32_0 : i32, i32, i32
  }
}

module attributes {stable_mosaic.version = 11 : i64} {
  func.func @_matmulT_stats_kernel(%arg0: i32, %arg1: memref<16x72xbf16, #tpu.memory_space<vmem>>, %arg2: memref<72x128xbf16, #tpu.memory_space<vmem>>, %arg3: memref<16x128xbf16, #tpu.memory_space<vmem>>, %arg4: memref<1x16x1xf32, #tpu.memory_space<vmem>>, %arg5: memref<1x16x1xf32, #tpu.memory_space<vmem>>) attributes {dimension_semantics = [#tpu.dimension_semantics<parallel>], iteration_bounds = array<i64: 1>, scalar_prefetch = 0 : i64, scratch_operands = 0 : i64, tpu.core_type = #tpu.core_type<tc>, window_params = [{pipeline_mode = #tpu.pipeline_mode<synchronous>, transform_indices = @transform_0, window_bounds = array<i64: 16, 72>}, {transform_indices = @transform_1, window_bounds = array<i64: 72, 128>}, {transform_indices = @transform_2, window_bounds = array<i64: 16, 128>}, {transform_indices = @transform_3, window_bounds = array<i64: 1, 16, 1>}, {transform_indices = @transform_4, window_bounds = array<i64: 1, 16, 1>}]} {
    %c0 = arith.constant 0 : index
    %c0_0 = arith.constant 0 : index
    %0 = vector.load %arg1[%c0, %c0_0] : memref<16x72xbf16, #tpu.memory_space<vmem>>, vector<16x72xbf16>
    %c0_1 = arith.constant 0 : index
    %c0_2 = arith.constant 0 : index
    %1 = vector.load %arg2[%c0_1, %c0_2] : memref<72x128xbf16, #tpu.memory_space<vmem>>, vector<72x128xbf16>
    %cst = arith.constant dense<0.000000e+00> : vector<16x128xf32>
    %2 = tpu.matmul %0, %1, %cst {dimension_numbers = #tpu.dot_dimension_numbers<[1], [0], [0], [1], [0, 0, 1, 1], [], []>} : vector<16x72xbf16>, vector<72x128xbf16>, vector<16x128xf32> -> vector<16x128xf32>
    %3 = arith.truncf %2 : vector<16x128xf32> to vector<16x128xbf16>
    %c0_3 = arith.constant 0 : index
    %c0_4 = arith.constant 0 : index
    %4 = vector.load %arg3[%c0_3, %c0_4] : memref<16x128xbf16, #tpu.memory_space<vmem>>, vector<16x128xbf16>
    tpu.vector_store %arg3[%c0_3, %c0_4], %3 {strides = array<i32>} : memref<16x128xbf16, #tpu.memory_space<vmem>>, vector<16x128xbf16>,
    %cst_5 = arith.constant dense<0.000000e+00> : vector<16xf32>
    %5 = vector.multi_reduction <add>, %2, %cst_5 [1] : vector<16x128xf32> to vector<16xf32>
    %6 = vector.shape_cast %5 : vector<16xf32> to vector<16x1xf32>
    %7 = vector.shape_cast %6 : vector<16x1xf32> to vector<1x16x1xf32>
    %c0_6 = arith.constant 0 : index
    %c0_7 = arith.constant 0 : index
    %c0_8 = arith.constant 0 : index
    %8 = vector.load %arg4[%c0_6, %c0_7, %c0_8] : memref<1x16x1xf32, #tpu.memory_space<vmem>>, vector<1x16x1xf32>
    tpu.vector_store %arg4[%c0_6, %c0_7, %c0_8], %7 {strides = array<i32>} : memref<1x16x1xf32, #tpu.memory_space<vmem>>, vector<1x16x1xf32>,
    %9 = arith.mulf %2, %2 : vector<16x128xf32>
    %cst_9 = arith.constant dense<0.000000e+00> : vector<16xf32>
    %10 = vector.multi_reduction <add>, %9, %cst_9 [1] : vector<16x128xf32> to vector<16xf32>
    %11 = vector.shape_cast %10 : vector<16xf32> to vector<16x1xf32>
    %12 = vector.shape_cast %11 : vector<16x1xf32> to vector<1x16x1xf32>
    %c0_10 = arith.constant 0 : index
    %c0_11 = arith.constant 0 : index
    %c0_12 = arith.constant 0 : index
    %13 = vector.load %arg5[%c0_10, %c0_11, %c0_12] : memref<1x16x1xf32, #tpu.memory_space<vmem>>, vector<1x16x1xf32>
    tpu.vector_store %arg5[%c0_10, %c0_11, %c0_12], %12 {strides = array<i32>} : memref<1x16x1xf32, #tpu.memory_space<vmem>>, vector<1x16x1xf32>,
    return
  }
  func.func @transform_0(%arg0: i32) -> (i32, i32) {
    %c0_i32 = arith.constant 0 : i32
    %c0_i32_0 = arith.constant 0 : i32
    %c0_i32_1 = arith.constant 0 : i32
    return %c0_i32, %c0_i32_0 : i32, i32
  }
  func.func @transform_1(%arg0: i32) -> (i32, i32) {
    %c0_i32 = arith.constant 0 : i32
    %c0_i32_0 = arith.constant 0 : i32
    return %c0_i32, %arg0 : i32, i32
  }
  func.func @transform_2(%arg0: i32) -> (i32, i32) {
    %c0_i32 = arith.constant 0 : i32
    %c0_i32_0 = arith.constant 0 : i32
    return %c0_i32, %arg0 : i32, i32
  }
  func.func @transform_3(%arg0: i32) -> (i32, i32, i32) {
    %c0_i32 = arith.constant 0 : i32
    %c0_i32_0 = arith.constant 0 : i32
    %c0_i32_1 = arith.constant 0 : i32
    return %arg0, %c0_i32, %c0_i32_0 : i32, i32, i32
  }
  func.func @transform_4(%arg0: i32) -> (i32, i32, i32) {
    %c0_i32 = arith.constant 0 : i32
    %c0_i32_0 = arith.constant 0 : i32
    %c0_i32_1 = arith.constant 0 : i32
    return %arg0, %c0_i32, %c0_i32_0 : i32, i32, i32
  }
}

module attributes {stable_mosaic.version = 11 : i64} {
  func.func @_affine_actT_kernel(%arg0: i32, %arg1: memref<16x128xbf16, #tpu.memory_space<vmem>>, %arg2: memref<16x1xf32, #tpu.memory_space<vmem>>, %arg3: memref<16x1xf32, #tpu.memory_space<vmem>>, %arg4: memref<16x128xf32, #tpu.memory_space<vmem>>) attributes {dimension_semantics = [#tpu.dimension_semantics<parallel>], iteration_bounds = array<i64: 1>, scalar_prefetch = 0 : i64, scratch_operands = 0 : i64, tpu.core_type = #tpu.core_type<tc>, window_params = [{transform_indices = @transform_0, window_bounds = array<i64: 16, 128>}, {pipeline_mode = #tpu.pipeline_mode<synchronous>, transform_indices = @transform_1, window_bounds = array<i64: 16, 1>}, {pipeline_mode = #tpu.pipeline_mode<synchronous>, transform_indices = @transform_2, window_bounds = array<i64: 16, 1>}, {transform_indices = @transform_3, window_bounds = array<i64: 16, 128>}]} {
    %c0 = arith.constant 0 : index
    %c0_0 = arith.constant 0 : index
    %0 = vector.load %arg1[%c0, %c0_0] : memref<16x128xbf16, #tpu.memory_space<vmem>>, vector<16x128xbf16>
    %1 = arith.extf %0 : vector<16x128xbf16> to vector<16x128xf32>
    %c0_1 = arith.constant 0 : index
    %c0_2 = arith.constant 0 : index
    %2 = vector.load %arg2[%c0_1, %c0_2] : memref<16x1xf32, #tpu.memory_space<vmem>>, vector<16x1xf32>
    %3 = vector.broadcast %2 : vector<16x1xf32> to vector<16x128xf32>
    %4 = arith.mulf %1, %3 : vector<16x128xf32>
    %c0_3 = arith.constant 0 : index
    %c0_4 = arith.constant 0 : index
    %5 = vector.load %arg3[%c0_3, %c0_4] : memref<16x1xf32, #tpu.memory_space<vmem>>, vector<16x1xf32>
    %6 = vector.broadcast %5 : vector<16x1xf32> to vector<16x128xf32>
    %7 = arith.addf %4, %6 : vector<16x128xf32>
    %cst = arith.constant 0.000000e+00 : f32
    %8 = vector.broadcast %cst : f32 to vector<16x128xf32>
    %9 = arith.maximumf %7, %8 : vector<16x128xf32>
    %c0_5 = arith.constant 0 : index
    %c0_6 = arith.constant 0 : index
    %10 = vector.load %arg4[%c0_5, %c0_6] : memref<16x128xf32, #tpu.memory_space<vmem>>, vector<16x128xf32>
    tpu.vector_store %arg4[%c0_5, %c0_6], %9 {strides = array<i32>} : memref<16x128xf32, #tpu.memory_space<vmem>>, vector<16x128xf32>,
    return
  }
  func.func @transform_0(%arg0: i32) -> (i32, i32) {
    %c0_i32 = arith.constant 0 : i32
    %c0_i32_0 = arith.constant 0 : i32
    return %c0_i32, %arg0 : i32, i32
  }
  func.func @transform_1(%arg0: i32) -> (i32, i32) {
    %c0_i32 = arith.constant 0 : i32
    %c0_i32_0 = arith.constant 0 : i32
    %c0_i32_1 = arith.constant 0 : i32
    return %c0_i32, %c0_i32_0 : i32, i32
  }
  func.func @transform_2(%arg0: i32) -> (i32, i32) {
    %c0_i32 = arith.constant 0 : i32
    %c0_i32_0 = arith.constant 0 : i32
    %c0_i32_1 = arith.constant 0 : i32
    return %c0_i32, %c0_i32_0 : i32, i32
  }
  func.func @transform_3(%arg0: i32) -> (i32, i32) {
    %c0_i32 = arith.constant 0 : i32
    %c0_i32_0 = arith.constant 0 : i32
    return %c0_i32, %arg0 : i32, i32
  }
}

module attributes {stable_mosaic.version = 11 : i64} {
  func.func @_matmulT_stats_kernel(%arg0: i32, %arg1: memref<8x216xbf16, #tpu.memory_space<vmem>>, %arg2: memref<216x512xbf16, #tpu.memory_space<vmem>>, %arg3: memref<8x512xbf16, #tpu.memory_space<vmem>>, %arg4: memref<1x8x1xf32, #tpu.memory_space<vmem>>, %arg5: memref<1x8x1xf32, #tpu.memory_space<vmem>>) attributes {dimension_semantics = [#tpu.dimension_semantics<parallel>], iteration_bounds = array<i64: 1>, scalar_prefetch = 0 : i64, scratch_operands = 0 : i64, tpu.core_type = #tpu.core_type<tc>, window_params = [{pipeline_mode = #tpu.pipeline_mode<synchronous>, transform_indices = @transform_0, window_bounds = array<i64: 8, 216>}, {transform_indices = @transform_1, window_bounds = array<i64: 216, 512>}, {transform_indices = @transform_2, window_bounds = array<i64: 8, 512>}, {transform_indices = @transform_3, window_bounds = array<i64: 1, 8, 1>}, {transform_indices = @transform_4, window_bounds = array<i64: 1, 8, 1>}]} {
    %c0 = arith.constant 0 : index
    %c0_0 = arith.constant 0 : index
    %0 = vector.load %arg1[%c0, %c0_0] : memref<8x216xbf16, #tpu.memory_space<vmem>>, vector<8x216xbf16>
    %c0_1 = arith.constant 0 : index
    %c0_2 = arith.constant 0 : index
    %1 = vector.load %arg2[%c0_1, %c0_2] : memref<216x512xbf16, #tpu.memory_space<vmem>>, vector<216x512xbf16>
    %cst = arith.constant dense<0.000000e+00> : vector<8x512xf32>
    %2 = tpu.matmul %0, %1, %cst {dimension_numbers = #tpu.dot_dimension_numbers<[1], [0], [0], [1], [0, 0, 1, 1], [], []>} : vector<8x216xbf16>, vector<216x512xbf16>, vector<8x512xf32> -> vector<8x512xf32>
    %3 = arith.truncf %2 : vector<8x512xf32> to vector<8x512xbf16>
    %c0_3 = arith.constant 0 : index
    %c0_4 = arith.constant 0 : index
    %4 = vector.load %arg3[%c0_3, %c0_4] : memref<8x512xbf16, #tpu.memory_space<vmem>>, vector<8x512xbf16>
    tpu.vector_store %arg3[%c0_3, %c0_4], %3 {strides = array<i32>} : memref<8x512xbf16, #tpu.memory_space<vmem>>, vector<8x512xbf16>,
    %cst_5 = arith.constant dense<0.000000e+00> : vector<8xf32>
    %5 = vector.multi_reduction <add>, %2, %cst_5 [1] : vector<8x512xf32> to vector<8xf32>
    %6 = vector.shape_cast %5 : vector<8xf32> to vector<8x1xf32>
    %7 = vector.shape_cast %6 : vector<8x1xf32> to vector<1x8x1xf32>
    %c0_6 = arith.constant 0 : index
    %c0_7 = arith.constant 0 : index
    %c0_8 = arith.constant 0 : index
    %8 = vector.load %arg4[%c0_6, %c0_7, %c0_8] : memref<1x8x1xf32, #tpu.memory_space<vmem>>, vector<1x8x1xf32>
    tpu.vector_store %arg4[%c0_6, %c0_7, %c0_8], %7 {strides = array<i32>} : memref<1x8x1xf32, #tpu.memory_space<vmem>>, vector<1x8x1xf32>,
    %9 = arith.mulf %2, %2 : vector<8x512xf32>
    %cst_9 = arith.constant dense<0.000000e+00> : vector<8xf32>
    %10 = vector.multi_reduction <add>, %9, %cst_9 [1] : vector<8x512xf32> to vector<8xf32>
    %11 = vector.shape_cast %10 : vector<8xf32> to vector<8x1xf32>
    %12 = vector.shape_cast %11 : vector<8x1xf32> to vector<1x8x1xf32>
    %c0_10 = arith.constant 0 : index
    %c0_11 = arith.constant 0 : index
    %c0_12 = arith.constant 0 : index
    %13 = vector.load %arg5[%c0_10, %c0_11, %c0_12] : memref<1x8x1xf32, #tpu.memory_space<vmem>>, vector<1x8x1xf32>
    tpu.vector_store %arg5[%c0_10, %c0_11, %c0_12], %12 {strides = array<i32>} : memref<1x8x1xf32, #tpu.memory_space<vmem>>, vector<1x8x1xf32>,
    return
  }
  func.func @transform_0(%arg0: i32) -> (i32, i32) {
    %c0_i32 = arith.constant 0 : i32
    %c0_i32_0 = arith.constant 0 : i32
    %c0_i32_1 = arith.constant 0 : i32
    return %c0_i32, %c0_i32_0 : i32, i32
  }
  func.func @transform_1(%arg0: i32) -> (i32, i32) {
    %c0_i32 = arith.constant 0 : i32
    %c0_i32_0 = arith.constant 0 : i32
    return %c0_i32, %arg0 : i32, i32
  }
  func.func @transform_2(%arg0: i32) -> (i32, i32) {
    %c0_i32 = arith.constant 0 : i32
    %c0_i32_0 = arith.constant 0 : i32
    return %c0_i32, %arg0 : i32, i32
  }
  func.func @transform_3(%arg0: i32) -> (i32, i32, i32) {
    %c0_i32 = arith.constant 0 : i32
    %c0_i32_0 = arith.constant 0 : i32
    %c0_i32_1 = arith.constant 0 : i32
    return %arg0, %c0_i32, %c0_i32_0 : i32, i32, i32
  }
  func.func @transform_4(%arg0: i32) -> (i32, i32, i32) {
    %c0_i32 = arith.constant 0 : i32
    %c0_i32_0 = arith.constant 0 : i32
    %c0_i32_1 = arith.constant 0 : i32
    return %arg0, %c0_i32, %c0_i32_0 : i32, i32, i32
  }
}

module attributes {stable_mosaic.version = 11 : i64} {
  func.func @_matmulT_stats_kernel(%arg0: i32, %arg1: memref<32x144xbf16, #tpu.memory_space<vmem>>, %arg2: memref<144x32xbf16, #tpu.memory_space<vmem>>, %arg3: memref<32x32xbf16, #tpu.memory_space<vmem>>, %arg4: memref<1x32x1xf32, #tpu.memory_space<vmem>>, %arg5: memref<1x32x1xf32, #tpu.memory_space<vmem>>) attributes {dimension_semantics = [#tpu.dimension_semantics<parallel>], iteration_bounds = array<i64: 1>, scalar_prefetch = 0 : i64, scratch_operands = 0 : i64, tpu.core_type = #tpu.core_type<tc>, window_params = [{pipeline_mode = #tpu.pipeline_mode<synchronous>, transform_indices = @transform_0, window_bounds = array<i64: 32, 144>}, {transform_indices = @transform_1, window_bounds = array<i64: 144, 32>}, {transform_indices = @transform_2, window_bounds = array<i64: 32, 32>}, {transform_indices = @transform_3, window_bounds = array<i64: 1, 32, 1>}, {transform_indices = @transform_4, window_bounds = array<i64: 1, 32, 1>}]} {
    %c0 = arith.constant 0 : index
    %c0_0 = arith.constant 0 : index
    %0 = vector.load %arg1[%c0, %c0_0] : memref<32x144xbf16, #tpu.memory_space<vmem>>, vector<32x144xbf16>
    %c0_1 = arith.constant 0 : index
    %c0_2 = arith.constant 0 : index
    %1 = vector.load %arg2[%c0_1, %c0_2] : memref<144x32xbf16, #tpu.memory_space<vmem>>, vector<144x32xbf16>
    %cst = arith.constant dense<0.000000e+00> : vector<32x32xf32>
    %2 = tpu.matmul %0, %1, %cst {dimension_numbers = #tpu.dot_dimension_numbers<[1], [0], [0], [1], [0, 0, 1, 1], [], []>} : vector<32x144xbf16>, vector<144x32xbf16>, vector<32x32xf32> -> vector<32x32xf32>
    %3 = arith.truncf %2 : vector<32x32xf32> to vector<32x32xbf16>
    %c0_3 = arith.constant 0 : index
    %c0_4 = arith.constant 0 : index
    %4 = vector.load %arg3[%c0_3, %c0_4] : memref<32x32xbf16, #tpu.memory_space<vmem>>, vector<32x32xbf16>
    tpu.vector_store %arg3[%c0_3, %c0_4], %3 {strides = array<i32>} : memref<32x32xbf16, #tpu.memory_space<vmem>>, vector<32x32xbf16>,
    %cst_5 = arith.constant dense<0.000000e+00> : vector<32xf32>
    %5 = vector.multi_reduction <add>, %2, %cst_5 [1] : vector<32x32xf32> to vector<32xf32>
    %6 = vector.shape_cast %5 : vector<32xf32> to vector<32x1xf32>
    %7 = vector.shape_cast %6 : vector<32x1xf32> to vector<1x32x1xf32>
    %c0_6 = arith.constant 0 : index
    %c0_7 = arith.constant 0 : index
    %c0_8 = arith.constant 0 : index
    %8 = vector.load %arg4[%c0_6, %c0_7, %c0_8] : memref<1x32x1xf32, #tpu.memory_space<vmem>>, vector<1x32x1xf32>
    tpu.vector_store %arg4[%c0_6, %c0_7, %c0_8], %7 {strides = array<i32>} : memref<1x32x1xf32, #tpu.memory_space<vmem>>, vector<1x32x1xf32>,
    %9 = arith.mulf %2, %2 : vector<32x32xf32>
    %cst_9 = arith.constant dense<0.000000e+00> : vector<32xf32>
    %10 = vector.multi_reduction <add>, %9, %cst_9 [1] : vector<32x32xf32> to vector<32xf32>
    %11 = vector.shape_cast %10 : vector<32xf32> to vector<32x1xf32>
    %12 = vector.shape_cast %11 : vector<32x1xf32> to vector<1x32x1xf32>
    %c0_10 = arith.constant 0 : index
    %c0_11 = arith.constant 0 : index
    %c0_12 = arith.constant 0 : index
    %13 = vector.load %arg5[%c0_10, %c0_11, %c0_12] : memref<1x32x1xf32, #tpu.memory_space<vmem>>, vector<1x32x1xf32>
    tpu.vector_store %arg5[%c0_10, %c0_11, %c0_12], %12 {strides = array<i32>} : memref<1x32x1xf32, #tpu.memory_space<vmem>>, vector<1x32x1xf32>,
    return
  }
  func.func @transform_0(%arg0: i32) -> (i32, i32) {
    %c0_i32 = arith.constant 0 : i32
    %c0_i32_0 = arith.constant 0 : i32
    %c0_i32_1 = arith.constant 0 : i32
    return %c0_i32, %c0_i32_0 : i32, i32
  }
  func.func @transform_1(%arg0: i32) -> (i32, i32) {
    %c0_i32 = arith.constant 0 : i32
    %c0_i32_0 = arith.constant 0 : i32
    return %c0_i32, %arg0 : i32, i32
  }
  func.func @transform_2(%arg0: i32) -> (i32, i32) {
    %c0_i32 = arith.constant 0 : i32
    %c0_i32_0 = arith.constant 0 : i32
    return %c0_i32, %arg0 : i32, i32
  }
  func.func @transform_3(%arg0: i32) -> (i32, i32, i32) {
    %c0_i32 = arith.constant 0 : i32
    %c0_i32_0 = arith.constant 0 : i32
    %c0_i32_1 = arith.constant 0 : i32
    return %arg0, %c0_i32, %c0_i32_0 : i32, i32, i32
  }
  func.func @transform_4(%arg0: i32) -> (i32, i32, i32) {
    %c0_i32 = arith.constant 0 : i32
    %c0_i32_0 = arith.constant 0 : i32
    %c0_i32_1 = arith.constant 0 : i32
    return %arg0, %c0_i32, %c0_i32_0 : i32, i32, i32
  }
}

module attributes {stable_mosaic.version = 11 : i64} {
  func.func @_affine_actT_kernel(%arg0: i32, %arg1: memref<32x32xbf16, #tpu.memory_space<vmem>>, %arg2: memref<32x1xf32, #tpu.memory_space<vmem>>, %arg3: memref<32x1xf32, #tpu.memory_space<vmem>>, %arg4: memref<32x32xf32, #tpu.memory_space<vmem>>) attributes {dimension_semantics = [#tpu.dimension_semantics<parallel>], iteration_bounds = array<i64: 1>, scalar_prefetch = 0 : i64, scratch_operands = 0 : i64, tpu.core_type = #tpu.core_type<tc>, window_params = [{transform_indices = @transform_0, window_bounds = array<i64: 32, 32>}, {pipeline_mode = #tpu.pipeline_mode<synchronous>, transform_indices = @transform_1, window_bounds = array<i64: 32, 1>}, {pipeline_mode = #tpu.pipeline_mode<synchronous>, transform_indices = @transform_2, window_bounds = array<i64: 32, 1>}, {transform_indices = @transform_3, window_bounds = array<i64: 32, 32>}]} {
    %c0 = arith.constant 0 : index
    %c0_0 = arith.constant 0 : index
    %0 = vector.load %arg1[%c0, %c0_0] : memref<32x32xbf16, #tpu.memory_space<vmem>>, vector<32x32xbf16>
    %1 = arith.extf %0 : vector<32x32xbf16> to vector<32x32xf32>
    %c0_1 = arith.constant 0 : index
    %c0_2 = arith.constant 0 : index
    %2 = vector.load %arg2[%c0_1, %c0_2] : memref<32x1xf32, #tpu.memory_space<vmem>>, vector<32x1xf32>
    %3 = vector.broadcast %2 : vector<32x1xf32> to vector<32x32xf32>
    %4 = arith.mulf %1, %3 : vector<32x32xf32>
    %c0_3 = arith.constant 0 : index
    %c0_4 = arith.constant 0 : index
    %5 = vector.load %arg3[%c0_3, %c0_4] : memref<32x1xf32, #tpu.memory_space<vmem>>, vector<32x1xf32>
    %6 = vector.broadcast %5 : vector<32x1xf32> to vector<32x32xf32>
    %7 = arith.addf %4, %6 : vector<32x32xf32>
    %cst = arith.constant 0.000000e+00 : f32
    %8 = vector.broadcast %cst : f32 to vector<32x32xf32>
    %9 = arith.maximumf %7, %8 : vector<32x32xf32>
    %c0_5 = arith.constant 0 : index
    %c0_6 = arith.constant 0 : index
    %10 = vector.load %arg4[%c0_5, %c0_6] : memref<32x32xf32, #tpu.memory_space<vmem>>, vector<32x32xf32>
    tpu.vector_store %arg4[%c0_5, %c0_6], %9 {strides = array<i32>} : memref<32x32xf32, #tpu.memory_space<vmem>>, vector<32x32xf32>,
    return
  }
  func.func @transform_0(%arg0: i32) -> (i32, i32) {
    %c0_i32 = arith.constant 0 : i32
    %c0_i32_0 = arith.constant 0 : i32
    return %c0_i32, %arg0 : i32, i32
  }
  func.func @transform_1(%arg0: i32) -> (i32, i32) {
    %c0_i32 = arith.constant 0 : i32
    %c0_i32_0 = arith.constant 0 : i32
    %c0_i32_1 = arith.constant 0 : i32
    return %c0_i32, %c0_i32_0 : i32, i32
  }
  func.func @transform_2(%arg0: i32) -> (i32, i32) {
    %c0_i32 = arith.constant 0 : i32
    %c0_i32_0 = arith.constant 0 : i32
    %c0_i32_1 = arith.constant 0 : i32
    return %c0_i32, %c0_i32_0 : i32, i32
  }
  func.func @transform_3(%arg0: i32) -> (i32, i32) {
    %c0_i32 = arith.constant 0 : i32
    %c0_i32_0 = arith.constant 0 : i32
    return %c0_i32, %arg0 : i32, i32
  }
}

module attributes {stable_mosaic.version = 11 : i64} {
  func.func @_matmulT_stats_kernel(%arg0: i32, %arg1: memref<16x432xbf16, #tpu.memory_space<vmem>>, %arg2: memref<432x128xbf16, #tpu.memory_space<vmem>>, %arg3: memref<16x128xbf16, #tpu.memory_space<vmem>>, %arg4: memref<1x16x1xf32, #tpu.memory_space<vmem>>, %arg5: memref<1x16x1xf32, #tpu.memory_space<vmem>>) attributes {dimension_semantics = [#tpu.dimension_semantics<parallel>], iteration_bounds = array<i64: 1>, scalar_prefetch = 0 : i64, scratch_operands = 0 : i64, tpu.core_type = #tpu.core_type<tc>, window_params = [{pipeline_mode = #tpu.pipeline_mode<synchronous>, transform_indices = @transform_0, window_bounds = array<i64: 16, 432>}, {transform_indices = @transform_1, window_bounds = array<i64: 432, 128>}, {transform_indices = @transform_2, window_bounds = array<i64: 16, 128>}, {transform_indices = @transform_3, window_bounds = array<i64: 1, 16, 1>}, {transform_indices = @transform_4, window_bounds = array<i64: 1, 16, 1>}]} {
    %c0 = arith.constant 0 : index
    %c0_0 = arith.constant 0 : index
    %0 = vector.load %arg1[%c0, %c0_0] : memref<16x432xbf16, #tpu.memory_space<vmem>>, vector<16x432xbf16>
    %c0_1 = arith.constant 0 : index
    %c0_2 = arith.constant 0 : index
    %1 = vector.load %arg2[%c0_1, %c0_2] : memref<432x128xbf16, #tpu.memory_space<vmem>>, vector<432x128xbf16>
    %cst = arith.constant dense<0.000000e+00> : vector<16x128xf32>
    %2 = tpu.matmul %0, %1, %cst {dimension_numbers = #tpu.dot_dimension_numbers<[1], [0], [0], [1], [0, 0, 1, 1], [], []>} : vector<16x432xbf16>, vector<432x128xbf16>, vector<16x128xf32> -> vector<16x128xf32>
    %3 = arith.truncf %2 : vector<16x128xf32> to vector<16x128xbf16>
    %c0_3 = arith.constant 0 : index
    %c0_4 = arith.constant 0 : index
    %4 = vector.load %arg3[%c0_3, %c0_4] : memref<16x128xbf16, #tpu.memory_space<vmem>>, vector<16x128xbf16>
    tpu.vector_store %arg3[%c0_3, %c0_4], %3 {strides = array<i32>} : memref<16x128xbf16, #tpu.memory_space<vmem>>, vector<16x128xbf16>,
    %cst_5 = arith.constant dense<0.000000e+00> : vector<16xf32>
    %5 = vector.multi_reduction <add>, %2, %cst_5 [1] : vector<16x128xf32> to vector<16xf32>
    %6 = vector.shape_cast %5 : vector<16xf32> to vector<16x1xf32>
    %7 = vector.shape_cast %6 : vector<16x1xf32> to vector<1x16x1xf32>
    %c0_6 = arith.constant 0 : index
    %c0_7 = arith.constant 0 : index
    %c0_8 = arith.constant 0 : index
    %8 = vector.load %arg4[%c0_6, %c0_7, %c0_8] : memref<1x16x1xf32, #tpu.memory_space<vmem>>, vector<1x16x1xf32>
    tpu.vector_store %arg4[%c0_6, %c0_7, %c0_8], %7 {strides = array<i32>} : memref<1x16x1xf32, #tpu.memory_space<vmem>>, vector<1x16x1xf32>,
    %9 = arith.mulf %2, %2 : vector<16x128xf32>
    %cst_9 = arith.constant dense<0.000000e+00> : vector<16xf32>
    %10 = vector.multi_reduction <add>, %9, %cst_9 [1] : vector<16x128xf32> to vector<16xf32>
    %11 = vector.shape_cast %10 : vector<16xf32> to vector<16x1xf32>
    %12 = vector.shape_cast %11 : vector<16x1xf32> to vector<1x16x1xf32>
    %c0_10 = arith.constant 0 : index
    %c0_11 = arith.constant 0 : index
    %c0_12 = arith.constant 0 : index
    %13 = vector.load %arg5[%c0_10, %c0_11, %c0_12] : memref<1x16x1xf32, #tpu.memory_space<vmem>>, vector<1x16x1xf32>
    tpu.vector_store %arg5[%c0_10, %c0_11, %c0_12], %12 {strides = array<i32>} : memref<1x16x1xf32, #tpu.memory_space<vmem>>, vector<1x16x1xf32>,
    return
  }
  func.func @transform_0(%arg0: i32) -> (i32, i32) {
    %c0_i32 = arith.constant 0 : i32
    %c0_i32_0 = arith.constant 0 : i32
    %c0_i32_1 = arith.constant 0 : i32
    return %c0_i32, %c0_i32_0 : i32, i32
  }
  func.func @transform_1(%arg0: i32) -> (i32, i32) {
    %c0_i32 = arith.constant 0 : i32
    %c0_i32_0 = arith.constant 0 : i32
    return %c0_i32, %arg0 : i32, i32
  }
  func.func @transform_2(%arg0: i32) -> (i32, i32) {
    %c0_i32 = arith.constant 0 : i32
    %c0_i32_0 = arith.constant 0 : i32
    return %c0_i32, %arg0 : i32, i32
  }
  func.func @transform_3(%arg0: i32) -> (i32, i32, i32) {
    %c0_i32 = arith.constant 0 : i32
    %c0_i32_0 = arith.constant 0 : i32
    %c0_i32_1 = arith.constant 0 : i32
    return %arg0, %c0_i32, %c0_i32_0 : i32, i32, i32
  }
  func.func @transform_4(%arg0: i32) -> (i32, i32, i32) {
    %c0_i32 = arith.constant 0 : i32
    %c0_i32_0 = arith.constant 0 : i32
    %c0_i32_1 = arith.constant 0 : i32
    return %arg0, %c0_i32, %c0_i32_0 : i32, i32, i32
  }
}

module attributes {stable_mosaic.version = 11 : i64} {
  func.func @_matmulT_stats_kernel(%arg0: i32, %arg1: memref<8x288xbf16, #tpu.memory_space<vmem>>, %arg2: memref<288x512xbf16, #tpu.memory_space<vmem>>, %arg3: memref<8x512xbf16, #tpu.memory_space<vmem>>, %arg4: memref<1x8x1xf32, #tpu.memory_space<vmem>>, %arg5: memref<1x8x1xf32, #tpu.memory_space<vmem>>) attributes {dimension_semantics = [#tpu.dimension_semantics<parallel>], iteration_bounds = array<i64: 1>, scalar_prefetch = 0 : i64, scratch_operands = 0 : i64, tpu.core_type = #tpu.core_type<tc>, window_params = [{pipeline_mode = #tpu.pipeline_mode<synchronous>, transform_indices = @transform_0, window_bounds = array<i64: 8, 288>}, {transform_indices = @transform_1, window_bounds = array<i64: 288, 512>}, {transform_indices = @transform_2, window_bounds = array<i64: 8, 512>}, {transform_indices = @transform_3, window_bounds = array<i64: 1, 8, 1>}, {transform_indices = @transform_4, window_bounds = array<i64: 1, 8, 1>}]} {
    %c0 = arith.constant 0 : index
    %c0_0 = arith.constant 0 : index
    %0 = vector.load %arg1[%c0, %c0_0] : memref<8x288xbf16, #tpu.memory_space<vmem>>, vector<8x288xbf16>
    %c0_1 = arith.constant 0 : index
    %c0_2 = arith.constant 0 : index
    %1 = vector.load %arg2[%c0_1, %c0_2] : memref<288x512xbf16, #tpu.memory_space<vmem>>, vector<288x512xbf16>
    %cst = arith.constant dense<0.000000e+00> : vector<8x512xf32>
    %2 = tpu.matmul %0, %1, %cst {dimension_numbers = #tpu.dot_dimension_numbers<[1], [0], [0], [1], [0, 0, 1, 1], [], []>} : vector<8x288xbf16>, vector<288x512xbf16>, vector<8x512xf32> -> vector<8x512xf32>
    %3 = arith.truncf %2 : vector<8x512xf32> to vector<8x512xbf16>
    %c0_3 = arith.constant 0 : index
    %c0_4 = arith.constant 0 : index
    %4 = vector.load %arg3[%c0_3, %c0_4] : memref<8x512xbf16, #tpu.memory_space<vmem>>, vector<8x512xbf16>
    tpu.vector_store %arg3[%c0_3, %c0_4], %3 {strides = array<i32>} : memref<8x512xbf16, #tpu.memory_space<vmem>>, vector<8x512xbf16>,
    %cst_5 = arith.constant dense<0.000000e+00> : vector<8xf32>
    %5 = vector.multi_reduction <add>, %2, %cst_5 [1] : vector<8x512xf32> to vector<8xf32>
    %6 = vector.shape_cast %5 : vector<8xf32> to vector<8x1xf32>
    %7 = vector.shape_cast %6 : vector<8x1xf32> to vector<1x8x1xf32>
    %c0_6 = arith.constant 0 : index
    %c0_7 = arith.constant 0 : index
    %c0_8 = arith.constant 0 : index
    %8 = vector.load %arg4[%c0_6, %c0_7, %c0_8] : memref<1x8x1xf32, #tpu.memory_space<vmem>>, vector<1x8x1xf32>
    tpu.vector_store %arg4[%c0_6, %c0_7, %c0_8], %7 {strides = array<i32>} : memref<1x8x1xf32, #tpu.memory_space<vmem>>, vector<1x8x1xf32>,
    %9 = arith.mulf %2, %2 : vector<8x512xf32>
    %cst_9 = arith.constant dense<0.000000e+00> : vector<8xf32>
    %10 = vector.multi_reduction <add>, %9, %cst_9 [1] : vector<8x512xf32> to vector<8xf32>
    %11 = vector.shape_cast %10 : vector<8xf32> to vector<8x1xf32>
    %12 = vector.shape_cast %11 : vector<8x1xf32> to vector<1x8x1xf32>
    %c0_10 = arith.constant 0 : index
    %c0_11 = arith.constant 0 : index
    %c0_12 = arith.constant 0 : index
    %13 = vector.load %arg5[%c0_10, %c0_11, %c0_12] : memref<1x8x1xf32, #tpu.memory_space<vmem>>, vector<1x8x1xf32>
    tpu.vector_store %arg5[%c0_10, %c0_11, %c0_12], %12 {strides = array<i32>} : memref<1x8x1xf32, #tpu.memory_space<vmem>>, vector<1x8x1xf32>,
    return
  }
  func.func @transform_0(%arg0: i32) -> (i32, i32) {
    %c0_i32 = arith.constant 0 : i32
    %c0_i32_0 = arith.constant 0 : i32
    %c0_i32_1 = arith.constant 0 : i32
    return %c0_i32, %c0_i32_0 : i32, i32
  }
  func.func @transform_1(%arg0: i32) -> (i32, i32) {
    %c0_i32 = arith.constant 0 : i32
    %c0_i32_0 = arith.constant 0 : i32
    return %c0_i32, %arg0 : i32, i32
  }
  func.func @transform_2(%arg0: i32) -> (i32, i32) {
    %c0_i32 = arith.constant 0 : i32
    %c0_i32_0 = arith.constant 0 : i32
    return %c0_i32, %arg0 : i32, i32
  }
  func.func @transform_3(%arg0: i32) -> (i32, i32, i32) {
    %c0_i32 = arith.constant 0 : i32
    %c0_i32_0 = arith.constant 0 : i32
    %c0_i32_1 = arith.constant 0 : i32
    return %arg0, %c0_i32, %c0_i32_0 : i32, i32, i32
  }
  func.func @transform_4(%arg0: i32) -> (i32, i32, i32) {
    %c0_i32 = arith.constant 0 : i32
    %c0_i32_0 = arith.constant 0 : i32
    %c0_i32_1 = arith.constant 0 : i32
    return %arg0, %c0_i32, %c0_i32_0 : i32, i32, i32
  }
}

module attributes {stable_mosaic.version = 11 : i64} {
  func.func @_matmulT_affine_act_kernel(%arg0: i32, %arg1: memref<1x72xbf16, #tpu.memory_space<vmem>>, %arg2: memref<72x512xbf16, #tpu.memory_space<vmem>>, %arg3: memref<1x1xf32, #tpu.memory_space<vmem>>, %arg4: memref<1x1xf32, #tpu.memory_space<vmem>>, %arg5: memref<1x512xf32, #tpu.memory_space<vmem>>) attributes {dimension_semantics = [#tpu.dimension_semantics<parallel>], iteration_bounds = array<i64: 1>, scalar_prefetch = 0 : i64, scratch_operands = 0 : i64, tpu.core_type = #tpu.core_type<tc>, window_params = [{pipeline_mode = #tpu.pipeline_mode<synchronous>, transform_indices = @transform_0, window_bounds = array<i64: 1, 72>}, {transform_indices = @transform_1, window_bounds = array<i64: 72, 512>}, {pipeline_mode = #tpu.pipeline_mode<synchronous>, transform_indices = @transform_2, window_bounds = array<i64: 1, 1>}, {pipeline_mode = #tpu.pipeline_mode<synchronous>, transform_indices = @transform_3, window_bounds = array<i64: 1, 1>}, {transform_indices = @transform_4, window_bounds = array<i64: 1, 512>}]} {
    %c0 = arith.constant 0 : index
    %c0_0 = arith.constant 0 : index
    %0 = vector.load %arg1[%c0, %c0_0] : memref<1x72xbf16, #tpu.memory_space<vmem>>, vector<1x72xbf16>
    %c0_1 = arith.constant 0 : index
    %c0_2 = arith.constant 0 : index
    %1 = vector.load %arg2[%c0_1, %c0_2] : memref<72x512xbf16, #tpu.memory_space<vmem>>, vector<72x512xbf16>
    %cst = arith.constant dense<0.000000e+00> : vector<1x512xf32>
    %2 = tpu.matmul %0, %1, %cst {dimension_numbers = #tpu.dot_dimension_numbers<[1], [0], [0], [1], [0, 0, 1, 1], [], []>} : vector<1x72xbf16>, vector<72x512xbf16>, vector<1x512xf32> -> vector<1x512xf32>
    %c0_3 = arith.constant 0 : index
    %c0_4 = arith.constant 0 : index
    %3 = vector.load %arg3[%c0_3, %c0_4] : memref<1x1xf32, #tpu.memory_space<vmem>>, vector<1x1xf32>
    %4 = vector.broadcast %3 : vector<1x1xf32> to vector<1x512xf32>
    %5 = arith.mulf %2, %4 : vector<1x512xf32>
    %c0_5 = arith.constant 0 : index
    %c0_6 = arith.constant 0 : index
    %6 = vector.load %arg4[%c0_5, %c0_6] : memref<1x1xf32, #tpu.memory_space<vmem>>, vector<1x1xf32>
    %7 = vector.broadcast %6 : vector<1x1xf32> to vector<1x512xf32>
    %8 = arith.addf %5, %7 : vector<1x512xf32>
    %cst_7 = arith.constant 0.000000e+00 : f32
    %9 = vector.broadcast %cst_7 : f32 to vector<1x512xf32>
    %10 = arith.subf %9, %8 : vector<1x512xf32>
    %11 = math.exp %10 : vector<1x512xf32>
    %cst_8 = arith.constant 1.000000e+00 : f32
    %12 = vector.broadcast %cst_8 : f32 to vector<1x512xf32>
    %13 = arith.addf %12, %11 : vector<1x512xf32>
    %cst_9 = arith.constant 1.000000e+00 : f32
    %14 = vector.broadcast %cst_9 : f32 to vector<1x512xf32>
    %15 = arith.divf %14, %13 : vector<1x512xf32>
    %c0_10 = arith.constant 0 : index
    %c0_11 = arith.constant 0 : index
    %16 = vector.load %arg5[%c0_10, %c0_11] : memref<1x512xf32, #tpu.memory_space<vmem>>, vector<1x512xf32>
    tpu.vector_store %arg5[%c0_10, %c0_11], %15 {strides = array<i32>} : memref<1x512xf32, #tpu.memory_space<vmem>>, vector<1x512xf32>,
    return
  }
  func.func @transform_0(%arg0: i32) -> (i32, i32) {
    %c0_i32 = arith.constant 0 : i32
    %c0_i32_0 = arith.constant 0 : i32
    %c0_i32_1 = arith.constant 0 : i32
    return %c0_i32, %c0_i32_0 : i32, i32
  }
  func.func @transform_1(%arg0: i32) -> (i32, i32) {
    %c0_i32 = arith.constant 0 : i32
    %c0_i32_0 = arith.constant 0 : i32
    return %c0_i32, %arg0 : i32, i32
  }
  func.func @transform_2(%arg0: i32) -> (i32, i32) {
    %c0_i32 = arith.constant 0 : i32
    %c0_i32_0 = arith.constant 0 : i32
    %c0_i32_1 = arith.constant 0 : i32
    return %c0_i32, %c0_i32_0 : i32, i32
  }
  func.func @transform_3(%arg0: i32) -> (i32, i32) {
    %c0_i32 = arith.constant 0 : i32
    %c0_i32_0 = arith.constant 0 : i32
    %c0_i32_1 = arith.constant 0 : i32
    return %c0_i32, %c0_i32_0 : i32, i32
  }
  func.func @transform_4(%arg0: i32) -> (i32, i32) {
    %c0_i32 = arith.constant 0 : i32
    %c0_i32_0 = arith.constant 0 : i32
    return %c0_i32, %arg0 : i32, i32
  }
}

module attributes {stable_mosaic.version = 11 : i64} {
  func.func @kernel(%arg0: memref<2x256xf32, #tpu.memory_space<vmem>>, %arg1: memref<2x256xf32, #tpu.memory_space<vmem>>, %arg2: memref<2x256xf32, #tpu.memory_space<vmem>>, %arg3: memref<2x256xf32, #tpu.memory_space<vmem>>, %arg4: memref<2x256xf32, #tpu.memory_space<vmem>>, %arg5: memref<2x256xf32, #tpu.memory_space<vmem>>, %arg6: memref<2x256xf32, #tpu.memory_space<vmem>>, %arg7: memref<2x1xi32, #tpu.memory_space<vmem>>, %arg8: memref<2x256xf32, #tpu.memory_space<vmem>>, %arg9: memref<2x256xf32, #tpu.memory_space<vmem>>) attributes {dimension_semantics = [], scalar_prefetch = 0 : i64, scratch_operands = 0 : i64, tpu.core_type = #tpu.core_type<tc>} {
    %c0 = arith.constant 0 : index
    %c0_0 = arith.constant 0 : index
    %0 = vector.load %arg0[%c0, %c0_0] : memref<2x256xf32, #tpu.memory_space<vmem>>, vector<2x256xf32>
    %c0_1 = arith.constant 0 : index
    %c0_2 = arith.constant 0 : index
    %1 = vector.load %arg1[%c0_1, %c0_2] : memref<2x256xf32, #tpu.memory_space<vmem>>, vector<2x256xf32>
    %c0_3 = arith.constant 0 : index
    %c0_4 = arith.constant 0 : index
    %2 = vector.load %arg2[%c0_3, %c0_4] : memref<2x256xf32, #tpu.memory_space<vmem>>, vector<2x256xf32>
    %c0_5 = arith.constant 0 : index
    %c0_6 = arith.constant 0 : index
    %3 = vector.load %arg3[%c0_5, %c0_6] : memref<2x256xf32, #tpu.memory_space<vmem>>, vector<2x256xf32>
    %c0_7 = arith.constant 0 : index
    %c0_8 = arith.constant 0 : index
    %4 = vector.load %arg4[%c0_7, %c0_8] : memref<2x256xf32, #tpu.memory_space<vmem>>, vector<2x256xf32>
    %c0_9 = arith.constant 0 : index
    %c0_10 = arith.constant 0 : index
    %5 = vector.load %arg5[%c0_9, %c0_10] : memref<2x256xf32, #tpu.memory_space<vmem>>, vector<2x256xf32>
    %c0_11 = arith.constant 0 : index
    %c0_12 = arith.constant 0 : index
    %6 = vector.load %arg6[%c0_11, %c0_12] : memref<2x256xf32, #tpu.memory_space<vmem>>, vector<2x256xf32>
    %c0_13 = arith.constant 0 : index
    %c0_14 = arith.constant 0 : index
    %7 = vector.load %arg7[%c0_13, %c0_14] : memref<2x1xi32, #tpu.memory_space<vmem>>, vector<2x1xi32>
    %8 = tpu.iota {dimensions = array<i32: 1>} : vector<2x256xi32>
    %9 = arith.addf %1, %0 : vector<2x256xf32>
    %cst = arith.constant 0.000000e+00 : f32
    %10 = vector.broadcast %cst : f32 to vector<2x256xf32>
    %cst_15 = arith.constant 0.000000e+00 : f32
    %11 = vector.broadcast %cst_15 : f32 to vector<2x256xf32>
    %12 = arith.sitofp %7 : vector<2x1xi32> to vector<2x1xf32>
    %13 = vector.shape_cast %12 : vector<2x1xf32> to vector<2x1xf32>
    %14 = vector.broadcast %13 : vector<2x1xf32> to vector<2x256xf32>
    %c0_i32 = arith.constant 0 : i32
    %cst_16 = arith.constant 0.000000e+00 : f32
    %15:6 = scf.while (%arg10 = %10, %arg11 = %2, %arg12 = %11, %arg13 = %14, %arg14 = %c0_i32, %arg15 = %cst_16) : (vector<2x256xf32>, vector<2x256xf32>, vector<2x256xf32>, vector<2x256xf32>, i32, f32) -> (vector<2x256xf32>, vector<2x256xf32>, vector<2x256xf32>, vector<2x256xf32>, i32, f32) {
      %c64_i32 = arith.constant 64 : i32
      %23 = arith.cmpi slt, %arg14, %c64_i32 : i32
      %cst_23 = arith.constant 5.000000e-01 : f32
      %24 = arith.cmpf olt, %arg15, %cst_23 : f32
      %25 = arith.andi %23, %24 : i1
      scf.condition(%25) %arg10, %arg11, %arg12, %arg13, %arg14, %arg15 : vector<2x256xf32>, vector<2x256xf32>, vector<2x256xf32>, vector<2x256xf32>, i32, f32
    } do {
    ^bb0(%arg10: vector<2x256xf32>, %arg11: vector<2x256xf32>, %arg12: vector<2x256xf32>, %arg13: vector<2x256xf32>, %arg14: i32, %arg15: f32):
      %cst_23 = arith.constant 5.000000e-01 : f32
      %23 = vector.broadcast %cst_23 : f32 to vector<2x256xf32>
      %24 = arith.mulf %23, %arg12 : vector<2x256xf32>
      %cst_24 = arith.constant 5.000000e-01 : f32
      %25 = vector.broadcast %cst_24 : f32 to vector<2x256xf32>
      %26 = arith.mulf %25, %9 : vector<2x256xf32>
      %27 = arith.addf %24, %26 : vector<2x256xf32>
      %cst_25 = arith.constant 5.000000e-01 : f32
      %28 = vector.broadcast %cst_25 : f32 to vector<2x256xf32>
      %29 = arith.cmpf ogt, %arg11, %28 : vector<2x256xf32>
      %cst_26 = arith.constant 1.000000e+30 : f32
      %30 = vector.broadcast %cst_26 : f32 to vector<2x256xf32>
      %31 = arith.select %29, %27, %30 : vector<2x256xi1>, vector<2x256xf32>
      %cst_27 = arith.constant dense<0x7F800000> : vector<2xf32>
      %32 = vector.multi_reduction <minimumf>, %31, %cst_27 [1] : vector<2x256xf32> to vector<2xf32>
      %33 = vector.shape_cast %32 : vector<2xf32> to vector<2x1xf32>
      %34 = vector.broadcast %33 : vector<2x1xf32> to vector<2x256xf32>
      %35 = arith.cmpf ole, %31, %34 : vector<2x256xf32>
      %c256_i32 = arith.constant 256 : i32
      %36 = vector.broadcast %c256_i32 : i32 to vector<2x256xi32>
      %37 = arith.select %35, %8, %36 : vector<2x256xi1>, vector<2x256xi32>
      %cst_28 = arith.constant dense<2147483647> : vector<2xi32>
      %38 = vector.multi_reduction <minsi>, %37, %cst_28 [1] : vector<2x256xi32> to vector<2xi32>
      %39 = vector.shape_cast %38 : vector<2xi32> to vector<2x1xi32>
      %40 = vector.broadcast %39 : vector<2x1xi32> to vector<2x256xi32>
      %41 = arith.cmpi eq, %8, %40 : vector<2x256xi32>
      %42 = arith.extui %41 : vector<2x256xi1> to vector<2x256xi32>
      %43 = arith.sitofp %42 : vector<2x256xi32> to vector<2x256xf32>
      %44 = arith.cmpi ne, %39, %7 : vector<2x1xi32>
      %45 = arith.extui %44 : vector<2x1xi1> to vector<2x1xi32>
      %46 = arith.sitofp %45 : vector<2x1xi32> to vector<2x1xf32>
      %47 = arith.addf %arg10, %43 : vector<2x256xf32>
      %cst_29 = arith.constant 0.000000e+00 : f32
      %cst_30 = arith.constant 1.000000e+00 : f32
      %48 = vector.broadcast %cst_29 : f32 to vector<2x256xf32>
      %49 = arith.maximumf %48, %47 : vector<2x256xf32>
      %50 = vector.broadcast %cst_30 : f32 to vector<2x256xf32>
      %51 = arith.minimumf %50, %49 : vector<2x256xf32>
      %52 = vector.broadcast %46 : vector<2x1xf32> to vector<2x256xf32>
      %53 = arith.mulf %52, %43 : vector<2x256xf32>
      %54 = arith.subf %arg11, %53 : vector<2x256xf32>
      %cst_31 = arith.constant 0.000000e+00 : f32
      %cst_32 = arith.constant 1.000000e+00 : f32
      %55 = vector.broadcast %cst_31 : f32 to vector<2x256xf32>
      %56 = arith.maximumf %55, %54 : vector<2x256xf32>
      %57 = vector.broadcast %cst_32 : f32 to vector<2x256xf32>
      %58 = arith.minimumf %57, %56 : vector<2x256xf32>
      %59 = arith.sitofp %39 : vector<2x1xi32> to vector<2x1xf32>
      %60 = arith.mulf %5, %43 : vector<2x256xf32>
      %cst_33 = arith.constant dense<0.000000e+00> : vector<2xf32>
      %61 = vector.multi_reduction <add>, %60, %cst_33 [1] : vector<2x256xf32> to vector<2xf32>
      %62 = vector.shape_cast %61 : vector<2xf32> to vector<2x1xf32>
      %cst_34 = arith.constant 1.600000e+01 : f32
      %63 = vector.broadcast %cst_34 : f32 to vector<2x1xf32>
      %64 = arith.mulf %62, %63 : vector<2x1xf32>
      %65 = arith.subf %59, %64 : vector<2x1xf32>
      %66 = vector.broadcast %62 : vector<2x1xf32> to vector<2x256xf32>
      %67 = arith.subf %5, %66 : vector<2x256xf32>
      %68 = math.absf %67 : vector<2x256xf32>
      %cst_35 = arith.constant 1.500000e+00 : f32
      %69 = vector.broadcast %cst_35 : f32 to vector<2x256xf32>
      %70 = arith.cmpf ole, %68, %69 : vector<2x256xf32>
      %71 = vector.broadcast %65 : vector<2x1xf32> to vector<2x256xf32>
      %72 = arith.subf %6, %71 : vector<2x256xf32>
      %73 = math.absf %72 : vector<2x256xf32>
      %cst_36 = arith.constant 1.500000e+00 : f32
      %74 = vector.broadcast %cst_36 : f32 to vector<2x256xf32>
      %75 = arith.cmpf ole, %73, %74 : vector<2x256xf32>
      %76 = arith.andi %70, %75 : vector<2x256xi1>
      %77 = vector.broadcast %39 : vector<2x1xi32> to vector<2x256xi32>
      %78 = arith.cmpi ne, %8, %77 : vector<2x256xi32>
      %79 = arith.andi %76, %78 : vector<2x256xi1>
      %80 = arith.extui %79 : vector<2x256xi1> to vector<2x256xi32>
      %81 = arith.sitofp %80 : vector<2x256xi32> to vector<2x256xf32>
      %82 = arith.mulf %81, %4 : vector<2x256xf32>
      %83 = arith.addf %arg12, %0 : vector<2x256xf32>
      %84 = arith.mulf %83, %43 : vector<2x256xf32>
      %cst_37 = arith.constant dense<0.000000e+00> : vector<2xf32>
      %85 = vector.multi_reduction <add>, %84, %cst_37 [1] : vector<2x256xf32> to vector<2xf32>
      %86 = vector.shape_cast %85 : vector<2xf32> to vector<2x1xf32>
      %87 = vector.broadcast %86 : vector<2x1xf32> to vector<2x256xf32>
      %88 = arith.mulf %87, %81 : vector<2x256xf32>
      %cst_38 = arith.constant 1.000000e+00 : f32
      %89 = vector.broadcast %cst_38 : f32 to vector<2x256xf32>
      %90 = arith.subf %89, %58 : vector<2x256xf32>
      %cst_39 = arith.constant 1.000000e+00 : f32
      %91 = vector.broadcast %cst_39 : f32 to vector<2x256xf32>
      %92 = arith.subf %91, %51 : vector<2x256xf32>
      %93 = arith.mulf %90, %92 : vector<2x256xf32>
      %94 = arith.cmpf ogt, %arg12, %88 : vector<2x256xf32>
      %95 = arith.extui %94 : vector<2x256xi1> to vector<2x256xi32>
      %96 = arith.sitofp %95 : vector<2x256xi32> to vector<2x256xf32>
      %97 = arith.mulf %58, %96 : vector<2x256xf32>
      %98 = arith.addf %93, %97 : vector<2x256xf32>
      %99 = arith.mulf %98, %82 : vector<2x256xf32>
      %100 = arith.mulf %88, %99 : vector<2x256xf32>
      %cst_40 = arith.constant 1.000000e+00 : f32
      %101 = vector.broadcast %cst_40 : f32 to vector<2x256xf32>
      %102 = arith.subf %101, %99 : vector<2x256xf32>
      %103 = arith.mulf %arg12, %102 : vector<2x256xf32>
      %104 = arith.addf %100, %103 : vector<2x256xf32>
      %105 = arith.addf %58, %99 : vector<2x256xf32>
      %cst_41 = arith.constant 0.000000e+00 : f32
      %cst_42 = arith.constant 1.000000e+00 : f32
      %106 = vector.broadcast %cst_41 : f32 to vector<2x256xf32>
      %107 = arith.maximumf %106, %105 : vector<2x256xf32>
      %108 = vector.broadcast %cst_42 : f32 to vector<2x256xf32>
      %109 = arith.minimumf %108, %107 : vector<2x256xf32>
      %110 = vector.broadcast %59 : vector<2x1xf32> to vector<2x256xf32>
      %111 = arith.mulf %110, %99 : vector<2x256xf32>
      %cst_43 = arith.constant 1.000000e+00 : f32
      %112 = vector.broadcast %cst_43 : f32 to vector<2x256xf32>
      %113 = arith.subf %112, %99 : vector<2x256xf32>
      %114 = arith.mulf %arg13, %113 : vector<2x256xf32>
      %115 = arith.addf %111, %114 : vector<2x256xf32>
      %116 = vector.shape_cast %46 : vector<2x1xf32> to vector<1x2x1xf32>
      %cst_44 = arith.constant dense<0.000000e+00> : vector<1xf32>
      %117 = vector.multi_reduction <add>, %116, %cst_44 [1, 2] : vector<1x2x1xf32> to vector<1xf32>
      %118 = vector.shape_cast %117 : vector<1xf32> to vector<1x1x1xf32>
      %119 = vector.extract %118[0, 0, 0] : f32 from vector<1x1x1xf32>
      %cst_45 = arith.constant 5.000000e-01 : f32
      %120 = arith.cmpf olt, %119, %cst_45 : f32
      %cst_46 = arith.constant 1.000000e+00 : f32
      %cst_47 = arith.constant 0.000000e+00 : f32
      %121 = arith.select %120, %cst_46, %cst_47 : f32
      %c1_i32_48 = arith.constant 1 : i32
      %122 = arith.addi %arg14, %c1_i32_48 : i32
      scf.yield %51, %109, %104, %115, %122, %121 : vector<2x256xf32>, vector<2x256xf32>, vector<2x256xf32>, vector<2x256xf32>, i32, f32
    }
    %c0_17 = arith.constant 0 : index
    %c0_18 = arith.constant 0 : index
    %16 = vector.load %arg8[%c0_17, %c0_18] : memref<2x256xf32, #tpu.memory_space<vmem>>, vector<2x256xf32>
    tpu.vector_store %arg8[%c0_17, %c0_18], %15#0 {strides = array<i32>} : memref<2x256xf32, #tpu.memory_space<vmem>>, vector<2x256xf32>,
    %c1_i32 = arith.constant 1 : i32
    %17 = arith.subi %15#4, %c1_i32 : i32
    %18 = arith.mulf %15#3, %3 : vector<2x256xf32>
    %cst_19 = arith.constant dense<0.000000e+00> : vector<2xf32>
    %19 = vector.multi_reduction <add>, %18, %cst_19 [1] : vector<2x256xf32> to vector<2xf32>
    %20 = vector.shape_cast %19 : vector<2xf32> to vector<2x1xf32>
    %c0_i32_20 = arith.constant 0 : i32
    %21:3 = scf.while (%arg10 = %3, %arg11 = %20, %arg12 = %c0_i32_20) : (vector<2x256xf32>, vector<2x1xf32>, i32) -> (vector<2x256xf32>, vector<2x1xf32>, i32) {
      %23 = arith.cmpi slt, %arg12, %17 : i32
      scf.condition(%23) %arg10, %arg11, %arg12 : vector<2x256xf32>, vector<2x1xf32>, i32
    } do {
    ^bb0(%arg10: vector<2x256xf32>, %arg11: vector<2x1xf32>, %arg12: i32):
      %23 = arith.fptosi %arg11 : vector<2x1xf32> to vector<2x1xi32>
      %24 = vector.broadcast %23 : vector<2x1xi32> to vector<2x256xi32>
      %25 = arith.cmpi eq, %8, %24 : vector<2x256xi32>
      %26 = arith.extui %25 : vector<2x256xi1> to vector<2x256xi32>
      %27 = arith.sitofp %26 : vector<2x256xi32> to vector<2x256xf32>
      %28 = arith.maximumf %arg10, %27 : vector<2x256xf32>
      %29 = arith.mulf %15#3, %27 : vector<2x256xf32>
      %cst_23 = arith.constant dense<0.000000e+00> : vector<2xf32>
      %30 = vector.multi_reduction <add>, %29, %cst_23 [1] : vector<2x256xf32> to vector<2xf32>
      %31 = vector.shape_cast %30 : vector<2xf32> to vector<2x1xf32>
      %c1_i32_24 = arith.constant 1 : i32
      %32 = arith.addi %arg12, %c1_i32_24 : i32
      scf.yield %28, %31, %32 : vector<2x256xf32>, vector<2x1xf32>, i32
    }
    %c0_21 = arith.constant 0 : index
    %c0_22 = arith.constant 0 : index
    %22 = vector.load %arg9[%c0_21, %c0_22] : memref<2x256xf32, #tpu.memory_space<vmem>>, vector<2x256xf32>
    tpu.vector_store %arg9[%c0_21, %c0_22], %21#0 {strides = array<i32>} : memref<2x256xf32, #tpu.memory_space<vmem>>, vector<2x256xf32>,
    return
  }
}

</mosaic_0001>

<llo_original>
// kernel: bbastar_forward.15
$region0: #{bbastar_forward.15}
  #allocation0 [shape = 'u32[]', space=smem, size = 0x4, offset = 0x4, fixed_abs, tag = 'smem constant byte address 0x4 - core index']
  #allocation1 [shape = 'u32[144,128]{1,0:T(1,128)}', space=vmem, size = 0x12000, scoped, tag = 'internal scratch']
  %s0 = inlined_call_operand.vmem [shape: bf16[8,512], index: 0, kind: input, shape index: {}]
  %s1 = inlined_call_operand.vmem [shape: f32[8,1], index: 1, kind: input, shape index: {}]
  %s2 = inlined_call_operand.vmem [shape: f32[8,1], index: 2, kind: input, shape index: {}]
  %s3 = inlined_call_operand.vmem [shape: f32[8,512], index: 3, kind: output, shape index: {}]
  %s4 = sld [smem:[#allocation0]]
  $region22: #{bbastar_forward.15} parent=0
    _
  %s6 = ssub.s32 1, %s4
  %s7 = scalar_select 0, %s6, %s4
  // Predicated region
  $region2: #{bbastar_forward.15} parent=0 // pred_check
    _
  $region3: #{bbastar_forward.15} parent=0 // pred_check_branch
    %9 = sbr.rel (0) target = $region5
  $region4: #{bbastar_forward.15} parent=0 // pred_region
    _
  $region5: #{bbastar_forward.15} parent=0 // pred_fallthru
    _
  // Predicated region
  $region6: #{bbastar_forward.15} parent=0 // pred_check
    _
  $region7: #{bbastar_forward.15} parent=0 // pred_check_branch
    %11 = sbr.rel (0) target = $region9
  $region8: #{bbastar_forward.15} parent=0 // pred_region
    _
  $region9: #{bbastar_forward.15} parent=0 // pred_fallthru
    _
  // Predicated region
  $region10: #{bbastar_forward.15} parent=0 // pred_check
    _
  $region11: #{bbastar_forward.15} parent=0 // pred_check_branch
    %13 = sbr.rel (0) target = $region13
  $region12: #{bbastar_forward.15} parent=0 // pred_region
    _
  $region13: #{bbastar_forward.15} parent=0 // pred_fallthru
    _
  %v14 = vld [vmem:[%s0] sm:$0xff]
  %v15 = vld [vmem:[%s0 + $0x8] sm:$0xff]
  %v16 = vunpack.c.l.bf16 %v14
  %v17 = vunpack.c.h.bf16 %v14
  %v18 = vunpack.c.l.bf16 %v15
  %v19 = vunpack.c.h.bf16 %v15
  %v20 = vld [vmem:[%s1] sm:$0xff]
  %22 = vset.pattern.permute.xlu0 0
  %23 = vperm.xlu0 %22, %v20
  %v24 = vpop.permute.xlu0 %23
  %v26 = vmul.f32 %v16, %v24
  %v27 = vmul.f32 %v17, %v24
  %v28 = vmul.f32 %v18, %v24
  %v29 = vmul.f32 %v19, %v24
  %v30 = vld [vmem:[%s2] sm:$0xff]
  %32 = vset.pattern.permute.xlu0 0
  %33 = vperm.xlu0 %32, %v30
  %v34 = vpop.permute.xlu0 %33
  %v36 = vadd.f32 %v26, %v34
  %v37 = vadd.f32 %v27, %v34
  %v38 = vadd.f32 %v28, %v34
  %v39 = vadd.f32 %v29, %v34
  %v40 = vmax.f32 %v36, 0.0
  %v41 = vmax.f32 %v37, 0.0
  %v42 = vmax.f32 %v38, 0.0
  %v43 = vmax.f32 %v39, 0.0
  %44 = vst [vmem:[%s3] sm:$0xff] %v40
  %45 = vst [vmem:[%s3 + $0x8] sm:$0xff] %v41
  %46 = vst [vmem:[%s3 + $0x10] sm:$0xff] %v42
  %47 = vst [vmem:[%s3 + $0x18] sm:$0xff] %v43
  // Predicated region
  $region14: #{bbastar_forward.15} parent=0 // pred_check
    _
  $region15: #{bbastar_forward.15} parent=0 // pred_check_branch
    %49 = sbr.rel (0) target = $region17
  $region16: #{bbastar_forward.15} parent=0 // pred_region
    _
  $region17: #{bbastar_forward.15} parent=0 // pred_fallthru
    _
  // Predicated region
  $region18: #{bbastar_forward.15} parent=0 // pred_check
    _
  $region19: #{bbastar_forward.15} parent=0 // pred_check_branch
    %51 = sbr.rel (0) target = $region21
  $region20: #{bbastar_forward.15} parent=0 // pred_region
    _
  $region21: #{bbastar_forward.15} parent=0 // pred_fallthru
    _

// kernel: bbastar_forward.14
$region0: #{bbastar_forward.14}
  #allocation0 [shape = 'u32[]', space=smem, size = 0x4, offset = 0x4, fixed_abs, tag = 'smem constant byte address 0x4 - core index']
  #allocation1 [shape = 'u32[144,128]{1,0:T(1,128)}', space=vmem, size = 0x12000, scoped, tag = 'internal scratch']
  %s0 = inlined_call_operand.hbm [shape: bf16[8,18], index: 0, kind: input, shape index: {}]
  %s1 = inlined_call_operand.vmem [shape: bf16[18,512], index: 1, kind: input, shape index: {}]
  %s2 = inlined_call_operand.vmem [shape: bf16[8,512], index: 2, kind: output, shape index: {0}]
  %s3 = inlined_call_operand.vmem [shape: f32[1,8,1], index: 3, kind: output, shape index: {1}]
  %s4 = inlined_call_operand.vmem [shape: f32[1,8,1], index: 4, kind: output, shape index: {2}]
  %5 = xla_tuple %s2, %s3, %s4
  %s6 = sld [smem:[#allocation0]]
  $region38: #{bbastar_forward.14} parent=0
    _
  %s8 = ssub.s32 1, %s6
  %s9 = scalar_select 0, %s8, %s6
  $region1: #{bbastar_forward.14} parent=0
    #allocation2 [shape = 'u8[2048]{0}', space=vmem, size = 0x800, scoped, tag = 'input window, operand 0, single buffered']
    #allocation3 [shape = 's32[1]{0}', space=sflag, size = 0x4, scoped, tag = 'scoped memory for bbastar_forward.14']
    %10 = vsyncpa [#allocation3], 0
    // Predicated region
    $region2: #{bbastar_forward.14} parent=1 // pred_check
      _
    $region3: #{bbastar_forward.14} parent=1 // pred_check_branch
      %12 = sbr.rel (0) target = $region5
    $region4: #{bbastar_forward.14} parent=1 // pred_region
      %s14 = ssub.s32 64, 64
      %15 = vsyncadd [#allocation3], %s14
      %s17 = sshll.u32 [#allocation2], 4
      %s18 = int_to_ptr.vmem [resolvable:$true] %s17
      %20 = dma.hbm_to_vmem [thread:$0]  %s0, 64, %s18, [#allocation3]
    $region5: #{bbastar_forward.14} parent=1 // pred_fallthru
      _
    // Predicated region
    $region6: #{bbastar_forward.14} parent=1 // pred_check
      _
    $region7: #{bbastar_forward.14} parent=1 // pred_check_branch
      %22 = sbr.rel (0) target = $region9
    $region8: #{bbastar_forward.14} parent=1 // pred_region
      _
    $region9: #{bbastar_forward.14} parent=1 // pred_fallthru
      _
    // Predicated region
    $region10: #{bbastar_forward.14} parent=1 // pred_check
      _
    $region11: #{bbastar_forward.14} parent=1 // pred_check_branch
      %24 = sbr.rel (0) target = $region13
    $region12: #{bbastar_forward.14} parent=1 // pred_region
      %25 = dma.done [#allocation3], 64
    $region13: #{bbastar_forward.14} parent=1 // pred_fallthru
      _
    %v27 = vld [vmem:[#allocation2] sm:$0xf]
    %v28 = vld [vmem:[%s1] sm:$0xff]
    %v29 = vld [vmem:[%s1 + $0x8] sm:$0xff]
    %v30 = vld [vmem:[%s1 + $0x10] sm:$0xff]
    %v31 = vld [vmem:[%s1 + $0x18] sm:$0xff]
    %v32 = vld [vmem:[%s1 + $0x20] sm:$0x11]
    %v33 = vld [vmem:[%s1 + $0x28] sm:$0x11]
    %v40 = vunpack.c.l.b16 %v28
    %v41 = vunpack.c.h.b16 %v28
    %v42 = vunpack.c.l.b16 %v29
    %v43 = vunpack.c.h.b16 %v29
    %v44 = vunpack.c.l.b16 %v30
    %v45 = vunpack.c.h.b16 %v30
    %v46 = vunpack.c.l.b16 %v31
    %v47 = vunpack.c.h.b16 %v31
    %v48 = vunpack.c.l.b16 %v32
    %v49 = vunpack.c.h.b16 %v32
    %v50 = vunpack.c.l.b16 %v33
    %v51 = vunpack.c.h.b16 %v33
    %v52 = vpack.c.b16 %v44, %v40
    %v53 = vpack.c.b16 %v45, %v41
    %v54 = vpack.c.b16 %v46, %v42
    %v55 = vpack.c.b16 %v47, %v43
    %v56 = vpack.c.b16 %v48, %v48
    %v57 = vpack.c.b16 %v49, %v49
    %v58 = vpack.c.b16 %v50, %v50
    %v59 = vpack.c.b16 %v51, %v51
    %vm64 = vcmask 146432
    %v66 = vsel %vm64, %v27, 0
    %vm68 = vcmask 1040384
    %v70 = vsel %vm68, %v56, 0
    %v73 = vsel %vm68, %v57, 0
    %v76 = vsel %vm68, %v58, 0
    %v79 = vsel %vm68, %v59, 0
    %81 = vmatprep.subr.bf16.mxu0 %v53
    %82 = vmatpush1.bf16.msra.mxu0 %v52
    %83 = vmatprep.subr.bf16.mxu0 %v73
    %84 = vmatpush1.bf16.msra.mxu0 %v70
    %85 = vmatprep.subr.bf16.mxu0 0
    %86 = vmatpush1.bf16.msra.mxu0 0
    %87 = vmatprep.subr.bf16.mxu0 0
    %88 = vmatpush1.bf16.msra.mxu0 0
    %89 = vmatprep.subr.bf16.mxu0 0
    %90 = vmatpush1.bf16.msra.mxu0 0
    %91 = vmatprep.subr.bf16.mxu0 0
    %92 = vmatpush1.bf16.msra.mxu0 0
    %93 = vmatprep.subr.bf16.mxu0 0
    %94 = vmatpush1.bf16.msra.mxu0 0
    %95 = vmatprep.subr.bf16.mxu0 0
    %96 = vmatpush1.bf16.msra.mxu0 0
    %97 = vmatprep.subr.bf16.mxu0 0
    %98 = vmatpush1.bf16.msra.mxu0 0
    %99 = vmatprep.subr.bf16.mxu0 0
    %100 = vmatpush1.bf16.msra.mxu0 0
    %101 = vmatprep.subr.bf16.mxu0 0
    %102 = vmatpush1.bf16.msra.mxu0 0
    %103 = vmatprep.subr.bf16.mxu0 0
    %104 = vmatpush1.bf16.msra.mxu0 0
    %105 = vmatprep.subr.bf16.mxu0 0
    %106 = vmatpush1.bf16.msra.mxu0 0
    %107 = vmatprep.subr.bf16.mxu0 0
    %108 = vmatpush1.bf16.msra.mxu0 0
    %109 = vmatprep.subr.bf16.mxu0 0
    %110 = vmatpush1.bf16.msra.mxu0 0
    %111 = vmatprep.subr.bf16.mxu0 0
    %112 = vmatpush1.bf16.msra.mxu0 0
    %113 = vmatprep.mubr.bf16.mxu0 0
    %114 = vmatmul.mubr.bf16.gmra.mrb[0].mxu0 %v66
    %v115 = vpop.f32.mrb[0].mxu0
    %v116 = vadd.f32 0.0, %v115
    %v117 = vpop.f32.mrb[0].mxu0
    %v118 = vadd.f32 0.0, %v117
    %v119 = vpop.f32.mrb[0].mxu0
    %v120 = vpop.f32.mrb[0].mxu0
    %121 = vdwg.mxu0
    %122 = vmatprep.subr.bf16.mxu0 %v55
    %123 = vmatpush1.bf16.msra.mxu0 %v54
    %124 = vmatprep.subr.bf16.mxu0 %v79
    %125 = vmatpush1.bf16.msra.mxu0 %v76
    %126 = vmatprep.subr.bf16.mxu0 0
    %127 = vmatpush1.bf16.msra.mxu0 0
    %128 = vmatprep.subr.bf16.mxu0 0
    %129 = vmatpush1.bf16.msra.mxu0 0
    %130 = vmatprep.subr.bf16.mxu0 0
    %131 = vmatpush1.bf16.msra.mxu0 0
    %132 = vmatprep.subr.bf16.mxu0 0
    %133 = vmatpush1.bf16.msra.mxu0 0
    %134 = vmatprep.subr.bf16.mxu0 0
    %135 = vmatpush1.bf16.msra.mxu0 0
    %136 = vmatprep.subr.bf16.mxu0 0
    %137 = vmatpush1.bf16.msra.mxu0 0
    %138 = vmatprep.subr.bf16.mxu0 0
    %139 = vmatpush1.bf16.msra.mxu0 0
    %140 = vmatprep.subr.bf16.mxu0 0
    %141 = vmatpush1.bf16.msra.mxu0 0
    %142 = vmatprep.subr.bf16.mxu0 0
    %143 = vmatpush1.bf16.msra.mxu0 0
    %144 = vmatprep.subr.bf16.mxu0 0
    %145 = vmatpush1.bf16.msra.mxu0 0
    %146 = vmatprep.subr.bf16.mxu0 0
    %147 = vmatpush1.bf16.msra.mxu0 0
    %148 = vmatprep.subr.bf16.mxu0 0
    %149 = vmatpush1.bf16.msra.mxu0 0
    %150 = vmatprep.subr.bf16.mxu0 0
    %151 = vmatpush1.bf16.msra.mxu0 0
    %152 = vmatprep.subr.bf16.mxu0 0
    %153 = vmatpush1.bf16.msra.mxu0 0
    %154 = vmatprep.mubr.bf16.mxu0 0
    %155 = vmatmul.mubr.bf16.gmra.mrb[0].mxu0 %v66
    %v156 = vpop.f32.mrb[0].mxu0
    %v157 = vadd.f32 0.0, %v156
    %v158 = vpop.f32.mrb[0].mxu0
    %v159 = vadd.f32 0.0, %v158
    %v160 = vpop.f32.mrb[0].mxu0
    %v161 = vpop.f32.mrb[0].mxu0
    %162 = vdwg.mxu0
    %v163 = vpack.c.bf16 %v116, %v116
    %v164 = vpack.c.bf16 %v118, %v118
    %v165 = vpack.c.bf16 %v157, %v157
    %v166 = vpack.c.bf16 %v159, %v159
    %v171 = vunpack.c.l.b16 %v163
    %v172 = vunpack.c.l.b16 %v164
    %v173 = vunpack.c.l.b16 %v165
    %v174 = vunpack.c.l.b16 %v166
    %v175 = vpack.c.b16 %v172, %v171
    %v176 = vpack.c.b16 %v174, %v173
    %179 = vst [vmem:[%s2] sm:$0xff] %v175
    %180 = vst [vmem:[%s2 + $0x8] sm:$0xff] %v176
    %v181 = vadd.f32 %v116, %v118
    %v182 = vadd.f32 %v181, %v157
    %v183 = vadd.f32 %v182, %v159
    %184 = vadd.xlane.f32.xlu0 %v183
    %v185 = vpop.xlane.xlu0 %184
    %vm186 = vcmask 7168
    %187 = vst.msk [vmem:[%s3] sm:$0xff] %vm186, %v185
    %v188 = vmul.f32 %v116, %v116
    %v189 = vmul.f32 %v118, %v118
    %v190 = vmul.f32 %v157, %v157
    %v191 = vmul.f32 %v159, %v159
    %v192 = vadd.f32 %v188, %v189
    %v193 = vadd.f32 %v192, %v190
    %v194 = vadd.f32 %v193, %v191
    %195 = vadd.xlane.f32.xlu0 %v194
    %v196 = vpop.xlane.xlu0 %195
    %197 = vst.msk [vmem:[%s4] sm:$0xff] %vm186, %v196
    // Predicated region
    $region14: #{bbastar_forward.14} parent=1 // pred_check
      _
    $region15: #{bbastar_forward.14} parent=1 // pred_check_branch
      %199 = sbr.rel (0) target = $region17
    $region16: #{bbastar_forward.14} parent=1 // pred_region
      _
    $region17: #{bbastar_forward.14} parent=1 // pred_fallthru
      _
    // Predicated region
    $region18: #{bbastar_forward.14} parent=1 // pred_check
      _
    $region19: #{bbastar_forward.14} parent=1 // pred_check_branch
      %201 = sbr.rel (0) target = $region21
    $region20: #{bbastar_forward.14} parent=1 // pred_region
      _
    $region21: #{bbastar_forward.14} parent=1 // pred_fallthru
      _
    // Predicated region
    $region22: #{bbastar_forward.14} parent=1 // pred_check
      _
    $region23: #{bbastar_forward.14} parent=1 // pred_check_branch
      %203 = sbr.rel (0) target = $region25
    $region24: #{bbastar_forward.14} parent=1 // pred_region
      _
    $region25: #{bbastar_forward.14} parent=1 // pred_fallthru
      _
    // Predicated region
    $region26: #{bbastar_forward.14} parent=1 // pred_check
      _
    $region27: #{bbastar_forward.14} parent=1 // pred_check_branch
      %205 = sbr.rel (0) target = $region29
    $region28: #{bbastar_forward.14} parent=1 // pred_region
      _
    $region29: #{bbastar_forward.14} parent=1 // pred_fallthru
      _
    // Predicated region
    $region30: #{bbastar_forward.14} parent=1 // pred_check
      _
    $region31: #{bbastar_forward.14} parent=1 // pred_check_branch
      %207 = sbr.rel (0) target = $region33
    $region32: #{bbastar_forward.14} parent=1 // pred_region
      _
    $region33: #{bbastar_forward.14} parent=1 // pred_fallthru
      _
    // Predicated region
    $region34: #{bbastar_forward.14} parent=1 // pred_check
      _
    $region35: #{bbastar_forward.14} parent=1 // pred_check_branch
      %209 = sbr.rel (0) target = $region37
    $region36: #{bbastar_forward.14} parent=1 // pred_region
      _
    $region37: #{bbastar_forward.14} parent=1 // pred_fallthru
      _
    %210 = vsyncpa [#allocation3], 1

// kernel: bbastar_forward.16
$region0: #{bbastar_forward.16}
  #allocation0 [shape = 'u32[]', space=smem, size = 0x4, offset = 0x4, fixed_abs, tag = 'smem constant byte address 0x4 - core index']
  #allocation1 [shape = 'u32[144,128]{1,0:T(1,128)}', space=vmem, size = 0x12000, scoped, tag = 'internal scratch']
  %s0 = inlined_call_operand.vmem [shape: bf16[16,72], index: 0, kind: input, shape index: {}]
  %s1 = inlined_call_operand.vmem [shape: bf16[72,128], index: 1, kind: input, shape index: {}]
  %s2 = inlined_call_operand.vmem [shape: bf16[16,128], index: 2, kind: output, shape index: {0}]
  %s3 = inlined_call_operand.vmem [shape: f32[1,16,1], index: 3, kind: output, shape index: {1}]
  %s4 = inlined_call_operand.vmem [shape: f32[1,16,1], index: 4, kind: output, shape index: {2}]
  %5 = xla_tuple %s2, %s3, %s4
  %s6 = sld [smem:[#allocation0]]
  $region34: #{bbastar_forward.16} parent=0
    _
  %s8 = ssub.s32 1, %s6
  %s9 = scalar_select 0, %s8, %s6
  // Predicated region
  $region2: #{bbastar_forward.16} parent=0 // pred_check
    _
  $region3: #{bbastar_forward.16} parent=0 // pred_check_branch
    %11 = sbr.rel (0) target = $region5
  $region4: #{bbastar_forward.16} parent=0 // pred_region
    _
  $region5: #{bbastar_forward.16} parent=0 // pred_fallthru
    _
  // Predicated region
  $region6: #{bbastar_forward.16} parent=0 // pred_check
    _
  $region7: #{bbastar_forward.16} parent=0 // pred_check_branch
    %13 = sbr.rel (0) target = $region9
  $region8: #{bbastar_forward.16} parent=0 // pred_region
    _
  $region9: #{bbastar_forward.16} parent=0 // pred_fallthru
    _
  %v15 = vld [vmem:[%s0] sm:$0xf]
  %v16 = vld [vmem:[%s0 + $0x4] sm:$0xf]
  %v17 = vld [vmem:[%s1] sm:$0xf]
  %v18 = vld [vmem:[%s1 + $0x4] sm:$0xf]
  %v19 = vld [vmem:[%s1 + $0x8] sm:$0xf]
  %v20 = vld [vmem:[%s1 + $0xc] sm:$0xf]
  %v21 = vld [vmem:[%s1 + $0x10] sm:$0xf]
  %v22 = vld [vmem:[%s1 + $0x14] sm:$0xf]
  %v23 = vld [vmem:[%s1 + $0x18] sm:$0xf]
  %v24 = vld [vmem:[%s1 + $0x1c] sm:$0xf]
  %v25 = vld [vmem:[%s1 + $0x20] sm:$0xf]
  %v28 = vunpack.c.l.b16 %v15
  %v29 = vunpack.c.l.b16 %v16
  %v30 = vpack.c.b16 %v29, %v28
  %v40 = vunpack.c.l.b16 %v17
  %v41 = vunpack.c.l.b16 %v18
  %v42 = vunpack.c.l.b16 %v19
  %v43 = vunpack.c.l.b16 %v20
  %v44 = vunpack.c.l.b16 %v21
  %v45 = vunpack.c.l.b16 %v22
  %v46 = vunpack.c.l.b16 %v23
  %v47 = vunpack.c.l.b16 %v24
  %v48 = vunpack.c.l.b16 %v25
  %v49 = vpack.c.b16 %v41, %v40
  %v50 = vpack.c.b16 %v43, %v42
  %v51 = vpack.c.b16 %v45, %v44
  %v52 = vpack.c.b16 %v47, %v46
  %v53 = vpack.c.b16 %v48, %v48
  %vm58 = vcmask 588800
  %v60 = vsel %vm58, %v30, 0
  %vm62 = vcmask 1043456
  %v64 = vsel %vm62, %v53, 0
  %66 = vmatprep.subr.bf16.mxu0 0
  %67 = vmatpush1.bf16.msra.mxu0 %v49
  %68 = vmatprep.subr.bf16.mxu0 0
  %69 = vmatpush1.bf16.msra.mxu0 %v50
  %70 = vmatprep.subr.bf16.mxu0 0
  %71 = vmatpush1.bf16.msra.mxu0 %v51
  %72 = vmatprep.subr.bf16.mxu0 0
  %73 = vmatpush1.bf16.msra.mxu0 %v52
  %74 = vmatprep.subr.bf16.mxu0 0
  %75 = vmatpush1.bf16.msra.mxu0 %v64
  %76 = vmatprep.subr.bf16.mxu0 0
  %77 = vmatpush1.bf16.msra.mxu0 0
  %78 = vmatprep.subr.bf16.mxu0 0
  %79 = vmatpush1.bf16.msra.mxu0 0
  %80 = vmatprep.subr.bf16.mxu0 0
  %81 = vmatpush1.bf16.msra.mxu0 0
  %82 = vmatprep.subr.bf16.mxu0 0
  %83 = vmatpush1.bf16.msra.mxu0 0
  %84 = vmatprep.subr.bf16.mxu0 0
  %85 = vmatpush1.bf16.msra.mxu0 0
  %86 = vmatprep.subr.bf16.mxu0 0
  %87 = vmatpush1.bf16.msra.mxu0 0
  %88 = vmatprep.subr.bf16.mxu0 0
  %89 = vmatpush1.bf16.msra.mxu0 0
  %90 = vmatprep.subr.bf16.mxu0 0
  %91 = vmatpush1.bf16.msra.mxu0 0
  %92 = vmatprep.subr.bf16.mxu0 0
  %93 = vmatpush1.bf16.msra.mxu0 0
  %94 = vmatprep.subr.bf16.mxu0 0
  %95 = vmatpush1.bf16.msra.mxu0 0
  %96 = vmatprep.subr.bf16.mxu0 0
  %97 = vmatpush1.bf16.msra.mxu0 0
  %98 = vmatprep.mubr.bf16.mxu0 0
  %99 = vmatmul.mubr.bf16.gmra.mrb[0].mxu0 %v60
  %v100 = vpop.f32.mrb[0].mxu0
  %v101 = vadd.f32 0.0, %v100
  %v102 = vpop.f32.mrb[0].mxu0
  %v103 = vpop.f32.mrb[0].mxu0
  %v104 = vadd.f32 0.0, %v103
  %v105 = vpop.f32.mrb[0].mxu0
  %106 = vdwg.mxu0
  %v107 = vpack.c.bf16 %v104, %v101
  %v109 = vunpack.c.l.b16 %v107
  %v110 = vunpack.c.h.b16 %v107
  %v111 = vpack.c.b16 %v109, %v109
  %v112 = vpack.c.b16 %v110, %v110
  %115 = vst [vmem:[%s2] sm:$0xf] %v111
  %116 = vst [vmem:[%s2 + $0x4] sm:$0xf] %v112
  %117 = vadd.xlane.f32.xlu0 %v101
  %v118 = vpop.xlane.xlu0 %117
  %119 = vadd.xlane.f32.xlu0 %v104
  %v120 = vpop.xlane.xlu0 %119
  %vm121 = vcmask 7168
  %122 = vst.msk [vmem:[%s3] sm:$0xff] %vm121, %v118
  %123 = vst.msk [vmem:[%s3 + $0x8] sm:$0xff] %vm121, %v120
  %v124 = vmul.f32 %v101, %v101
  %v125 = vmul.f32 %v104, %v104
  %126 = vadd.xlane.f32.xlu0 %v124
  %v127 = vpop.xlane.xlu0 %126
  %128 = vadd.xlane.f32.xlu0 %v125
  %v129 = vpop.xlane.xlu0 %128
  %130 = vst.msk [vmem:[%s4] sm:$0xff] %vm121, %v127
  %131 = vst.msk [vmem:[%s4 + $0x8] sm:$0xff] %vm121, %v129
  // Predicated region
  $region10: #{bbastar_forward.16} parent=0 // pred_check
    _
  $region11: #{bbastar_forward.16} parent=0 // pred_check_branch
    %133 = sbr.rel (0) target = $region13
  $region12: #{bbastar_forward.16} parent=0 // pred_region
    _
  $region13: #{bbastar_forward.16} parent=0 // pred_fallthru
    _
  // Predicated region
  $region14: #{bbastar_forward.16} parent=0 // pred_check
    _
  $region15: #{bbastar_forward.16} parent=0 // pred_check_branch
    %135 = sbr.rel (0) target = $region17
  $region16: #{bbastar_forward.16} parent=0 // pred_region
    _
  $region17: #{bbastar_forward.16} parent=0 // pred_fallthru
    _
  // Predicated region
  $region18: #{bbastar_forward.16} parent=0 // pred_check
    _
  $region19: #{bbastar_forward.16} parent=0 // pred_check_branch
    %137 = sbr.rel (0) target = $region21
  $region20: #{bbastar_forward.16} parent=0 // pred_region
    _
  $region21: #{bbastar_forward.16} parent=0 // pred_fallthru
    _
  // Predicated region
  $region22: #{bbastar_forward.16} parent=0 // pred_check
    _
  $region23: #{bbastar_forward.16} parent=0 // pred_check_branch
    %139 = sbr.rel (0) target = $region25
  $region24: #{bbastar_forward.16} parent=0 // pred_region
    _
  $region25: #{bbastar_forward.16} parent=0 // pred_fallthru
    _
  // Predicated region
  $region26: #{bbastar_forward.16} parent=0 // pred_check
    _
  $region27: #{bbastar_forward.16} parent=0 // pred_check_branch
    %141 = sbr.rel (0) target = $region29
  $region28: #{bbastar_forward.16} parent=0 // pred_region
    _
  $region29: #{bbastar_forward.16} parent=0 // pred_fallthru
    _
  // Predicated region
  $region30: #{bbastar_forward.16} parent=0 // pred_check
    _
  $region31: #{bbastar_forward.16} parent=0 // pred_check_branch
    %143 = sbr.rel (0) target = $region33
  $region32: #{bbastar_forward.16} parent=0 // pred_region
    _
  $region33: #{bbastar_forward.16} parent=0 // pred_fallthru
    _

// kernel: bbastar_forward.17
$region0: #{bbastar_forward.17}
  #allocation0 [shape = 'u32[]', space=smem, size = 0x4, offset = 0x4, fixed_abs, tag = 'smem constant byte address 0x4 - core index']
  #allocation1 [shape = 'u32[144,128]{1,0:T(1,128)}', space=vmem, size = 0x12000, scoped, tag = 'internal scratch']
  %s0 = inlined_call_operand.vmem [shape: bf16[16,128], index: 0, kind: input, shape index: {}]
  %s1 = inlined_call_operand.vmem [shape: f32[16,1], index: 1, kind: input, shape index: {}]
  %s2 = inlined_call_operand.vmem [shape: f32[16,1], index: 2, kind: input, shape index: {}]
  %s3 = inlined_call_operand.vmem [shape: f32[16,128], index: 3, kind: output, shape index: {}]
  %s4 = sld [smem:[#allocation0]]
  $region22: #{bbastar_forward.17} parent=0
    _
  %s6 = ssub.s32 1, %s4
  %s7 = scalar_select 0, %s6, %s4
  // Predicated region
  $region2: #{bbastar_forward.17} parent=0 // pred_check
    _
  $region3: #{bbastar_forward.17} parent=0 // pred_check_branch
    %9 = sbr.rel (0) target = $region5
  $region4: #{bbastar_forward.17} parent=0 // pred_region
    _
  $region5: #{bbastar_forward.17} parent=0 // pred_fallthru
    _
  // Predicated region
  $region6: #{bbastar_forward.17} parent=0 // pred_check
    _
  $region7: #{bbastar_forward.17} parent=0 // pred_check_branch
    %11 = sbr.rel (0) target = $region9
  $region8: #{bbastar_forward.17} parent=0 // pred_region
    _
  $region9: #{bbastar_forward.17} parent=0 // pred_fallthru
    _
  // Predicated region
  $region10: #{bbastar_forward.17} parent=0 // pred_check
    _
  $region11: #{bbastar_forward.17} parent=0 // pred_check_branch
    %13 = sbr.rel (0) target = $region13
  $region12: #{bbastar_forward.17} parent=0 // pred_region
    _
  $region13: #{bbastar_forward.17} parent=0 // pred_fallthru
    _
  %v14 = vld [vmem:[%s0] sm:$0xf]
  %v15 = vld [vmem:[%s0 + $0x4] sm:$0xf]
  %v16 = vunpack.c.l.bf16 %v14
  %v17 = vunpack.c.l.bf16 %v15
  %v18 = vld [vmem:[%s1] sm:$0xff]
  %v19 = vld [vmem:[%s1 + $0x8] sm:$0xff]
  %21 = vset.pattern.permute.xlu0 0
  %22 = vperm.xlu0 %21, %v18
  %v23 = vpop.permute.xlu0 %22
  %26 = vset.pattern.permute.xlu0 0
  %27 = vperm.xlu0 %26, %v19
  %v28 = vpop.permute.xlu0 %27
  %v30 = vmul.f32 %v16, %v23
  %v31 = vmul.f32 %v17, %v28
  %v32 = vld [vmem:[%s2] sm:$0xff]
  %v33 = vld [vmem:[%s2 + $0x8] sm:$0xff]
  %35 = vset.pattern.permute.xlu0 0
  %36 = vperm.xlu0 %35, %v32
  %v37 = vpop.permute.xlu0 %36
  %40 = vset.pattern.permute.xlu0 0
  %41 = vperm.xlu0 %40, %v33
  %v42 = vpop.permute.xlu0 %41
  %v44 = vadd.f32 %v30, %v37
  %v45 = vadd.f32 %v31, %v42
  %v46 = vmax.f32 %v44, 0.0
  %v47 = vmax.f32 %v45, 0.0
  %48 = vst [vmem:[%s3] sm:$0xff] %v46
  %49 = vst [vmem:[%s3 + $0x8] sm:$0xff] %v47
  // Predicated region
  $region14: #{bbastar_forward.17} parent=0 // pred_check
    _
  $region15: #{bbastar_forward.17} parent=0 // pred_check_branch
    %51 = sbr.rel (0) target = $region17
  $region16: #{bbastar_forward.17} parent=0 // pred_region
    _
  $region17: #{bbastar_forward.17} parent=0 // pred_fallthru
    _
  // Predicated region
  $region18: #{bbastar_forward.17} parent=0 // pred_check
    _
  $region19: #{bbastar_forward.17} parent=0 // pred_check_branch
    %53 = sbr.rel (0) target = $region21
  $region20: #{bbastar_forward.17} parent=0 // pred_region
    _
  $region21: #{bbastar_forward.17} parent=0 // pred_fallthru
    _

// kernel: bbastar_forward.20
$region0: #{bbastar_forward.20}
  #allocation0 [shape = 'u32[]', space=smem, size = 0x4, offset = 0x4, fixed_abs, tag = 'smem constant byte address 0x4 - core index']
  #allocation1 [shape = 'u32[144,128]{1,0:T(1,128)}', space=vmem, size = 0x12000, scoped, tag = 'internal scratch']
  %s0 = inlined_call_operand.vmem [shape: bf16[8,216], index: 0, kind: input, shape index: {}]
  %s1 = inlined_call_operand.vmem [shape: bf16[216,512], index: 1, kind: input, shape index: {}]
  %s2 = inlined_call_operand.vmem [shape: bf16[8,512], index: 2, kind: output, shape index: {0}]
  %s3 = inlined_call_operand.vmem [shape: f32[1,8,1], index: 3, kind: output, shape index: {1}]
  %s4 = inlined_call_operand.vmem [shape: f32[1,8,1], index: 4, kind: output, shape index: {2}]
  %5 = xla_tuple %s2, %s3, %s4
  %s6 = sld [smem:[#allocation0]]
  $region34: #{bbastar_forward.20} parent=0
    _
  %s8 = ssub.s32 1, %s6
  %s9 = scalar_select 0, %s8, %s6
  // Predicated region
  $region2: #{bbastar_forward.20} parent=0 // pred_check
    _
  $region3: #{bbastar_forward.20} parent=0 // pred_check_branch
    %11 = sbr.rel (0) target = $region5
  $region4: #{bbastar_forward.20} parent=0 // pred_region
    _
  $region5: #{bbastar_forward.20} parent=0 // pred_fallthru
    _
  // Predicated region
  $region6: #{bbastar_forward.20} parent=0 // pred_check
    _
  $region7: #{bbastar_forward.20} parent=0 // pred_check_branch
    %13 = sbr.rel (0) target = $region9
  $region8: #{bbastar_forward.20} parent=0 // pred_region
    _
  $region9: #{bbastar_forward.20} parent=0 // pred_fallthru
    _
  %v15 = vld [vmem:[%s0] sm:$0xff]
  %v16 = vld [vmem:[%s1] sm:$0xff]
  %v17 = vld [vmem:[%s1 + $0x8] sm:$0xff]
  %v18 = vld [vmem:[%s1 + $0x10] sm:$0xff]
  %v19 = vld [vmem:[%s1 + $0x18] sm:$0xff]
  %v20 = vld [vmem:[%s1 + $0x20] sm:$0xff]
  %v21 = vld [vmem:[%s1 + $0x28] sm:$0xff]
  %v22 = vld [vmem:[%s1 + $0x30] sm:$0xff]
  %v23 = vld [vmem:[%s1 + $0x38] sm:$0xff]
  %v24 = vld [vmem:[%s1 + $0x40] sm:$0xff]
  %v25 = vld [vmem:[%s1 + $0x48] sm:$0xff]
  %v26 = vld [vmem:[%s1 + $0x50] sm:$0xff]
  %v27 = vld [vmem:[%s1 + $0x58] sm:$0xff]
  %v28 = vld [vmem:[%s1 + $0x60] sm:$0xff]
  %v29 = vld [vmem:[%s1 + $0x68] sm:$0xff]
  %v30 = vld [vmem:[%s1 + $0x70] sm:$0xff]
  %v31 = vld [vmem:[%s1 + $0x78] sm:$0xff]
  %v32 = vld [vmem:[%s1 + $0x80] sm:$0xff]
  %v33 = vld [vmem:[%s1 + $0x88] sm:$0xff]
  %v34 = vld [vmem:[%s1 + $0x90] sm:$0xff]
  %v35 = vld [vmem:[%s1 + $0x98] sm:$0xff]
  %v36 = vld [vmem:[%s1 + $0xa0] sm:$0xff]
  %v37 = vld [vmem:[%s1 + $0xa8] sm:$0xff]
  %v38 = vld [vmem:[%s1 + $0xb0] sm:$0xff]
  %v39 = vld [vmem:[%s1 + $0xb8] sm:$0xff]
  %v40 = vld [vmem:[%s1 + $0xc0] sm:$0xff]
  %v41 = vld [vmem:[%s1 + $0xc8] sm:$0xff]
  %v42 = vld [vmem:[%s1 + $0xd0] sm:$0xff]
  %v43 = vld [vmem:[%s1 + $0xd8] sm:$0xff]
  %v44 = vld [vmem:[%s1 + $0xe0] sm:$0xff]
  %v45 = vld [vmem:[%s1 + $0xe8] sm:$0xff]
  %v46 = vld [vmem:[%s1 + $0xf0] sm:$0xff]
  %v47 = vld [vmem:[%s1 + $0xf8] sm:$0xff]
  %v48 = vld [vmem:[%s1 + $0x100] sm:$0xff]
  %v49 = vld [vmem:[%s1 + $0x108] sm:$0xff]
  %v50 = vld [vmem:[%s1 + $0x110] sm:$0xff]
  %v51 = vld [vmem:[%s1 + $0x118] sm:$0xff]
  %v52 = vld [vmem:[%s1 + $0x120] sm:$0xff]
  %v53 = vld [vmem:[%s1 + $0x128] sm:$0xff]
  %v54 = vld [vmem:[%s1 + $0x130] sm:$0xff]
  %v55 = vld [vmem:[%s1 + $0x138] sm:$0xff]
  %v56 = vld [vmem:[%s1 + $0x140] sm:$0xff]
  %v57 = vld [vmem:[%s1 + $0x148] sm:$0xff]
  %v58 = vld [vmem:[%s1 + $0x150] sm:$0xff]
  %v59 = vld [vmem:[%s1 + $0x158] sm:$0xff]
  %v60 = vld [vmem:[%s1 + $0x160] sm:$0xff]
  %v61 = vld [vmem:[%s1 + $0x168] sm:$0xff]
  %v62 = vld [vmem:[%s1 + $0x170] sm:$0xff]
  %v63 = vld [vmem:[%s1 + $0x178] sm:$0xff]
  %v64 = vld [vmem:[%s1 + $0x180] sm:$0xff]
  %v65 = vld [vmem:[%s1 + $0x188] sm:$0xff]
  %v66 = vld [vmem:[%s1 + $0x190] sm:$0xff]
  %v67 = vld [vmem:[%s1 + $0x198] sm:$0xff]
  %v68 = vld [vmem:[%s1 + $0x1a0] sm:$0xff]
  %v69 = vld [vmem:[%s1 + $0x1a8] sm:$0xff]
  %v71 = vunpack.c.l.b16 %v15
  %v72 = vunpack.c.h.b16 %v15
  %v73 = vpack.c.b16 %v71, %v71
  %v74 = vpack.c.b16 %v72, %v72
  %v130 = vunpack.c.l.b16 %v16
  %v131 = vunpack.c.h.b16 %v16
  %v132 = vunpack.c.l.b16 %v17
  %v133 = vunpack.c.h.b16 %v17
  %v134 = vunpack.c.l.b16 %v18
  %v135 = vunpack.c.h.b16 %v18
  %v136 = vunpack.c.l.b16 %v19
  %v137 = vunpack.c.h.b16 %v19
  %v138 = vunpack.c.l.b16 %v20
  %v139 = vunpack.c.h.b16 %v20
  %v140 = vunpack.c.l.b16 %v21
  %v141 = vunpack.c.h.b16 %v21
  %v142 = vunpack.c.l.b16 %v22
  %v143 = vunpack.c.h.b16 %v22
  %v144 = vunpack.c.l.b16 %v23
  %v145 = vunpack.c.h.b16 %v23
  %v146 = vunpack.c.l.b16 %v24
  %v147 = vunpack.c.h.b16 %v24
  %v148 = vunpack.c.l.b16 %v25
  %v149 = vunpack.c.h.b16 %v25
  %v150 = vunpack.c.l.b16 %v26
  %v151 = vunpack.c.h.b16 %v26
  %v152 = vunpack.c.l.b16 %v27
  %v153 = vunpack.c.h.b16 %v27
  %v154 = vunpack.c.l.b16 %v28
  %v155 = vunpack.c.h.b16 %v28
  %v156 = vunpack.c.l.b16 %v29
  %v157 = vunpack.c.h.b16 %v29
  %v158 = vunpack.c.l.b16 %v30
  %v159 = vunpack.c.h.b16 %v30
  %v160 = vunpack.c.l.b16 %v31
  %v161 = vunpack.c.h.b16 %v31
  %v162 = vunpack.c.l.b16 %v32
  %v163 = vunpack.c.h.b16 %v32
  %v164 = vunpack.c.l.b16 %v33
  %v165 = vunpack.c.h.b16 %v33
  %v166 = vunpack.c.l.b16 %v34
  %v167 = vunpack.c.h.b16 %v34
  %v168 = vunpack.c.l.b16 %v35
  %v169 = vunpack.c.h.b16 %v35
  %v170 = vunpack.c.l.b16 %v36
  %v171 = vunpack.c.h.b16 %v36
  %v172 = vunpack.c.l.b16 %v37
  %v173 = vunpack.c.h.b16 %v37
  %v174 = vunpack.c.l.b16 %v38
  %v175 = vunpack.c.h.b16 %v38
  %v176 = vunpack.c.l.b16 %v39
  %v177 = vunpack.c.h.b16 %v39
  %v178 = vunpack.c.l.b16 %v40
  %v179 = vunpack.c.h.b16 %v40
  %v180 = vunpack.c.l.b16 %v41
  %v181 = vunpack.c.h.b16 %v41
  %v182 = vunpack.c.l.b16 %v42
  %v183 = vunpack.c.h.b16 %v42
  %v184 = vunpack.c.l.b16 %v43
  %v185 = vunpack.c.h.b16 %v43
  %v186 = vunpack.c.l.b16 %v44
  %v187 = vunpack.c.h.b16 %v44
  %v188 = vunpack.c.l.b16 %v45
  %v189 = vunpack.c.h.b16 %v45
  %v190 = vunpack.c.l.b16 %v46
  %v191 = vunpack.c.h.b16 %v46
  %v192 = vunpack.c.l.b16 %v47
  %v193 = vunpack.c.h.b16 %v47
  %v194 = vunpack.c.l.b16 %v48
  %v195 = vunpack.c.h.b16 %v48
  %v196 = vunpack.c.l.b16 %v49
  %v197 = vunpack.c.h.b16 %v49
  %v198 = vunpack.c.l.b16 %v50
  %v199 = vunpack.c.h.b16 %v50
  %v200 = vunpack.c.l.b16 %v51
  %v201 = vunpack.c.h.b16 %v51
  %v202 = vunpack.c.l.b16 %v52
  %v203 = vunpack.c.h.b16 %v52
  %v204 = vunpack.c.l.b16 %v53
  %v205 = vunpack.c.h.b16 %v53
  %v206 = vunpack.c.l.b16 %v54
  %v207 = vunpack.c.h.b16 %v54
  %v208 = vunpack.c.l.b16 %v55
  %v209 = vunpack.c.h.b16 %v55
  %v210 = vunpack.c.l.b16 %v56
  %v211 = vunpack.c.h.b16 %v56
  %v212 = vunpack.c.l.b16 %v57
  %v213 = vunpack.c.h.b16 %v57
  %v214 = vunpack.c.l.b16 %v58
  %v215 = vunpack.c.h.b16 %v58
  %v216 = vunpack.c.l.b16 %v59
  %v217 = vunpack.c.h.b16 %v59
  %v218 = vunpack.c.l.b16 %v60
  %v219 = vunpack.c.h.b16 %v60
  %v220 = vunpack.c.l.b16 %v61
  %v221 = vunpack.c.h.b16 %v61
  %v222 = vunpack.c.l.b16 %v62
  %v223 = vunpack.c.h.b16 %v62
  %v224 = vunpack.c.l.b16 %v63
  %v225 = vunpack.c.h.b16 %v63
  %v226 = vunpack.c.l.b16 %v64
  %v227 = vunpack.c.h.b16 %v64
  %v228 = vunpack.c.l.b16 %v65
  %v229 = vunpack.c.h.b16 %v65
  %v230 = vunpack.c.l.b16 %v66
  %v231 = vunpack.c.h.b16 %v66
  %v232 = vunpack.c.l.b16 %v67
  %v233 = vunpack.c.h.b16 %v67
  %v234 = vunpack.c.l.b16 %v68
  %v235 = vunpack.c.h.b16 %v68
  %v236 = vunpack.c.l.b16 %v69
  %v237 = vunpack.c.h.b16 %v69
  %v238 = vpack.c.b16 %v134, %v130
  %v239 = vpack.c.b16 %v135, %v131
  %v240 = vpack.c.b16 %v136, %v132
  %v241 = vpack.c.b16 %v137, %v133
  %v242 = vpack.c.b16 %v142, %v138
  %v243 = vpack.c.b16 %v143, %v139
  %v244 = vpack.c.b16 %v144, %v140
  %v245 = vpack.c.b16 %v145, %v141
  %v246 = vpack.c.b16 %v150, %v146
  %v247 = vpack.c.b16 %v151, %v147
  %v248 = vpack.c.b16 %v152, %v148
  %v249 = vpack.c.b16 %v153, %v149
  %v250 = vpack.c.b16 %v158, %v154
  %v251 = vpack.c.b16 %v159, %v155
  %v252 = vpack.c.b16 %v160, %v156
  %v253 = vpack.c.b16 %v161, %v157
  %v254 = vpack.c.b16 %v166, %v162
  %v255 = vpack.c.b16 %v167, %v163
  %v256 = vpack.c.b16 %v168, %v164
  %v257 = vpack.c.b16 %v169, %v165
  %v258 = vpack.c.b16 %v174, %v170
  %v259 = vpack.c.b16 %v175, %v171
  %v260 = vpack.c.b16 %v176, %v172
  %v261 = vpack.c.b16 %v177, %v173
  %v262 = vpack.c.b16 %v182, %v178
  %v263 = vpack.c.b16 %v183, %v179
  %v264 = vpack.c.b16 %v184, %v180
  %v265 = vpack.c.b16 %v185, %v181
  %v266 = vpack.c.b16 %v190, %v186
  %v267 = vpack.c.b16 %v191, %v187
  %v268 = vpack.c.b16 %v192, %v188
  %v269 = vpack.c.b16 %v193, %v189
  %v270 = vpack.c.b16 %v198, %v194
  %v271 = vpack.c.b16 %v199, %v195
  %v272 = vpack.c.b16 %v200, %v196
  %v273 = vpack.c.b16 %v201, %v197
  %v274 = vpack.c.b16 %v206, %v202
  %v275 = vpack.c.b16 %v207, %v203
  %v276 = vpack.c.b16 %v208, %v204
  %v277 = vpack.c.b16 %v209, %v205
  %v278 = vpack.c.b16 %v214, %v210
  %v279 = vpack.c.b16 %v215, %v211
  %v280 = vpack.c.b16 %v216, %v212
  %v281 = vpack.c.b16 %v217, %v213
  %v282 = vpack.c.b16 %v222, %v218
  %v283 = vpack.c.b16 %v223, %v219
  %v284 = vpack.c.b16 %v224, %v220
  %v285 = vpack.c.b16 %v225, %v221
  %v286 = vpack.c.b16 %v230, %v226
  %v287 = vpack.c.b16 %v231, %v227
  %v288 = vpack.c.b16 %v232, %v228
  %v289 = vpack.c.b16 %v233, %v229
  %v290 = vpack.c.b16 %v234, %v234
  %v291 = vpack.c.b16 %v235, %v235
  %v292 = vpack.c.b16 %v236, %v236
  %v293 = vpack.c.b16 %v237, %v237
  %vm346 = vcmask 719872
  %v348 = vsel %vm346, %v74, 0
  %vm350 = vcmask 1043456
  %v352 = vsel %vm350, %v290, 0
  %v355 = vsel %vm350, %v291, 0
  %v358 = vsel %vm350, %v292, 0
  %v361 = vsel %vm350, %v293, 0
  %363 = vmatprep.subr.bf16.mxu0 %v239
  %364 = vmatpush1.bf16.msra.mxu0 %v238
  %365 = vmatprep.subr.bf16.mxu0 %v243
  %366 = vmatpush1.bf16.msra.mxu0 %v242
  %367 = vmatprep.subr.bf16.mxu0 %v247
  %368 = vmatpush1.bf16.msra.mxu0 %v246
  %369 = vmatprep.subr.bf16.mxu0 %v251
  %370 = vmatpush1.bf16.msra.mxu0 %v250
  %371 = vmatprep.subr.bf16.mxu0 %v255
  %372 = vmatpush1.bf16.msra.mxu0 %v254
  %373 = vmatprep.subr.bf16.mxu0 %v259
  %374 = vmatpush1.bf16.msra.mxu0 %v258
  %375 = vmatprep.subr.bf16.mxu0 %v263
  %376 = vmatpush1.bf16.msra.mxu0 %v262
  %377 = vmatprep.subr.bf16.mxu0 %v267
  %378 = vmatpush1.bf16.msra.mxu0 %v266
  %379 = vmatprep.subr.bf16.mxu0 %v271
  %380 = vmatpush1.bf16.msra.mxu0 %v270
  %381 = vmatprep.subr.bf16.mxu0 %v275
  %382 = vmatpush1.bf16.msra.mxu0 %v274
  %383 = vmatprep.subr.bf16.mxu0 %v279
  %384 = vmatpush1.bf16.msra.mxu0 %v278
  %385 = vmatprep.subr.bf16.mxu0 %v283
  %386 = vmatpush1.bf16.msra.mxu0 %v282
  %387 = vmatprep.subr.bf16.mxu0 %v287
  %388 = vmatpush1.bf16.msra.mxu0 %v286
  %389 = vmatprep.subr.bf16.mxu0 %v355
  %390 = vmatpush1.bf16.msra.mxu0 %v352
  %391 = vmatprep.subr.bf16.mxu0 0
  %392 = vmatpush1.bf16.msra.mxu0 0
  %393 = vmatprep.subr.bf16.mxu0 0
  %394 = vmatpush1.bf16.msra.mxu0 0
  %395 = vmatprep.mubr.bf16.mxu0 %v348
  %396 = vmatmul.mubr.bf16.gmra.mrb[0].mxu0 %v73
  %v397 = vpop.f32.mrb[0].mxu0
  %v398 = vadd.f32 0.0, %v397
  %v399 = vpop.f32.mrb[0].mxu0
  %v400 = vadd.f32 0.0, %v399
  %v401 = vpop.f32.mrb[0].mxu0
  %v402 = vpop.f32.mrb[0].mxu0
  %403 = vdwg.mxu0
  %404 = vmatprep.subr.bf16.mxu0 %v241
  %405 = vmatpush1.bf16.msra.mxu0 %v240
  %406 = vmatprep.subr.bf16.mxu0 %v245
  %407 = vmatpush1.bf16.msra.mxu0 %v244
  %408 = vmatprep.subr.bf16.mxu0 %v249
  %409 = vmatpush1.bf16.msra.mxu0 %v248
  %410 = vmatprep.subr.bf16.mxu0 %v253
  %411 = vmatpush1.bf16.msra.mxu0 %v252
  %412 = vmatprep.subr.bf16.mxu0 %v257
  %413 = vmatpush1.bf16.msra.mxu0 %v256
  %414 = vmatprep.subr.bf16.mxu0 %v261
  %415 = vmatpush1.bf16.msra.mxu0 %v260
  %416 = vmatprep.subr.bf16.mxu0 %v265
  %417 = vmatpush1.bf16.msra.mxu0 %v264
  %418 = vmatprep.subr.bf16.mxu0 %v269
  %419 = vmatpush1.bf16.msra.mxu0 %v268
  %420 = vmatprep.subr.bf16.mxu0 %v273
  %421 = vmatpush1.bf16.msra.mxu0 %v272
  %422 = vmatprep.subr.bf16.mxu0 %v277
  %423 = vmatpush1.bf16.msra.mxu0 %v276
  %424 = vmatprep.subr.bf16.mxu0 %v281
  %425 = vmatpush1.bf16.msra.mxu0 %v280
  %426 = vmatprep.subr.bf16.mxu0 %v285
  %427 = vmatpush1.bf16.msra.mxu0 %v284
  %428 = vmatprep.subr.bf16.mxu0 %v289
  %429 = vmatpush1.bf16.msra.mxu0 %v288
  %430 = vmatprep.subr.bf16.mxu0 %v361
  %431 = vmatpush1.bf16.msra.mxu0 %v358
  %432 = vmatprep.subr.bf16.mxu0 0
  %433 = vmatpush1.bf16.msra.mxu0 0
  %434 = vmatprep.subr.bf16.mxu0 0
  %435 = vmatpush1.bf16.msra.mxu0 0
  %436 = vmatprep.mubr.bf16.mxu0 %v348
  %437 = vmatmul.mubr.bf16.gmra.mrb[0].mxu0 %v73
  %v438 = vpop.f32.mrb[0].mxu0
  %v439 = vadd.f32 0.0, %v438
  %v440 = vpop.f32.mrb[0].mxu0
  %v441 = vadd.f32 0.0, %v440
  %v442 = vpop.f32.mrb[0].mxu0
  %v443 = vpop.f32.mrb[0].mxu0
  %444 = vdwg.mxu0
  %v445 = vpack.c.bf16 %v398, %v398
  %v446 = vpack.c.bf16 %v400, %v400
  %v447 = vpack.c.bf16 %v439, %v439
  %v448 = vpack.c.bf16 %v441, %v441
  %v453 = vunpack.c.l.b16 %v445
  %v454 = vunpack.c.l.b16 %v446
  %v455 = vunpack.c.l.b16 %v447
  %v456 = vunpack.c.l.b16 %v448
  %v457 = vpack.c.b16 %v454, %v453
  %v458 = vpack.c.b16 %v456, %v455
  %461 = vst [vmem:[%s2] sm:$0xff] %v457
  %462 = vst [vmem:[%s2 + $0x8] sm:$0xff] %v458
  %v463 = vadd.f32 %v398, %v400
  %v464 = vadd.f32 %v463, %v439
  %v465 = vadd.f32 %v464, %v441
  %466 = vadd.xlane.f32.xlu0 %v465
  %v467 = vpop.xlane.xlu0 %466
  %vm468 = vcmask 7168
  %469 = vst.msk [vmem:[%s3] sm:$0xff] %vm468, %v467
  %v470 = vmul.f32 %v398, %v398
  %v471 = vmul.f32 %v400, %v400
  %v472 = vmul.f32 %v439, %v439
  %v473 = vmul.f32 %v441, %v441
  %v474 = vadd.f32 %v470, %v471
  %v475 = vadd.f32 %v474, %v472
  %v476 = vadd.f32 %v475, %v473
  %477 = vadd.xlane.f32.xlu0 %v476
  %v478 = vpop.xlane.xlu0 %477
  %479 = vst.msk [vmem:[%s4] sm:$0xff] %vm468, %v478
  // Predicated region
  $region10: #{bbastar_forward.20} parent=0 // pred_check
    _
  $region11: #{bbastar_forward.20} parent=0 // pred_check_branch
    %481 = sbr.rel (0) target = $region13
  $region12: #{bbastar_forward.20} parent=0 // pred_region
    _
  $region13: #{bbastar_forward.20} parent=0 // pred_fallthru
    _
  // Predicated region
  $region14: #{bbastar_forward.20} parent=0 // pred_check
    _
  $region15: #{bbastar_forward.20} parent=0 // pred_check_branch
    %483 = sbr.rel (0) target = $region17
  $region16: #{bbastar_forward.20} parent=0 // pred_region
    _
  $region17: #{bbastar_forward.20} parent=0 // pred_fallthru
    _
  // Predicated region
  $region18: #{bbastar_forward.20} parent=0 // pred_check
    _
  $region19: #{bbastar_forward.20} parent=0 // pred_check_branch
    %485 = sbr.rel (0) target = $region21
  $region20: #{bbastar_forward.20} parent=0 // pred_region
    _
  $region21: #{bbastar_forward.20} parent=0 // pred_fallthru
    _
  // Predicated region
  $region22: #{bbastar_forward.20} parent=0 // pred_check
    _
  $region23: #{bbastar_forward.20} parent=0 // pred_check_branch
    %487 = sbr.rel (0) target = $region25
  $region24: #{bbastar_forward.20} parent=0 // pred_region
    _
  $region25: #{bbastar_forward.20} parent=0 // pred_fallthru
    _
  // Predicated region
  $region26: #{bbastar_forward.20} parent=0 // pred_check
    _
  $region27: #{bbastar_forward.20} parent=0 // pred_check_branch
    %489 = sbr.rel (0) target = $region29
  $region28: #{bbastar_forward.20} parent=0 // pred_region
    _
  $region29: #{bbastar_forward.20} parent=0 // pred_fallthru
    _
  // Predicated region
  $region30: #{bbastar_forward.20} parent=0 // pred_check
    _
  $region31: #{bbastar_forward.20} parent=0 // pred_check_branch
    %491 = sbr.rel (0) target = $region33
  $region32: #{bbastar_forward.20} parent=0 // pred_region
    _
  $region33: #{bbastar_forward.20} parent=0 // pred_fallthru
    _

// kernel: bbastar_forward.18
$region0: #{bbastar_forward.18}
  #allocation0 [shape = 'u32[]', space=smem, size = 0x4, offset = 0x4, fixed_abs, tag = 'smem constant byte address 0x4 - core index']
  #allocation1 [shape = 'u32[144,128]{1,0:T(1,128)}', space=vmem, size = 0x12000, scoped, tag = 'internal scratch']
  %s0 = inlined_call_operand.vmem [shape: bf16[32,144], index: 0, kind: input, shape index: {}]
  %s1 = inlined_call_operand.vmem [shape: bf16[144,32], index: 1, kind: input, shape index: {}]
  %s2 = inlined_call_operand.vmem [shape: bf16[32,32], index: 2, kind: output, shape index: {0}]
  %s3 = inlined_call_operand.vmem [shape: f32[1,32,1], index: 3, kind: output, shape index: {1}]
  %s4 = inlined_call_operand.vmem [shape: f32[1,32,1], index: 4, kind: output, shape index: {2}]
  %5 = xla_tuple %s2, %s3, %s4
  %s6 = sld [smem:[#allocation0]]
  $region34: #{bbastar_forward.18} parent=0
    _
  %s8 = ssub.s32 1, %s6
  %s9 = scalar_select 0, %s8, %s6
  // Predicated region
  $region2: #{bbastar_forward.18} parent=0 // pred_check
    _
  $region3: #{bbastar_forward.18} parent=0 // pred_check_branch
    %11 = sbr.rel (0) target = $region5
  $region4: #{bbastar_forward.18} parent=0 // pred_region
    _
  $region5: #{bbastar_forward.18} parent=0 // pred_fallthru
    _
  // Predicated region
  $region6: #{bbastar_forward.18} parent=0 // pred_check
    _
  $region7: #{bbastar_forward.18} parent=0 // pred_check_branch
    %13 = sbr.rel (0) target = $region9
  $region8: #{bbastar_forward.18} parent=0 // pred_region
    _
  $region9: #{bbastar_forward.18} parent=0 // pred_fallthru
    _
  %v15 = vld [vmem:[%s0] sm:$0xff]
  %v16 = vld [vmem:[%s0 + $0x8] sm:$0xff]
  %v17 = vld [vmem:[%s0 + $0x10] sm:$0xff]
  %v18 = vld [vmem:[%s0 + $0x18] sm:$0xff]
  %v19 = vld [vmem:[%s1] sm:$0xf]
  %v20 = vld [vmem:[%s1 + $0x4] sm:$0xf]
  %v21 = vld [vmem:[%s1 + $0x8] sm:$0xf]
  %v22 = vld [vmem:[%s1 + $0xc] sm:$0xf]
  %v23 = vld [vmem:[%s1 + $0x10] sm:$0xf]
  %v24 = vld [vmem:[%s1 + $0x14] sm:$0xf]
  %v25 = vld [vmem:[%s1 + $0x18] sm:$0xf]
  %v26 = vld [vmem:[%s1 + $0x1c] sm:$0xf]
  %v27 = vld [vmem:[%s1 + $0x20] sm:$0xf]
  %v28 = vld [vmem:[%s1 + $0x24] sm:$0xf]
  %v29 = vld [vmem:[%s1 + $0x28] sm:$0xf]
  %v30 = vld [vmem:[%s1 + $0x2c] sm:$0xf]
  %v31 = vld [vmem:[%s1 + $0x30] sm:$0xf]
  %v32 = vld [vmem:[%s1 + $0x34] sm:$0xf]
  %v33 = vld [vmem:[%s1 + $0x38] sm:$0xf]
  %v34 = vld [vmem:[%s1 + $0x3c] sm:$0xf]
  %v35 = vld [vmem:[%s1 + $0x40] sm:$0xf]
  %v36 = vld [vmem:[%s1 + $0x44] sm:$0xf]
  %v41 = vunpack.c.l.b16 %v15
  %v42 = vunpack.c.h.b16 %v15
  %v43 = vunpack.c.l.b16 %v16
  %v44 = vunpack.c.h.b16 %v16
  %v45 = vunpack.c.l.b16 %v17
  %v46 = vunpack.c.h.b16 %v17
  %v47 = vunpack.c.l.b16 %v18
  %v48 = vunpack.c.h.b16 %v18
  %v49 = vpack.c.b16 %v43, %v41
  %v50 = vpack.c.b16 %v44, %v42
  %v51 = vpack.c.b16 %v47, %v45
  %v52 = vpack.c.b16 %v48, %v46
  %v73 = vunpack.c.l.b16 %v19
  %v74 = vunpack.c.l.b16 %v20
  %v75 = vunpack.c.l.b16 %v21
  %v76 = vunpack.c.l.b16 %v22
  %v77 = vunpack.c.l.b16 %v23
  %v78 = vunpack.c.l.b16 %v24
  %v79 = vunpack.c.l.b16 %v25
  %v80 = vunpack.c.l.b16 %v26
  %v81 = vunpack.c.l.b16 %v27
  %v82 = vunpack.c.l.b16 %v28
  %v83 = vunpack.c.l.b16 %v29
  %v84 = vunpack.c.l.b16 %v30
  %v85 = vunpack.c.l.b16 %v31
  %v86 = vunpack.c.l.b16 %v32
  %v87 = vunpack.c.l.b16 %v33
  %v88 = vunpack.c.l.b16 %v34
  %v89 = vunpack.c.l.b16 %v35
  %v90 = vunpack.c.l.b16 %v36
  %v91 = vpack.c.b16 %v74, %v73
  %v92 = vpack.c.b16 %v76, %v75
  %v93 = vpack.c.b16 %v78, %v77
  %v94 = vpack.c.b16 %v80, %v79
  %v95 = vpack.c.b16 %v82, %v81
  %v96 = vpack.c.b16 %v84, %v83
  %v97 = vpack.c.b16 %v86, %v85
  %v98 = vpack.c.b16 %v88, %v87
  %v99 = vpack.c.b16 %v90, %v89
  %vm109 = vcmask 130048
  %v111 = vsel %vm109, %v50, 0
  %v114 = vsel %vm109, %v52, 0
  %116 = vmatprep.subr.bf16.mxu0 0
  %117 = vmatpush1.bf16.msra.mxu0 %v91
  %118 = vmatprep.subr.bf16.mxu0 0
  %119 = vmatpush1.bf16.msra.mxu0 %v92
  %120 = vmatprep.subr.bf16.mxu0 0
  %121 = vmatpush1.bf16.msra.mxu0 %v93
  %122 = vmatprep.subr.bf16.mxu0 0
  %123 = vmatpush1.bf16.msra.mxu0 %v94
  %124 = vmatprep.subr.bf16.mxu0 0
  %125 = vmatpush1.bf16.msra.mxu0 %v95
  %126 = vmatprep.subr.bf16.mxu0 0
  %127 = vmatpush1.bf16.msra.mxu0 %v96
  %128 = vmatprep.subr.bf16.mxu0 0
  %129 = vmatpush1.bf16.msra.mxu0 %v97
  %130 = vmatprep.subr.bf16.mxu0 0
  %131 = vmatpush1.bf16.msra.mxu0 %v98
  %132 = vmatprep.subr.bf16.mxu0 0
  %133 = vmatpush1.bf16.msra.mxu0 %v99
  %134 = vmatprep.subr.bf16.mxu0 0
  %135 = vmatpush1.bf16.msra.mxu0 0
  %136 = vmatprep.subr.bf16.mxu0 0
  %137 = vmatpush1.bf16.msra.mxu0 0
  %138 = vmatprep.subr.bf16.mxu0 0
  %139 = vmatpush1.bf16.msra.mxu0 0
  %140 = vmatprep.subr.bf16.mxu0 0
  %141 = vmatpush1.bf16.msra.mxu0 0
  %142 = vmatprep.subr.bf16.mxu0 0
  %143 = vmatpush1.bf16.msra.mxu0 0
  %144 = vmatprep.subr.bf16.mxu0 0
  %145 = vmatpush1.bf16.msra.mxu0 0
  %146 = vmatprep.subr.bf16.mxu0 0
  %147 = vmatpush1.bf16.msra.mxu0 0
  %148 = vmatprep.mubr.bf16.mxu0 %v111
  %149 = vmatmul.mubr.bf16.gmra.mrb[0].mxu0 %v49
  %v150 = vpop.f32.mrb[0].mxu0
  %v151 = vadd.f32 0.0, %v150
  %v152 = vpop.f32.mrb[0].mxu0
  %v153 = vpop.f32.mrb[0].mxu0
  %v154 = vadd.f32 0.0, %v153
  %v155 = vpop.f32.mrb[0].mxu0
  %156 = vmatprep.mubr.bf16.mxu0 %v114
  %157 = vmatmul.mubr.bf16.gmra.mrb[0].mxu0 %v51
  %v158 = vpop.f32.mrb[0].mxu0
  %v159 = vadd.f32 0.0, %v158
  %v160 = vpop.f32.mrb[0].mxu0
  %v161 = vpop.f32.mrb[0].mxu0
  %v162 = vadd.f32 0.0, %v161
  %v163 = vpop.f32.mrb[0].mxu0
  %164 = vdwg.mxu0
  %v165 = vpack.c.bf16 %v154, %v151
  %v166 = vpack.c.bf16 %v162, %v159
  %v169 = vunpack.c.l.b16 %v165
  %v170 = vunpack.c.h.b16 %v165
  %v171 = vunpack.c.l.b16 %v166
  %v172 = vunpack.c.h.b16 %v166
  %v173 = vpack.c.b16 %v169, %v169
  %v174 = vpack.c.b16 %v170, %v170
  %v175 = vpack.c.b16 %v171, %v171
  %v176 = vpack.c.b16 %v172, %v172
  %vm181 = vcmask 257024
  %182 = vst.msk [vmem:[%s2] sm:$0xf] %vm181, %v173
  %183 = vst.msk [vmem:[%s2 + $0x4] sm:$0xf] %vm181, %v174
  %184 = vst.msk [vmem:[%s2 + $0x8] sm:$0xf] %vm181, %v175
  %185 = vst.msk [vmem:[%s2 + $0xc] sm:$0xf] %vm181, %v176
  %vm186 = vcmask 261120
  %v187 = vsel %vm186, %v151, 0.0
  %188 = vadd.xlane.f32.xlu0 %v187
  %v189 = vpop.xlane.xlu0 %188
  %v190 = vsel %vm186, %v154, 0.0
  %191 = vadd.xlane.f32.xlu0 %v190
  %v192 = vpop.xlane.xlu0 %191
  %v193 = vsel %vm186, %v159, 0.0
  %194 = vadd.xlane.f32.xlu0 %v193
  %v195 = vpop.xlane.xlu0 %194
  %v196 = vsel %vm186, %v162, 0.0
  %197 = vadd.xlane.f32.xlu0 %v196
  %v198 = vpop.xlane.xlu0 %197
  %vm199 = vcmask 7168
  %200 = vst.msk [vmem:[%s3] sm:$0xff] %vm199, %v189
  %201 = vst.msk [vmem:[%s3 + $0x8] sm:$0xff] %vm199, %v192
  %202 = vst.msk [vmem:[%s3 + $0x10] sm:$0xff] %vm199, %v195
  %203 = vst.msk [vmem:[%s3 + $0x18] sm:$0xff] %vm199, %v198
  %v204 = vmul.f32 %v151, %v151
  %v205 = vmul.f32 %v154, %v154
  %v206 = vmul.f32 %v159, %v159
  %v207 = vmul.f32 %v162, %v162
  %v208 = vsel %vm186, %v204, 0.0
  %209 = vadd.xlane.f32.xlu0 %v208
  %v210 = vpop.xlane.xlu0 %209
  %v211 = vsel %vm186, %v205, 0.0
  %212 = vadd.xlane.f32.xlu0 %v211
  %v213 = vpop.xlane.xlu0 %212
  %v214 = vsel %vm186, %v206, 0.0
  %215 = vadd.xlane.f32.xlu0 %v214
  %v216 = vpop.xlane.xlu0 %215
  %v217 = vsel %vm186, %v207, 0.0
  %218 = vadd.xlane.f32.xlu0 %v217
  %v219 = vpop.xlane.xlu0 %218
  %220 = vst.msk [vmem:[%s4] sm:$0xff] %vm199, %v210
  %221 = vst.msk [vmem:[%s4 + $0x8] sm:$0xff] %vm199, %v213
  %222 = vst.msk [vmem:[%s4 + $0x10] sm:$0xff] %vm199, %v216
  %223 = vst.msk [vmem:[%s4 + $0x18] sm:$0xff] %vm199, %v219
  // Predicated region
  $region10: #{bbastar_forward.18} parent=0 // pred_check
    _
  $region11: #{bbastar_forward.18} parent=0 // pred_check_branch
    %225 = sbr.rel (0) target = $region13
  $region12: #{bbastar_forward.18} parent=0 // pred_region
    _
  $region13: #{bbastar_forward.18} parent=0 // pred_fallthru
    _
  // Predicated region
  $region14: #{bbastar_forward.18} parent=0 // pred_check
    _
  $region15: #{bbastar_forward.18} parent=0 // pred_check_branch
    %227 = sbr.rel (0) target = $region17
  $region16: #{bbastar_forward.18} parent=0 // pred_region
    _
  $region17: #{bbastar_forward.18} parent=0 // pred_fallthru
    _
  // Predicated region
  $region18: #{bbastar_forward.18} parent=0 // pred_check
    _
  $region19: #{bbastar_forward.18} parent=0 // pred_check_branch
    %229 = sbr.rel (0) target = $region21
  $region20: #{bbastar_forward.18} parent=0 // pred_region
    _
  $region21: #{bbastar_forward.18} parent=0 // pred_fallthru
    _
  // Predicated region
  $region22: #{bbastar_forward.18} parent=0 // pred_check
    _
  $region23: #{bbastar_forward.18} parent=0 // pred_check_branch
    %231 = sbr.rel (0) target = $region25
  $region24: #{bbastar_forward.18} parent=0 // pred_region
    _
  $region25: #{bbastar_forward.18} parent=0 // pred_fallthru
    _
  // Predicated region
  $region26: #{bbastar_forward.18} parent=0 // pred_check
    _
  $region27: #{bbastar_forward.18} parent=0 // pred_check_branch
    %233 = sbr.rel (0) target = $region29
  $region28: #{bbastar_forward.18} parent=0 // pred_region
    _
  $region29: #{bbastar_forward.18} parent=0 // pred_fallthru
    _
  // Predicated region
  $region30: #{bbastar_forward.18} parent=0 // pred_check
    _
  $region31: #{bbastar_forward.18} parent=0 // pred_check_branch
    %235 = sbr.rel (0) target = $region33
  $region32: #{bbastar_forward.18} parent=0 // pred_region
    _
  $region33: #{bbastar_forward.18} parent=0 // pred_fallthru
    _

// kernel: bbastar_forward.19
$region0: #{bbastar_forward.19}
  #allocation0 [shape = 'u32[]', space=smem, size = 0x4, offset = 0x4, fixed_abs, tag = 'smem constant byte address 0x4 - core index']
  #allocation1 [shape = 'u32[144,128]{1,0:T(1,128)}', space=vmem, size = 0x12000, scoped, tag = 'internal scratch']
  %s0 = inlined_call_operand.vmem [shape: bf16[32,32], index: 0, kind: input, shape index: {}]
  %s1 = inlined_call_operand.vmem [shape: f32[32,1], index: 1, kind: input, shape index: {}]
  %s2 = inlined_call_operand.vmem [shape: f32[32,1], index: 2, kind: input, shape index: {}]
  %s3 = inlined_call_operand.vmem [shape: f32[32,32], index: 3, kind: output, shape index: {}]
  %s4 = sld [smem:[#allocation0]]
  $region22: #{bbastar_forward.19} parent=0
    _
  %s6 = ssub.s32 1, %s4
  %s7 = scalar_select 0, %s6, %s4
  // Predicated region
  $region2: #{bbastar_forward.19} parent=0 // pred_check
    _
  $region3: #{bbastar_forward.19} parent=0 // pred_check_branch
    %9 = sbr.rel (0) target = $region5
  $region4: #{bbastar_forward.19} parent=0 // pred_region
    _
  $region5: #{bbastar_forward.19} parent=0 // pred_fallthru
    _
  // Predicated region
  $region6: #{bbastar_forward.19} parent=0 // pred_check
    _
  $region7: #{bbastar_forward.19} parent=0 // pred_check_branch
    %11 = sbr.rel (0) target = $region9
  $region8: #{bbastar_forward.19} parent=0 // pred_region
    _
  $region9: #{bbastar_forward.19} parent=0 // pred_fallthru
    _
  // Predicated region
  $region10: #{bbastar_forward.19} parent=0 // pred_check
    _
  $region11: #{bbastar_forward.19} parent=0 // pred_check_branch
    %13 = sbr.rel (0) target = $region13
  $region12: #{bbastar_forward.19} parent=0 // pred_region
    _
  $region13: #{bbastar_forward.19} parent=0 // pred_fallthru
    _
  %v14 = vld [vmem:[%s0] sm:$0xf]
  %v15 = vld [vmem:[%s0 + $0x4] sm:$0xf]
  %v16 = vld [vmem:[%s0 + $0x8] sm:$0xf]
  %v17 = vld [vmem:[%s0 + $0xc] sm:$0xf]
  %v18 = vunpack.c.l.bf16 %v14
  %v19 = vunpack.c.l.bf16 %v15
  %v20 = vunpack.c.l.bf16 %v16
  %v21 = vunpack.c.l.bf16 %v17
  %v22 = vld [vmem:[%s1] sm:$0xff]
  %v23 = vld [vmem:[%s1 + $0x8] sm:$0xff]
  %v24 = vld [vmem:[%s1 + $0x10] sm:$0xff]
  %v25 = vld [vmem:[%s1 + $0x18] sm:$0xff]
  %27 = vset.pattern.permute.xlu0 0
  %28 = vperm.xlu0 %27, %v22
  %v29 = vpop.permute.xlu0 %28
  %32 = vset.pattern.permute.xlu0 0
  %33 = vperm.xlu0 %32, %v23
  %v34 = vpop.permute.xlu0 %33
  %37 = vset.pattern.permute.xlu0 0
  %38 = vperm.xlu0 %37, %v24
  %v39 = vpop.permute.xlu0 %38
  %42 = vset.pattern.permute.xlu0 0
  %43 = vperm.xlu0 %42, %v25
  %v44 = vpop.permute.xlu0 %43
  %v46 = vmul.f32 %v18, %v29
  %v47 = vmul.f32 %v19, %v34
  %v48 = vmul.f32 %v20, %v39
  %v49 = vmul.f32 %v21, %v44
  %v50 = vld [vmem:[%s2] sm:$0xff]
  %v51 = vld [vmem:[%s2 + $0x8] sm:$0xff]
  %v52 = vld [vmem:[%s2 + $0x10] sm:$0xff]
  %v53 = vld [vmem:[%s2 + $0x18] sm:$0xff]
  %55 = vset.pattern.permute.xlu0 0
  %56 = vperm.xlu0 %55, %v50
  %v57 = vpop.permute.xlu0 %56
  %60 = vset.pattern.permute.xlu0 0
  %61 = vperm.xlu0 %60, %v51
  %v62 = vpop.permute.xlu0 %61
  %65 = vset.pattern.permute.xlu0 0
  %66 = vperm.xlu0 %65, %v52
  %v67 = vpop.permute.xlu0 %66
  %70 = vset.pattern.permute.xlu0 0
  %71 = vperm.xlu0 %70, %v53
  %v72 = vpop.permute.xlu0 %71
  %v74 = vadd.f32 %v46, %v57
  %v75 = vadd.f32 %v47, %v62
  %v76 = vadd.f32 %v48, %v67
  %v77 = vadd.f32 %v49, %v72
  %v78 = vmax.f32 %v74, 0.0
  %v79 = vmax.f32 %v75, 0.0
  %v80 = vmax.f32 %v76, 0.0
  %v81 = vmax.f32 %v77, 0.0
  %vm82 = vcmask 261120
  %83 = vst.msk [vmem:[%s3] sm:$0xff] %vm82, %v78
  %84 = vst.msk [vmem:[%s3 + $0x8] sm:$0xff] %vm82, %v79
  %85 = vst.msk [vmem:[%s3 + $0x10] sm:$0xff] %vm82, %v80
  %86 = vst.msk [vmem:[%s3 + $0x18] sm:$0xff] %vm82, %v81
  // Predicated region
  $region14: #{bbastar_forward.19} parent=0 // pred_check
    _
  $region15: #{bbastar_forward.19} parent=0 // pred_check_branch
    %88 = sbr.rel (0) target = $region17
  $region16: #{bbastar_forward.19} parent=0 // pred_region
    _
  $region17: #{bbastar_forward.19} parent=0 // pred_fallthru
    _
  // Predicated region
  $region18: #{bbastar_forward.19} parent=0 // pred_check
    _
  $region19: #{bbastar_forward.19} parent=0 // pred_check_branch
    %90 = sbr.rel (0) target = $region21
  $region20: #{bbastar_forward.19} parent=0 // pred_region
    _
  $region21: #{bbastar_forward.19} parent=0 // pred_fallthru
    _

// kernel: bbastar_forward.22
$region0: #{bbastar_forward.22}
  #allocation0 [shape = 'u32[]', space=smem, size = 0x4, offset = 0x4, fixed_abs, tag = 'smem constant byte address 0x4 - core index']
  #allocation1 [shape = 'u32[144,128]{1,0:T(1,128)}', space=vmem, size = 0x12000, scoped, tag = 'internal scratch']
  %s0 = inlined_call_operand.vmem [shape: bf16[16,432], index: 0, kind: input, shape index: {}]
  %s1 = inlined_call_operand.vmem [shape: bf16[432,128], index: 1, kind: input, shape index: {}]
  %s2 = inlined_call_operand.vmem [shape: bf16[16,128], index: 2, kind: output, shape index: {0}]
  %s3 = inlined_call_operand.vmem [shape: f32[1,16,1], index: 3, kind: output, shape index: {1}]
  %s4 = inlined_call_operand.vmem [shape: f32[1,16,1], index: 4, kind: output, shape index: {2}]
  %5 = xla_tuple %s2, %s3, %s4
  %s6 = sld [smem:[#allocation0]]
  $region34: #{bbastar_forward.22} parent=0
    _
  %s8 = ssub.s32 1, %s6
  %s9 = scalar_select 0, %s8, %s6
  // Predicated region
  $region2: #{bbastar_forward.22} parent=0 // pred_check
    _
  $region3: #{bbastar_forward.22} parent=0 // pred_check_branch
    %11 = sbr.rel (0) target = $region5
  $region4: #{bbastar_forward.22} parent=0 // pred_region
    _
  $region5: #{bbastar_forward.22} parent=0 // pred_fallthru
    _
  // Predicated region
  $region6: #{bbastar_forward.22} parent=0 // pred_check
    _
  $region7: #{bbastar_forward.22} parent=0 // pred_check_branch
    %13 = sbr.rel (0) target = $region9
  $region8: #{bbastar_forward.22} parent=0 // pred_region
    _
  $region9: #{bbastar_forward.22} parent=0 // pred_fallthru
    _
  %v15 = vld [vmem:[%s0] sm:$0xff]
  %v16 = vld [vmem:[%s0 + $0x8] sm:$0xff]
  %v17 = vld [vmem:[%s0 + $0x10] sm:$0xff]
  %v18 = vld [vmem:[%s0 + $0x18] sm:$0xff]
  %v19 = vld [vmem:[%s1] sm:$0xf]
  %v20 = vld [vmem:[%s1 + $0x4] sm:$0xf]
  %v21 = vld [vmem:[%s1 + $0x8] sm:$0xf]
  %v22 = vld [vmem:[%s1 + $0xc] sm:$0xf]
  %v23 = vld [vmem:[%s1 + $0x10] sm:$0xf]
  %v24 = vld [vmem:[%s1 + $0x14] sm:$0xf]
  %v25 = vld [vmem:[%s1 + $0x18] sm:$0xf]
  %v26 = vld [vmem:[%s1 + $0x1c] sm:$0xf]
  %v27 = vld [vmem:[%s1 + $0x20] sm:$0xf]
  %v28 = vld [vmem:[%s1 + $0x24] sm:$0xf]
  %v29 = vld [vmem:[%s1 + $0x28] sm:$0xf]
  %v30 = vld [vmem:[%s1 + $0x2c] sm:$0xf]
  %v31 = vld [vmem:[%s1 + $0x30] sm:$0xf]
  %v32 = vld [vmem:[%s1 + $0x34] sm:$0xf]
  %v33 = vld [vmem:[%s1 + $0x38] sm:$0xf]
  %v34 = vld [vmem:[%s1 + $0x3c] sm:$0xf]
  %v35 = vld [vmem:[%s1 + $0x40] sm:$0xf]
  %v36 = vld [vmem:[%s1 + $0x44] sm:$0xf]
  %v37 = vld [vmem:[%s1 + $0x48] sm:$0xf]
  %v38 = vld [vmem:[%s1 + $0x4c] sm:$0xf]
  %v39 = vld [vmem:[%s1 + $0x50] sm:$0xf]
  %v40 = vld [vmem:[%s1 + $0x54] sm:$0xf]
  %v41 = vld [vmem:[%s1 + $0x58] sm:$0xf]
  %v42 = vld [vmem:[%s1 + $0x5c] sm:$0xf]
  %v43 = vld [vmem:[%s1 + $0x60] sm:$0xf]
  %v44 = vld [vmem:[%s1 + $0x64] sm:$0xf]
  %v45 = vld [vmem:[%s1 + $0x68] sm:$0xf]
  %v46 = vld [vmem:[%s1 + $0x6c] sm:$0xf]
  %v47 = vld [vmem:[%s1 + $0x70] sm:$0xf]
  %v48 = vld [vmem:[%s1 + $0x74] sm:$0xf]
  %v49 = vld [vmem:[%s1 + $0x78] sm:$0xf]
  %v50 = vld [vmem:[%s1 + $0x7c] sm:$0xf]
  %v51 = vld [vmem:[%s1 + $0x80] sm:$0xf]
  %v52 = vld [vmem:[%s1 + $0x84] sm:$0xf]
  %v53 = vld [vmem:[%s1 + $0x88] sm:$0xf]
  %v54 = vld [vmem:[%s1 + $0x8c] sm:$0xf]
  %v55 = vld [vmem:[%s1 + $0x90] sm:$0xf]
  %v56 = vld [vmem:[%s1 + $0x94] sm:$0xf]
  %v57 = vld [vmem:[%s1 + $0x98] sm:$0xf]
  %v58 = vld [vmem:[%s1 + $0x9c] sm:$0xf]
  %v59 = vld [vmem:[%s1 + $0xa0] sm:$0xf]
  %v60 = vld [vmem:[%s1 + $0xa4] sm:$0xf]
  %v61 = vld [vmem:[%s1 + $0xa8] sm:$0xf]
  %v62 = vld [vmem:[%s1 + $0xac] sm:$0xf]
  %v63 = vld [vmem:[%s1 + $0xb0] sm:$0xf]
  %v64 = vld [vmem:[%s1 + $0xb4] sm:$0xf]
  %v65 = vld [vmem:[%s1 + $0xb8] sm:$0xf]
  %v66 = vld [vmem:[%s1 + $0xbc] sm:$0xf]
  %v67 = vld [vmem:[%s1 + $0xc0] sm:$0xf]
  %v68 = vld [vmem:[%s1 + $0xc4] sm:$0xf]
  %v69 = vld [vmem:[%s1 + $0xc8] sm:$0xf]
  %v70 = vld [vmem:[%s1 + $0xcc] sm:$0xf]
  %v71 = vld [vmem:[%s1 + $0xd0] sm:$0xf]
  %v72 = vld [vmem:[%s1 + $0xd4] sm:$0xf]
  %v77 = vunpack.c.l.b16 %v15
  %v78 = vunpack.c.h.b16 %v15
  %v79 = vunpack.c.l.b16 %v16
  %v80 = vunpack.c.h.b16 %v16
  %v81 = vunpack.c.l.b16 %v17
  %v82 = vunpack.c.h.b16 %v17
  %v83 = vunpack.c.l.b16 %v18
  %v84 = vunpack.c.h.b16 %v18
  %v85 = vpack.c.b16 %v81, %v77
  %v86 = vpack.c.b16 %v82, %v78
  %v87 = vpack.c.b16 %v83, %v79
  %v88 = vpack.c.b16 %v84, %v80
  %v146 = vunpack.c.l.b16 %v19
  %v147 = vunpack.c.l.b16 %v20
  %v148 = vunpack.c.l.b16 %v21
  %v149 = vunpack.c.l.b16 %v22
  %v150 = vunpack.c.l.b16 %v23
  %v151 = vunpack.c.l.b16 %v24
  %v152 = vunpack.c.l.b16 %v25
  %v153 = vunpack.c.l.b16 %v26
  %v154 = vunpack.c.l.b16 %v27
  %v155 = vunpack.c.l.b16 %v28
  %v156 = vunpack.c.l.b16 %v29
  %v157 = vunpack.c.l.b16 %v30
  %v158 = vunpack.c.l.b16 %v31
  %v159 = vunpack.c.l.b16 %v32
  %v160 = vunpack.c.l.b16 %v33
  %v161 = vunpack.c.l.b16 %v34
  %v162 = vunpack.c.l.b16 %v35
  %v163 = vunpack.c.l.b16 %v36
  %v164 = vunpack.c.l.b16 %v37
  %v165 = vunpack.c.l.b16 %v38
  %v166 = vunpack.c.l.b16 %v39
  %v167 = vunpack.c.l.b16 %v40
  %v168 = vunpack.c.l.b16 %v41
  %v169 = vunpack.c.l.b16 %v42
  %v170 = vunpack.c.l.b16 %v43
  %v171 = vunpack.c.l.b16 %v44
  %v172 = vunpack.c.l.b16 %v45
  %v173 = vunpack.c.l.b16 %v46
  %v174 = vunpack.c.l.b16 %v47
  %v175 = vunpack.c.l.b16 %v48
  %v176 = vunpack.c.l.b16 %v49
  %v177 = vunpack.c.l.b16 %v50
  %v178 = vunpack.c.l.b16 %v51
  %v179 = vunpack.c.l.b16 %v52
  %v180 = vunpack.c.l.b16 %v53
  %v181 = vunpack.c.l.b16 %v54
  %v182 = vunpack.c.l.b16 %v55
  %v183 = vunpack.c.l.b16 %v56
  %v184 = vunpack.c.l.b16 %v57
  %v185 = vunpack.c.l.b16 %v58
  %v186 = vunpack.c.l.b16 %v59
  %v187 = vunpack.c.l.b16 %v60
  %v188 = vunpack.c.l.b16 %v61
  %v189 = vunpack.c.l.b16 %v62
  %v190 = vunpack.c.l.b16 %v63
  %v191 = vunpack.c.l.b16 %v64
  %v192 = vunpack.c.l.b16 %v65
  %v193 = vunpack.c.l.b16 %v66
  %v194 = vunpack.c.l.b16 %v67
  %v195 = vunpack.c.l.b16 %v68
  %v196 = vunpack.c.l.b16 %v69
  %v197 = vunpack.c.l.b16 %v70
  %v198 = vunpack.c.l.b16 %v71
  %v199 = vunpack.c.l.b16 %v72
  %v200 = vpack.c.b16 %v147, %v146
  %v201 = vpack.c.b16 %v149, %v148
  %v202 = vpack.c.b16 %v151, %v150
  %v203 = vpack.c.b16 %v153, %v152
  %v204 = vpack.c.b16 %v155, %v154
  %v205 = vpack.c.b16 %v157, %v156
  %v206 = vpack.c.b16 %v159, %v158
  %v207 = vpack.c.b16 %v161, %v160
  %v208 = vpack.c.b16 %v163, %v162
  %v209 = vpack.c.b16 %v165, %v164
  %v210 = vpack.c.b16 %v167, %v166
  %v211 = vpack.c.b16 %v169, %v168
  %v212 = vpack.c.b16 %v171, %v170
  %v213 = vpack.c.b16 %v173, %v172
  %v214 = vpack.c.b16 %v175, %v174
  %v215 = vpack.c.b16 %v177, %v176
  %v216 = vpack.c.b16 %v179, %v178
  %v217 = vpack.c.b16 %v181, %v180
  %v218 = vpack.c.b16 %v183, %v182
  %v219 = vpack.c.b16 %v185, %v184
  %v220 = vpack.c.b16 %v187, %v186
  %v221 = vpack.c.b16 %v189, %v188
  %v222 = vpack.c.b16 %v191, %v190
  %v223 = vpack.c.b16 %v193, %v192
  %v224 = vpack.c.b16 %v195, %v194
  %v225 = vpack.c.b16 %v197, %v196
  %v226 = vpack.c.b16 %v199, %v198
  %vm254 = vcmask 392192
  %v256 = vsel %vm254, %v88, 0
  %258 = vmatprep.subr.bf16.mxu0 0
  %259 = vmatpush1.bf16.msra.mxu0 %v200
  %260 = vmatprep.subr.bf16.mxu0 0
  %261 = vmatpush1.bf16.msra.mxu0 %v201
  %262 = vmatprep.subr.bf16.mxu0 0
  %263 = vmatpush1.bf16.msra.mxu0 %v202
  %264 = vmatprep.subr.bf16.mxu0 0
  %265 = vmatpush1.bf16.msra.mxu0 %v203
  %266 = vmatprep.subr.bf16.mxu0 0
  %267 = vmatpush1.bf16.msra.mxu0 %v204
  %268 = vmatprep.subr.bf16.mxu0 0
  %269 = vmatpush1.bf16.msra.mxu0 %v205
  %270 = vmatprep.subr.bf16.mxu0 0
  %271 = vmatpush1.bf16.msra.mxu0 %v206
  %272 = vmatprep.subr.bf16.mxu0 0
  %273 = vmatpush1.bf16.msra.mxu0 %v207
  %274 = vmatprep.subr.bf16.mxu0 0
  %275 = vmatpush1.bf16.msra.mxu0 %v208
  %276 = vmatprep.subr.bf16.mxu0 0
  %277 = vmatpush1.bf16.msra.mxu0 %v209
  %278 = vmatprep.subr.bf16.mxu0 0
  %279 = vmatpush1.bf16.msra.mxu0 %v210
  %280 = vmatprep.subr.bf16.mxu0 0
  %281 = vmatpush1.bf16.msra.mxu0 %v211
  %282 = vmatprep.subr.bf16.mxu0 0
  %283 = vmatpush1.bf16.msra.mxu0 %v212
  %284 = vmatprep.subr.bf16.mxu0 0
  %285 = vmatpush1.bf16.msra.mxu0 %v213
  %286 = vmatprep.subr.bf16.mxu0 0
  %287 = vmatpush1.bf16.msra.mxu0 %v214
  %288 = vmatprep.subr.bf16.mxu0 0
  %289 = vmatpush1.bf16.msra.mxu0 %v215
  %290 = vmatprep.mubr.bf16.mxu0 %v86
  %291 = vmatmul.mubr.bf16.gmra.mrb[0].mxu0 %v85
  %v292 = vpop.f32.mrb[0].mxu0
  %v293 = vadd.f32 0.0, %v292
  %v294 = vpop.f32.mrb[0].mxu0
  %v295 = vpop.f32.mrb[0].mxu0
  %v296 = vadd.f32 0.0, %v295
  %v297 = vpop.f32.mrb[0].mxu0
  %298 = vdwg.mxu0
  %299 = vmatprep.subr.bf16.mxu0 0
  %300 = vmatpush1.bf16.msra.mxu0 %v216
  %301 = vmatprep.subr.bf16.mxu0 0
  %302 = vmatpush1.bf16.msra.mxu0 %v217
  %303 = vmatprep.subr.bf16.mxu0 0
  %304 = vmatpush1.bf16.msra.mxu0 %v218
  %305 = vmatprep.subr.bf16.mxu0 0
  %306 = vmatpush1.bf16.msra.mxu0 %v219
  %307 = vmatprep.subr.bf16.mxu0 0
  %308 = vmatpush1.bf16.msra.mxu0 %v220
  %309 = vmatprep.subr.bf16.mxu0 0
  %310 = vmatpush1.bf16.msra.mxu0 %v221
  %311 = vmatprep.subr.bf16.mxu0 0
  %312 = vmatpush1.bf16.msra.mxu0 %v222
  %313 = vmatprep.subr.bf16.mxu0 0
  %314 = vmatpush1.bf16.msra.mxu0 %v223
  %315 = vmatprep.subr.bf16.mxu0 0
  %316 = vmatpush1.bf16.msra.mxu0 %v224
  %317 = vmatprep.subr.bf16.mxu0 0
  %318 = vmatpush1.bf16.msra.mxu0 %v225
  %319 = vmatprep.subr.bf16.mxu0 0
  %320 = vmatpush1.bf16.msra.mxu0 %v226
  %321 = vmatprep.subr.bf16.mxu0 0
  %322 = vmatpush1.bf16.msra.mxu0 0
  %323 = vmatprep.subr.bf16.mxu0 0
  %324 = vmatpush1.bf16.msra.mxu0 0
  %325 = vmatprep.subr.bf16.mxu0 0
  %326 = vmatpush1.bf16.msra.mxu0 0
  %327 = vmatprep.subr.bf16.mxu0 0
  %328 = vmatpush1.bf16.msra.mxu0 0
  %329 = vmatprep.subr.bf16.mxu0 0
  %330 = vmatpush1.bf16.msra.mxu0 0
  %331 = vmatprep.mubr.bf16.mxu0 %v256
  %332 = vmatmul.mubr.bf16.gmra.mrb[0].mxu0 %v87
  %v333 = vpop.f32.mrb[0].mxu0
  %v334 = vadd.f32 %v293, %v333
  %v335 = vpop.f32.mrb[0].mxu0
  %v336 = vpop.f32.mrb[0].mxu0
  %v337 = vadd.f32 %v296, %v336
  %v338 = vpop.f32.mrb[0].mxu0
  %339 = vdwg.mxu0
  %v340 = vpack.c.bf16 %v337, %v334
  %v342 = vunpack.c.l.b16 %v340
  %v343 = vunpack.c.h.b16 %v340
  %v344 = vpack.c.b16 %v342, %v342
  %v345 = vpack.c.b16 %v343, %v343
  %348 = vst [vmem:[%s2] sm:$0xf] %v344
  %349 = vst [vmem:[%s2 + $0x4] sm:$0xf] %v345
  %350 = vadd.xlane.f32.xlu0 %v334
  %v351 = vpop.xlane.xlu0 %350
  %352 = vadd.xlane.f32.xlu0 %v337
  %v353 = vpop.xlane.xlu0 %352
  %vm354 = vcmask 7168
  %355 = vst.msk [vmem:[%s3] sm:$0xff] %vm354, %v351
  %356 = vst.msk [vmem:[%s3 + $0x8] sm:$0xff] %vm354, %v353
  %v357 = vmul.f32 %v334, %v334
  %v358 = vmul.f32 %v337, %v337
  %359 = vadd.xlane.f32.xlu0 %v357
  %v360 = vpop.xlane.xlu0 %359
  %361 = vadd.xlane.f32.xlu0 %v358
  %v362 = vpop.xlane.xlu0 %361
  %363 = vst.msk [vmem:[%s4] sm:$0xff] %vm354, %v360
  %364 = vst.msk [vmem:[%s4 + $0x8] sm:$0xff] %vm354, %v362
  // Predicated region
  $region10: #{bbastar_forward.22} parent=0 // pred_check
    _
  $region11: #{bbastar_forward.22} parent=0 // pred_check_branch
    %366 = sbr.rel (0) target = $region13
  $region12: #{bbastar_forward.22} parent=0 // pred_region
    _
  $region13: #{bbastar_forward.22} parent=0 // pred_fallthru
    _
  // Predicated region
  $region14: #{bbastar_forward.22} parent=0 // pred_check
    _
  $region15: #{bbastar_forward.22} parent=0 // pred_check_branch
    %368 = sbr.rel (0) target = $region17
  $region16: #{bbastar_forward.22} parent=0 // pred_region
    _
  $region17: #{bbastar_forward.22} parent=0 // pred_fallthru
    _
  // Predicated region
  $region18: #{bbastar_forward.22} parent=0 // pred_check
    _
  $region19: #{bbastar_forward.22} parent=0 // pred_check_branch
    %370 = sbr.rel (0) target = $region21
  $region20: #{bbastar_forward.22} parent=0 // pred_region
    _
  $region21: #{bbastar_forward.22} parent=0 // pred_fallthru
    _
  // Predicated region
  $region22: #{bbastar_forward.22} parent=0 // pred_check
    _
  $region23: #{bbastar_forward.22} parent=0 // pred_check_branch
    %372 = sbr.rel (0) target = $region25
  $region24: #{bbastar_forward.22} parent=0 // pred_region
    _
  $region25: #{bbastar_forward.22} parent=0 // pred_fallthru
    _
  // Predicated region
  $region26: #{bbastar_forward.22} parent=0 // pred_check
    _
  $region27: #{bbastar_forward.22} parent=0 // pred_check_branch
    %374 = sbr.rel (0) target = $region29
  $region28: #{bbastar_forward.22} parent=0 // pred_region
    _
  $region29: #{bbastar_forward.22} parent=0 // pred_fallthru
    _
  // Predicated region
  $region30: #{bbastar_forward.22} parent=0 // pred_check
    _
  $region31: #{bbastar_forward.22} parent=0 // pred_check_branch
    %376 = sbr.rel (0) target = $region33
  $region32: #{bbastar_forward.22} parent=0 // pred_region
    _
  $region33: #{bbastar_forward.22} parent=0 // pred_fallthru
    _

// kernel: bbastar_forward.24
$region0: #{bbastar_forward.24}
  #allocation0 [shape = 'u32[]', space=smem, size = 0x4, offset = 0x4, fixed_abs, tag = 'smem constant byte address 0x4 - core index']
  #allocation1 [shape = 'u32[144,128]{1,0:T(1,128)}', space=vmem, size = 0x12000, scoped, tag = 'internal scratch']
  %s0 = inlined_call_operand.vmem [shape: bf16[8,288], index: 0, kind: input, shape index: {}]
  %s1 = inlined_call_operand.vmem [shape: bf16[288,512], index: 1, kind: input, shape index: {}]
  %s2 = inlined_call_operand.vmem [shape: bf16[8,512], index: 2, kind: output, shape index: {0}]
  %s3 = inlined_call_operand.vmem [shape: f32[1,8,1], index: 3, kind: output, shape index: {1}]
  %s4 = inlined_call_operand.vmem [shape: f32[1,8,1], index: 4, kind: output, shape index: {2}]
  %5 = xla_tuple %s2, %s3, %s4
  %s6 = sld [smem:[#allocation0]]
  $region34: #{bbastar_forward.24} parent=0
    _
  %s8 = ssub.s32 1, %s6
  %s9 = scalar_select 0, %s8, %s6
  // Predicated region
  $region2: #{bbastar_forward.24} parent=0 // pred_check
    _
  $region3: #{bbastar_forward.24} parent=0 // pred_check_branch
    %11 = sbr.rel (0) target = $region5
  $region4: #{bbastar_forward.24} parent=0 // pred_region
    _
  $region5: #{bbastar_forward.24} parent=0 // pred_fallthru
    _
  // Predicated region
  $region6: #{bbastar_forward.24} parent=0 // pred_check
    _
  $region7: #{bbastar_forward.24} parent=0 // pred_check_branch
    %13 = sbr.rel (0) target = $region9
  $region8: #{bbastar_forward.24} parent=0 // pred_region
    _
  $region9: #{bbastar_forward.24} parent=0 // pred_fallthru
    _
  %v15 = vld [vmem:[%s0] sm:$0xff]
  %v16 = vld [vmem:[%s0 + $0x8] sm:$0xf]
  %v17 = vld [vmem:[%s1] sm:$0xff]
  %v18 = vld [vmem:[%s1 + $0x8] sm:$0xff]
  %v19 = vld [vmem:[%s1 + $0x10] sm:$0xff]
  %v20 = vld [vmem:[%s1 + $0x18] sm:$0xff]
  %v21 = vld [vmem:[%s1 + $0x20] sm:$0xff]
  %v22 = vld [vmem:[%s1 + $0x28] sm:$0xff]
  %v23 = vld [vmem:[%s1 + $0x30] sm:$0xff]
  %v24 = vld [vmem:[%s1 + $0x38] sm:$0xff]
  %v25 = vld [vmem:[%s1 + $0x40] sm:$0xff]
  %v26 = vld [vmem:[%s1 + $0x48] sm:$0xff]
  %v27 = vld [vmem:[%s1 + $0x50] sm:$0xff]
  %v28 = vld [vmem:[%s1 + $0x58] sm:$0xff]
  %v29 = vld [vmem:[%s1 + $0x60] sm:$0xff]
  %v30 = vld [vmem:[%s1 + $0x68] sm:$0xff]
  %v31 = vld [vmem:[%s1 + $0x70] sm:$0xff]
  %v32 = vld [vmem:[%s1 + $0x78] sm:$0xff]
  %v33 = vld [vmem:[%s1 + $0x80] sm:$0xff]
  %v34 = vld [vmem:[%s1 + $0x88] sm:$0xff]
  %v35 = vld [vmem:[%s1 + $0x90] sm:$0xff]
  %v36 = vld [vmem:[%s1 + $0x98] sm:$0xff]
  %v37 = vld [vmem:[%s1 + $0xa0] sm:$0xff]
  %v38 = vld [vmem:[%s1 + $0xa8] sm:$0xff]
  %v39 = vld [vmem:[%s1 + $0xb0] sm:$0xff]
  %v40 = vld [vmem:[%s1 + $0xb8] sm:$0xff]
  %v41 = vld [vmem:[%s1 + $0xc0] sm:$0xff]
  %v42 = vld [vmem:[%s1 + $0xc8] sm:$0xff]
  %v43 = vld [vmem:[%s1 + $0xd0] sm:$0xff]
  %v44 = vld [vmem:[%s1 + $0xd8] sm:$0xff]
  %v45 = vld [vmem:[%s1 + $0xe0] sm:$0xff]
  %v46 = vld [vmem:[%s1 + $0xe8] sm:$0xff]
  %v47 = vld [vmem:[%s1 + $0xf0] sm:$0xff]
  %v48 = vld [vmem:[%s1 + $0xf8] sm:$0xff]
  %v49 = vld [vmem:[%s1 + $0x100] sm:$0xff]
  %v50 = vld [vmem:[%s1 + $0x108] sm:$0xff]
  %v51 = vld [vmem:[%s1 + $0x110] sm:$0xff]
  %v52 = vld [vmem:[%s1 + $0x118] sm:$0xff]
  %v53 = vld [vmem:[%s1 + $0x120] sm:$0xff]
  %v54 = vld [vmem:[%s1 + $0x128] sm:$0xff]
  %v55 = vld [vmem:[%s1 + $0x130] sm:$0xff]
  %v56 = vld [vmem:[%s1 + $0x138] sm:$0xff]
  %v57 = vld [vmem:[%s1 + $0x140] sm:$0xff]
  %v58 = vld [vmem:[%s1 + $0x148] sm:$0xff]
  %v59 = vld [vmem:[%s1 + $0x150] sm:$0xff]
  %v60 = vld [vmem:[%s1 + $0x158] sm:$0xff]
  %v61 = vld [vmem:[%s1 + $0x160] sm:$0xff]
  %v62 = vld [vmem:[%s1 + $0x168] sm:$0xff]
  %v63 = vld [vmem:[%s1 + $0x170] sm:$0xff]
  %v64 = vld [vmem:[%s1 + $0x178] sm:$0xff]
  %v65 = vld [vmem:[%s1 + $0x180] sm:$0xff]
  %v66 = vld [vmem:[%s1 + $0x188] sm:$0xff]
  %v67 = vld [vmem:[%s1 + $0x190] sm:$0xff]
  %v68 = vld [vmem:[%s1 + $0x198] sm:$0xff]
  %v69 = vld [vmem:[%s1 + $0x1a0] sm:$0xff]
  %v70 = vld [vmem:[%s1 + $0x1a8] sm:$0xff]
  %v71 = vld [vmem:[%s1 + $0x1b0] sm:$0xff]
  %v72 = vld [vmem:[%s1 + $0x1b8] sm:$0xff]
  %v73 = vld [vmem:[%s1 + $0x1c0] sm:$0xff]
  %v74 = vld [vmem:[%s1 + $0x1c8] sm:$0xff]
  %v75 = vld [vmem:[%s1 + $0x1d0] sm:$0xff]
  %v76 = vld [vmem:[%s1 + $0x1d8] sm:$0xff]
  %v77 = vld [vmem:[%s1 + $0x1e0] sm:$0xff]
  %v78 = vld [vmem:[%s1 + $0x1e8] sm:$0xff]
  %v79 = vld [vmem:[%s1 + $0x1f0] sm:$0xff]
  %v80 = vld [vmem:[%s1 + $0x1f8] sm:$0xff]
  %v81 = vld [vmem:[%s1 + $0x200] sm:$0xff]
  %v82 = vld [vmem:[%s1 + $0x208] sm:$0xff]
  %v83 = vld [vmem:[%s1 + $0x210] sm:$0xff]
  %v84 = vld [vmem:[%s1 + $0x218] sm:$0xff]
  %v85 = vld [vmem:[%s1 + $0x220] sm:$0xff]
  %v86 = vld [vmem:[%s1 + $0x228] sm:$0xff]
  %v87 = vld [vmem:[%s1 + $0x230] sm:$0xff]
  %v88 = vld [vmem:[%s1 + $0x238] sm:$0xff]
  %v91 = vunpack.c.l.b16 %v15
  %v92 = vunpack.c.h.b16 %v15
  %v93 = vunpack.c.l.b16 %v16
  %v94 = vpack.c.b16 %v91, %v91
  %v95 = vpack.c.b16 %v92, %v92
  %v96 = vpack.c.b16 %v93, %v93
  %v171 = vunpack.c.l.b16 %v17
  %v172 = vunpack.c.h.b16 %v17
  %v173 = vunpack.c.l.b16 %v18
  %v174 = vunpack.c.h.b16 %v18
  %v175 = vunpack.c.l.b16 %v19
  %v176 = vunpack.c.h.b16 %v19
  %v177 = vunpack.c.l.b16 %v20
  %v178 = vunpack.c.h.b16 %v20
  %v179 = vunpack.c.l.b16 %v21
  %v180 = vunpack.c.h.b16 %v21
  %v181 = vunpack.c.l.b16 %v22
  %v182 = vunpack.c.h.b16 %v22
  %v183 = vunpack.c.l.b16 %v23
  %v184 = vunpack.c.h.b16 %v23
  %v185 = vunpack.c.l.b16 %v24
  %v186 = vunpack.c.h.b16 %v24
  %v187 = vunpack.c.l.b16 %v25
  %v188 = vunpack.c.h.b16 %v25
  %v189 = vunpack.c.l.b16 %v26
  %v190 = vunpack.c.h.b16 %v26
  %v191 = vunpack.c.l.b16 %v27
  %v192 = vunpack.c.h.b16 %v27
  %v193 = vunpack.c.l.b16 %v28
  %v194 = vunpack.c.h.b16 %v28
  %v195 = vunpack.c.l.b16 %v29
  %v196 = vunpack.c.h.b16 %v29
  %v197 = vunpack.c.l.b16 %v30
  %v198 = vunpack.c.h.b16 %v30
  %v199 = vunpack.c.l.b16 %v31
  %v200 = vunpack.c.h.b16 %v31
  %v201 = vunpack.c.l.b16 %v32
  %v202 = vunpack.c.h.b16 %v32
  %v203 = vunpack.c.l.b16 %v33
  %v204 = vunpack.c.h.b16 %v33
  %v205 = vunpack.c.l.b16 %v34
  %v206 = vunpack.c.h.b16 %v34
  %v207 = vunpack.c.l.b16 %v35
  %v208 = vunpack.c.h.b16 %v35
  %v209 = vunpack.c.l.b16 %v36
  %v210 = vunpack.c.h.b16 %v36
  %v211 = vunpack.c.l.b16 %v37
  %v212 = vunpack.c.h.b16 %v37
  %v213 = vunpack.c.l.b16 %v38
  %v214 = vunpack.c.h.b16 %v38
  %v215 = vunpack.c.l.b16 %v39
  %v216 = vunpack.c.h.b16 %v39
  %v217 = vunpack.c.l.b16 %v40
  %v218 = vunpack.c.h.b16 %v40
  %v219 = vunpack.c.l.b16 %v41
  %v220 = vunpack.c.h.b16 %v41
  %v221 = vunpack.c.l.b16 %v42
  %v222 = vunpack.c.h.b16 %v42
  %v223 = vunpack.c.l.b16 %v43
  %v224 = vunpack.c.h.b16 %v43
  %v225 = vunpack.c.l.b16 %v44
  %v226 = vunpack.c.h.b16 %v44
  %v227 = vunpack.c.l.b16 %v45
  %v228 = vunpack.c.h.b16 %v45
  %v229 = vunpack.c.l.b16 %v46
  %v230 = vunpack.c.h.b16 %v46
  %v231 = vunpack.c.l.b16 %v47
  %v232 = vunpack.c.h.b16 %v47
  %v233 = vunpack.c.l.b16 %v48
  %v234 = vunpack.c.h.b16 %v48
  %v235 = vunpack.c.l.b16 %v49
  %v236 = vunpack.c.h.b16 %v49
  %v237 = vunpack.c.l.b16 %v50
  %v238 = vunpack.c.h.b16 %v50
  %v239 = vunpack.c.l.b16 %v51
  %v240 = vunpack.c.h.b16 %v51
  %v241 = vunpack.c.l.b16 %v52
  %v242 = vunpack.c.h.b16 %v52
  %v243 = vunpack.c.l.b16 %v53
  %v244 = vunpack.c.h.b16 %v53
  %v245 = vunpack.c.l.b16 %v54
  %v246 = vunpack.c.h.b16 %v54
  %v247 = vunpack.c.l.b16 %v55
  %v248 = vunpack.c.h.b16 %v55
  %v249 = vunpack.c.l.b16 %v56
  %v250 = vunpack.c.h.b16 %v56
  %v251 = vunpack.c.l.b16 %v57
  %v252 = vunpack.c.h.b16 %v57
  %v253 = vunpack.c.l.b16 %v58
  %v254 = vunpack.c.h.b16 %v58
  %v255 = vunpack.c.l.b16 %v59
  %v256 = vunpack.c.h.b16 %v59
  %v257 = vunpack.c.l.b16 %v60
  %v258 = vunpack.c.h.b16 %v60
  %v259 = vunpack.c.l.b16 %v61
  %v260 = vunpack.c.h.b16 %v61
  %v261 = vunpack.c.l.b16 %v62
  %v262 = vunpack.c.h.b16 %v62
  %v263 = vunpack.c.l.b16 %v63
  %v264 = vunpack.c.h.b16 %v63
  %v265 = vunpack.c.l.b16 %v64
  %v266 = vunpack.c.h.b16 %v64
  %v267 = vunpack.c.l.b16 %v65
  %v268 = vunpack.c.h.b16 %v65
  %v269 = vunpack.c.l.b16 %v66
  %v270 = vunpack.c.h.b16 %v66
  %v271 = vunpack.c.l.b16 %v67
  %v272 = vunpack.c.h.b16 %v67
  %v273 = vunpack.c.l.b16 %v68
  %v274 = vunpack.c.h.b16 %v68
  %v275 = vunpack.c.l.b16 %v69
  %v276 = vunpack.c.h.b16 %v69
  %v277 = vunpack.c.l.b16 %v70
  %v278 = vunpack.c.h.b16 %v70
  %v279 = vunpack.c.l.b16 %v71
  %v280 = vunpack.c.h.b16 %v71
  %v281 = vunpack.c.l.b16 %v72
  %v282 = vunpack.c.h.b16 %v72
  %v283 = vunpack.c.l.b16 %v73
  %v284 = vunpack.c.h.b16 %v73
  %v285 = vunpack.c.l.b16 %v74
  %v286 = vunpack.c.h.b16 %v74
  %v287 = vunpack.c.l.b16 %v75
  %v288 = vunpack.c.h.b16 %v75
  %v289 = vunpack.c.l.b16 %v76
  %v290 = vunpack.c.h.b16 %v76
  %v291 = vunpack.c.l.b16 %v77
  %v292 = vunpack.c.h.b16 %v77
  %v293 = vunpack.c.l.b16 %v78
  %v294 = vunpack.c.h.b16 %v78
  %v295 = vunpack.c.l.b16 %v79
  %v296 = vunpack.c.h.b16 %v79
  %v297 = vunpack.c.l.b16 %v80
  %v298 = vunpack.c.h.b16 %v80
  %v299 = vunpack.c.l.b16 %v81
  %v300 = vunpack.c.h.b16 %v81
  %v301 = vunpack.c.l.b16 %v82
  %v302 = vunpack.c.h.b16 %v82
  %v303 = vunpack.c.l.b16 %v83
  %v304 = vunpack.c.h.b16 %v83
  %v305 = vunpack.c.l.b16 %v84
  %v306 = vunpack.c.h.b16 %v84
  %v307 = vunpack.c.l.b16 %v85
  %v308 = vunpack.c.h.b16 %v85
  %v309 = vunpack.c.l.b16 %v86
  %v310 = vunpack.c.h.b16 %v86
  %v311 = vunpack.c.l.b16 %v87
  %v312 = vunpack.c.h.b16 %v87
  %v313 = vunpack.c.l.b16 %v88
  %v314 = vunpack.c.h.b16 %v88
  %v315 = vpack.c.b16 %v175, %v171
  %v316 = vpack.c.b16 %v176, %v172
  %v317 = vpack.c.b16 %v177, %v173
  %v318 = vpack.c.b16 %v178, %v174
  %v319 = vpack.c.b16 %v183, %v179
  %v320 = vpack.c.b16 %v184, %v180
  %v321 = vpack.c.b16 %v185, %v181
  %v322 = vpack.c.b16 %v186, %v182
  %v323 = vpack.c.b16 %v191, %v187
  %v324 = vpack.c.b16 %v192, %v188
  %v325 = vpack.c.b16 %v193, %v189
  %v326 = vpack.c.b16 %v194, %v190
  %v327 = vpack.c.b16 %v199, %v195
  %v328 = vpack.c.b16 %v200, %v196
  %v329 = vpack.c.b16 %v201, %v197
  %v330 = vpack.c.b16 %v202, %v198
  %v331 = vpack.c.b16 %v207, %v203
  %v332 = vpack.c.b16 %v208, %v204
  %v333 = vpack.c.b16 %v209, %v205
  %v334 = vpack.c.b16 %v210, %v206
  %v335 = vpack.c.b16 %v215, %v211
  %v336 = vpack.c.b16 %v216, %v212
  %v337 = vpack.c.b16 %v217, %v213
  %v338 = vpack.c.b16 %v218, %v214
  %v339 = vpack.c.b16 %v223, %v219
  %v340 = vpack.c.b16 %v224, %v220
  %v341 = vpack.c.b16 %v225, %v221
  %v342 = vpack.c.b16 %v226, %v222
  %v343 = vpack.c.b16 %v231, %v227
  %v344 = vpack.c.b16 %v232, %v228
  %v345 = vpack.c.b16 %v233, %v229
  %v346 = vpack.c.b16 %v234, %v230
  %v347 = vpack.c.b16 %v239, %v235
  %v348 = vpack.c.b16 %v240, %v236
  %v349 = vpack.c.b16 %v241, %v237
  %v350 = vpack.c.b16 %v242, %v238
  %v351 = vpack.c.b16 %v247, %v243
  %v352 = vpack.c.b16 %v248, %v244
  %v353 = vpack.c.b16 %v249, %v245
  %v354 = vpack.c.b16 %v250, %v246
  %v355 = vpack.c.b16 %v255, %v251
  %v356 = vpack.c.b16 %v256, %v252
  %v357 = vpack.c.b16 %v257, %v253
  %v358 = vpack.c.b16 %v258, %v254
  %v359 = vpack.c.b16 %v263, %v259
  %v360 = vpack.c.b16 %v264, %v260
  %v361 = vpack.c.b16 %v265, %v261
  %v362 = vpack.c.b16 %v266, %v262
  %v363 = vpack.c.b16 %v271, %v267
  %v364 = vpack.c.b16 %v272, %v268
  %v365 = vpack.c.b16 %v273, %v269
  %v366 = vpack.c.b16 %v274, %v270
  %v367 = vpack.c.b16 %v279, %v275
  %v368 = vpack.c.b16 %v280, %v276
  %v369 = vpack.c.b16 %v281, %v277
  %v370 = vpack.c.b16 %v282, %v278
  %v371 = vpack.c.b16 %v287, %v283
  %v372 = vpack.c.b16 %v288, %v284
  %v373 = vpack.c.b16 %v289, %v285
  %v374 = vpack.c.b16 %v290, %v286
  %v375 = vpack.c.b16 %v295, %v291
  %v376 = vpack.c.b16 %v296, %v292
  %v377 = vpack.c.b16 %v297, %v293
  %v378 = vpack.c.b16 %v298, %v294
  %v379 = vpack.c.b16 %v303, %v299
  %v380 = vpack.c.b16 %v304, %v300
  %v381 = vpack.c.b16 %v305, %v301
  %v382 = vpack.c.b16 %v306, %v302
  %v383 = vpack.c.b16 %v311, %v307
  %v384 = vpack.c.b16 %v312, %v308
  %v385 = vpack.c.b16 %v313, %v309
  %v386 = vpack.c.b16 %v314, %v310
  %vm459 = vcmask 261120
  %v461 = vsel %vm459, %v96, 0
  %463 = vmatprep.subr.bf16.mxu0 %v316
  %464 = vmatpush1.bf16.msra.mxu0 %v315
  %465 = vmatprep.subr.bf16.mxu0 %v320
  %466 = vmatpush1.bf16.msra.mxu0 %v319
  %467 = vmatprep.subr.bf16.mxu0 %v324
  %468 = vmatpush1.bf16.msra.mxu0 %v323
  %469 = vmatprep.subr.bf16.mxu0 %v328
  %470 = vmatpush1.bf16.msra.mxu0 %v327
  %471 = vmatprep.subr.bf16.mxu0 %v332
  %472 = vmatpush1.bf16.msra.mxu0 %v331
  %473 = vmatprep.subr.bf16.mxu0 %v336
  %474 = vmatpush1.bf16.msra.mxu0 %v335
  %475 = vmatprep.subr.bf16.mxu0 %v340
  %476 = vmatpush1.bf16.msra.mxu0 %v339
  %477 = vmatprep.subr.bf16.mxu0 %v344
  %478 = vmatpush1.bf16.msra.mxu0 %v343
  %479 = vmatprep.subr.bf16.mxu0 %v348
  %480 = vmatpush1.bf16.msra.mxu0 %v347
  %481 = vmatprep.subr.bf16.mxu0 %v352
  %482 = vmatpush1.bf16.msra.mxu0 %v351
  %483 = vmatprep.subr.bf16.mxu0 %v356
  %484 = vmatpush1.bf16.msra.mxu0 %v355
  %485 = vmatprep.subr.bf16.mxu0 %v360
  %486 = vmatpush1.bf16.msra.mxu0 %v359
  %487 = vmatprep.subr.bf16.mxu0 %v364
  %488 = vmatpush1.bf16.msra.mxu0 %v363
  %489 = vmatprep.subr.bf16.mxu0 %v368
  %490 = vmatpush1.bf16.msra.mxu0 %v367
  %491 = vmatprep.subr.bf16.mxu0 %v372
  %492 = vmatpush1.bf16.msra.mxu0 %v371
  %493 = vmatprep.subr.bf16.mxu0 %v376
  %494 = vmatpush1.bf16.msra.mxu0 %v375
  %495 = vmatprep.mubr.bf16.mxu0 %v95
  %496 = vmatmul.mubr.bf16.gmra.mrb[0].mxu0 %v94
  %v497 = vpop.f32.mrb[0].mxu0
  %v498 = vadd.f32 0.0, %v497
  %v499 = vpop.f32.mrb[0].mxu0
  %v500 = vadd.f32 0.0, %v499
  %v501 = vpop.f32.mrb[0].mxu0
  %v502 = vpop.f32.mrb[0].mxu0
  %503 = vdwg.mxu0
  %504 = vmatprep.subr.bf16.mxu0 %v380
  %505 = vmatpush1.bf16.msra.mxu0 %v379
  %506 = vmatprep.subr.bf16.mxu0 %v384
  %507 = vmatpush1.bf16.msra.mxu0 %v383
  %508 = vmatprep.subr.bf16.mxu0 0
  %509 = vmatpush1.bf16.msra.mxu0 0
  %510 = vmatprep.subr.bf16.mxu0 0
  %511 = vmatpush1.bf16.msra.mxu0 0
  %512 = vmatprep.subr.bf16.mxu0 0
  %513 = vmatpush1.bf16.msra.mxu0 0
  %514 = vmatprep.subr.bf16.mxu0 0
  %515 = vmatpush1.bf16.msra.mxu0 0
  %516 = vmatprep.subr.bf16.mxu0 0
  %517 = vmatpush1.bf16.msra.mxu0 0
  %518 = vmatprep.subr.bf16.mxu0 0
  %519 = vmatpush1.bf16.msra.mxu0 0
  %520 = vmatprep.subr.bf16.mxu0 0
  %521 = vmatpush1.bf16.msra.mxu0 0
  %522 = vmatprep.subr.bf16.mxu0 0
  %523 = vmatpush1.bf16.msra.mxu0 0
  %524 = vmatprep.subr.bf16.mxu0 0
  %525 = vmatpush1.bf16.msra.mxu0 0
  %526 = vmatprep.subr.bf16.mxu0 0
  %527 = vmatpush1.bf16.msra.mxu0 0
  %528 = vmatprep.subr.bf16.mxu0 0
  %529 = vmatpush1.bf16.msra.mxu0 0
  %530 = vmatprep.subr.bf16.mxu0 0
  %531 = vmatpush1.bf16.msra.mxu0 0
  %532 = vmatprep.subr.bf16.mxu0 0
  %533 = vmatpush1.bf16.msra.mxu0 0
  %534 = vmatprep.subr.bf16.mxu0 0
  %535 = vmatpush1.bf16.msra.mxu0 0
  %536 = vmatprep.mubr.bf16.mxu0 0
  %537 = vmatmul.mubr.bf16.gmra.mrb[0].mxu0 %v461
  %v538 = vpop.f32.mrb[0].mxu0
  %v539 = vadd.f32 %v498, %v538
  %v540 = vpop.f32.mrb[0].mxu0
  %v541 = vadd.f32 %v500, %v540
  %v542 = vpop.f32.mrb[0].mxu0
  %v543 = vpop.f32.mrb[0].mxu0
  %544 = vdwg.mxu0
  %545 = vmatprep.subr.bf16.mxu0 %v318
  %546 = vmatpush1.bf16.msra.mxu0 %v317
  %547 = vmatprep.subr.bf16.mxu0 %v322
  %548 = vmatpush1.bf16.msra.mxu0 %v321
  %549 = vmatprep.subr.bf16.mxu0 %v326
  %550 = vmatpush1.bf16.msra.mxu0 %v325
  %551 = vmatprep.subr.bf16.mxu0 %v330
  %552 = vmatpush1.bf16.msra.mxu0 %v329
  %553 = vmatprep.subr.bf16.mxu0 %v334
  %554 = vmatpush1.bf16.msra.mxu0 %v333
  %555 = vmatprep.subr.bf16.mxu0 %v338
  %556 = vmatpush1.bf16.msra.mxu0 %v337
  %557 = vmatprep.subr.bf16.mxu0 %v342
  %558 = vmatpush1.bf16.msra.mxu0 %v341
  %559 = vmatprep.subr.bf16.mxu0 %v346
  %560 = vmatpush1.bf16.msra.mxu0 %v345
  %561 = vmatprep.subr.bf16.mxu0 %v350
  %562 = vmatpush1.bf16.msra.mxu0 %v349
  %563 = vmatprep.subr.bf16.mxu0 %v354
  %564 = vmatpush1.bf16.msra.mxu0 %v353
  %565 = vmatprep.subr.bf16.mxu0 %v358
  %566 = vmatpush1.bf16.msra.mxu0 %v357
  %567 = vmatprep.subr.bf16.mxu0 %v362
  %568 = vmatpush1.bf16.msra.mxu0 %v361
  %569 = vmatprep.subr.bf16.mxu0 %v366
  %570 = vmatpush1.bf16.msra.mxu0 %v365
  %571 = vmatprep.subr.bf16.mxu0 %v370
  %572 = vmatpush1.bf16.msra.mxu0 %v369
  %573 = vmatprep.subr.bf16.mxu0 %v374
  %574 = vmatpush1.bf16.msra.mxu0 %v373
  %575 = vmatprep.subr.bf16.mxu0 %v378
  %576 = vmatpush1.bf16.msra.mxu0 %v377
  %577 = vmatprep.mubr.bf16.mxu0 %v95
  %578 = vmatmul.mubr.bf16.gmra.mrb[0].mxu0 %v94
  %v579 = vpop.f32.mrb[0].mxu0
  %v580 = vadd.f32 0.0, %v579
  %v581 = vpop.f32.mrb[0].mxu0
  %v582 = vadd.f32 0.0, %v581
  %v583 = vpop.f32.mrb[0].mxu0
  %v584 = vpop.f32.mrb[0].mxu0
  %585 = vdwg.mxu0
  %586 = vmatprep.subr.bf16.mxu0 %v382
  %587 = vmatpush1.bf16.msra.mxu0 %v381
  %588 = vmatprep.subr.bf16.mxu0 %v386
  %589 = vmatpush1.bf16.msra.mxu0 %v385
  %590 = vmatprep.subr.bf16.mxu0 0
  %591 = vmatpush1.bf16.msra.mxu0 0
  %592 = vmatprep.subr.bf16.mxu0 0
  %593 = vmatpush1.bf16.msra.mxu0 0
  %594 = vmatprep.subr.bf16.mxu0 0
  %595 = vmatpush1.bf16.msra.mxu0 0
  %596 = vmatprep.subr.bf16.mxu0 0
  %597 = vmatpush1.bf16.msra.mxu0 0
  %598 = vmatprep.subr.bf16.mxu0 0
  %599 = vmatpush1.bf16.msra.mxu0 0
  %600 = vmatprep.subr.bf16.mxu0 0
  %601 = vmatpush1.bf16.msra.mxu0 0
  %602 = vmatprep.subr.bf16.mxu0 0
  %603 = vmatpush1.bf16.msra.mxu0 0
  %604 = vmatprep.subr.bf16.mxu0 0
  %605 = vmatpush1.bf16.msra.mxu0 0
  %606 = vmatprep.subr.bf16.mxu0 0
  %607 = vmatpush1.bf16.msra.mxu0 0
  %608 = vmatprep.subr.bf16.mxu0 0
  %609 = vmatpush1.bf16.msra.mxu0 0
  %610 = vmatprep.subr.bf16.mxu0 0
  %611 = vmatpush1.bf16.msra.mxu0 0
  %612 = vmatprep.subr.bf16.mxu0 0
  %613 = vmatpush1.bf16.msra.mxu0 0
  %614 = vmatprep.subr.bf16.mxu0 0
  %615 = vmatpush1.bf16.msra.mxu0 0
  %616 = vmatprep.subr.bf16.mxu0 0
  %617 = vmatpush1.bf16.msra.mxu0 0
  %618 = vmatprep.mubr.bf16.mxu0 0
  %619 = vmatmul.mubr.bf16.gmra.mrb[0].mxu0 %v461
  %v620 = vpop.f32.mrb[0].mxu0
  %v621 = vadd.f32 %v580, %v620
  %v622 = vpop.f32.mrb[0].mxu0
  %v623 = vadd.f32 %v582, %v622
  %v624 = vpop.f32.mrb[0].mxu0
  %v625 = vpop.f32.mrb[0].mxu0
  %626 = vdwg.mxu0
  %v627 = vpack.c.bf16 %v539, %v539
  %v628 = vpack.c.bf16 %v541, %v541
  %v629 = vpack.c.bf16 %v621, %v621
  %v630 = vpack.c.bf16 %v623, %v623
  %v635 = vunpack.c.l.b16 %v627
  %v636 = vunpack.c.l.b16 %v628
  %v637 = vunpack.c.l.b16 %v629
  %v638 = vunpack.c.l.b16 %v630
  %v639 = vpack.c.b16 %v636, %v635
  %v640 = vpack.c.b16 %v638, %v637
  %643 = vst [vmem:[%s2] sm:$0xff] %v639
  %644 = vst [vmem:[%s2 + $0x8] sm:$0xff] %v640
  %v645 = vadd.f32 %v539, %v541
  %v646 = vadd.f32 %v645, %v621
  %v647 = vadd.f32 %v646, %v623
  %648 = vadd.xlane.f32.xlu0 %v647
  %v649 = vpop.xlane.xlu0 %648
  %vm650 = vcmask 7168
  %651 = vst.msk [vmem:[%s3] sm:$0xff] %vm650, %v649
  %v652 = vmul.f32 %v539, %v539
  %v653 = vmul.f32 %v541, %v541
  %v654 = vmul.f32 %v621, %v621
  %v655 = vmul.f32 %v623, %v623
  %v656 = vadd.f32 %v652, %v653
  %v657 = vadd.f32 %v656, %v654
  %v658 = vadd.f32 %v657, %v655
  %659 = vadd.xlane.f32.xlu0 %v658
  %v660 = vpop.xlane.xlu0 %659
  %661 = vst.msk [vmem:[%s4] sm:$0xff] %vm650, %v660
  // Predicated region
  $region10: #{bbastar_forward.24} parent=0 // pred_check
    _
  $region11: #{bbastar_forward.24} parent=0 // pred_check_branch
    %663 = sbr.rel (0) target = $region13
  $region12: #{bbastar_forward.24} parent=0 // pred_region
    _
  $region13: #{bbastar_forward.24} parent=0 // pred_fallthru
    _
  // Predicated region
  $region14: #{bbastar_forward.24} parent=0 // pred_check
    _
  $region15: #{bbastar_forward.24} parent=0 // pred_check_branch
    %665 = sbr.rel (0) target = $region17
  $region16: #{bbastar_forward.24} parent=0 // pred_region
    _
  $region17: #{bbastar_forward.24} parent=0 // pred_fallthru
    _
  // Predicated region
  $region18: #{bbastar_forward.24} parent=0 // pred_check
    _
  $region19: #{bbastar_forward.24} parent=0 // pred_check_branch
    %667 = sbr.rel (0) target = $region21
  $region20: #{bbastar_forward.24} parent=0 // pred_region
    _
  $region21: #{bbastar_forward.24} parent=0 // pred_fallthru
    _
  // Predicated region
  $region22: #{bbastar_forward.24} parent=0 // pred_check
    _
  $region23: #{bbastar_forward.24} parent=0 // pred_check_branch
    %669 = sbr.rel (0) target = $region25
  $region24: #{bbastar_forward.24} parent=0 // pred_region
    _
  $region25: #{bbastar_forward.24} parent=0 // pred_fallthru
    _
  // Predicated region
  $region26: #{bbastar_forward.24} parent=0 // pred_check
    _
  $region27: #{bbastar_forward.24} parent=0 // pred_check_branch
    %671 = sbr.rel (0) target = $region29
  $region28: #{bbastar_forward.24} parent=0 // pred_region
    _
  $region29: #{bbastar_forward.24} parent=0 // pred_fallthru
    _
  // Predicated region
  $region30: #{bbastar_forward.24} parent=0 // pred_check
    _
  $region31: #{bbastar_forward.24} parent=0 // pred_check_branch
    %673 = sbr.rel (0) target = $region33
  $region32: #{bbastar_forward.24} parent=0 // pred_region
    _
  $region33: #{bbastar_forward.24} parent=0 // pred_fallthru
    _

// kernel: bbastar_forward.26
$region0: #{bbastar_forward.26}
  #allocation0 [shape = 'u32[]', space=smem, size = 0x4, offset = 0x4, fixed_abs, tag = 'smem constant byte address 0x4 - core index']
  #allocation1 [shape = 'u32[144,128]{1,0:T(1,128)}', space=vmem, size = 0x12000, scoped, tag = 'internal scratch']
  #allocation2 [shape = 'f32[1,1]{1,0:T(1,128)S(1)}', space=vmem, size = 0x200, scoped, tag = 'scoped memory for bbastar_forward.26']
  #allocation3 [shape = 'f32[1,1]{1,0:T(1,128)S(1)}', space=vmem, size = 0x200, scoped, tag = 'scoped memory for bbastar_forward.26']
  %s0 = inlined_call_operand.vmem [shape: bf16[1,72], index: 0, kind: input, shape index: {}]
  %s1 = inlined_call_operand.vmem [shape: bf16[72,512], index: 1, kind: input, shape index: {}]
  %s2 = inlined_call_operand.<no memory space> [shape: f32[1,1], index: 2, kind: input, shape index: {}]
  %s3 = inlined_call_operand.<no memory space> [shape: f32[1,1], index: 3, kind: input, shape index: {}]
  %s4 = inlined_call_operand.vmem [shape: f32[1,512], index: 4, kind: output, shape index: {}]
  %s5 = sld [smem:[#allocation0]]
  $region26: #{bbastar_forward.26} parent=0
    _
  %s7 = ssub.s32 1, %s5
  %s8 = scalar_select 0, %s7, %s5
  %v9 = vstv %s2
  %10 = vst [vmem:[#allocation2] sm:$0x1] %v9
  %v11 = vstv %s3
  %12 = vst [vmem:[#allocation3] sm:$0x1] %v11
  // Predicated region
  $region2: #{bbastar_forward.26} parent=0 // pred_check
    _
  $region3: #{bbastar_forward.26} parent=0 // pred_check_branch
    %14 = sbr.rel (0) target = $region5
  $region4: #{bbastar_forward.26} parent=0 // pred_region
    _
  $region5: #{bbastar_forward.26} parent=0 // pred_fallthru
    _
  // Predicated region
  $region6: #{bbastar_forward.26} parent=0 // pred_check
    _
  $region7: #{bbastar_forward.26} parent=0 // pred_check_branch
    %16 = sbr.rel (0) target = $region9
  $region8: #{bbastar_forward.26} parent=0 // pred_region
    _
  $region9: #{bbastar_forward.26} parent=0 // pred_fallthru
    _
  // Predicated region
  $region10: #{bbastar_forward.26} parent=0 // pred_check
    _
  $region11: #{bbastar_forward.26} parent=0 // pred_check_branch
    %18 = sbr.rel (0) target = $region13
  $region12: #{bbastar_forward.26} parent=0 // pred_region
    _
  $region13: #{bbastar_forward.26} parent=0 // pred_fallthru
    _
  // Predicated region
  $region14: #{bbastar_forward.26} parent=0 // pred_check
    _
  $region15: #{bbastar_forward.26} parent=0 // pred_check_branch
    %20 = sbr.rel (0) target = $region17
  $region16: #{bbastar_forward.26} parent=0 // pred_region
    _
  $region17: #{bbastar_forward.26} parent=0 // pred_fallthru
    _
  %v22 = vld [vmem:[%s0] sm:$0x1]
  %v23 = vld [vmem:[%s1] sm:$0xff]
  %v24 = vld [vmem:[%s1 + $0x8] sm:$0xff]
  %v25 = vld [vmem:[%s1 + $0x10] sm:$0xff]
  %v26 = vld [vmem:[%s1 + $0x18] sm:$0xff]
  %v27 = vld [vmem:[%s1 + $0x20] sm:$0xff]
  %v28 = vld [vmem:[%s1 + $0x28] sm:$0xff]
  %v29 = vld [vmem:[%s1 + $0x30] sm:$0xff]
  %v30 = vld [vmem:[%s1 + $0x38] sm:$0xff]
  %v31 = vld [vmem:[%s1 + $0x40] sm:$0xff]
  %v32 = vld [vmem:[%s1 + $0x48] sm:$0xff]
  %v33 = vld [vmem:[%s1 + $0x50] sm:$0xff]
  %v34 = vld [vmem:[%s1 + $0x58] sm:$0xff]
  %v35 = vld [vmem:[%s1 + $0x60] sm:$0xff]
  %v36 = vld [vmem:[%s1 + $0x68] sm:$0xff]
  %v37 = vld [vmem:[%s1 + $0x70] sm:$0xff]
  %v38 = vld [vmem:[%s1 + $0x78] sm:$0xff]
  %v39 = vld [vmem:[%s1 + $0x80] sm:$0xff]
  %v40 = vld [vmem:[%s1 + $0x88] sm:$0xff]
  %v59 = vunpack.c.l.b16 %v23
  %v60 = vunpack.c.h.b16 %v23
  %v61 = vunpack.c.l.b16 %v24
  %v62 = vunpack.c.h.b16 %v24
  %v63 = vunpack.c.l.b16 %v25
  %v64 = vunpack.c.h.b16 %v25
  %v65 = vunpack.c.l.b16 %v26
  %v66 = vunpack.c.h.b16 %v26
  %v67 = vunpack.c.l.b16 %v27
  %v68 = vunpack.c.h.b16 %v27
  %v69 = vunpack.c.l.b16 %v28
  %v70 = vunpack.c.h.b16 %v28
  %v71 = vunpack.c.l.b16 %v29
  %v72 = vunpack.c.h.b16 %v29
  %v73 = vunpack.c.l.b16 %v30
  %v74 = vunpack.c.h.b16 %v30
  %v75 = vunpack.c.l.b16 %v31
  %v76 = vunpack.c.h.b16 %v31
  %v77 = vunpack.c.l.b16 %v32
  %v78 = vunpack.c.h.b16 %v32
  %v79 = vunpack.c.l.b16 %v33
  %v80 = vunpack.c.h.b16 %v33
  %v81 = vunpack.c.l.b16 %v34
  %v82 = vunpack.c.h.b16 %v34
  %v83 = vunpack.c.l.b16 %v35
  %v84 = vunpack.c.h.b16 %v35
  %v85 = vunpack.c.l.b16 %v36
  %v86 = vunpack.c.h.b16 %v36
  %v87 = vunpack.c.l.b16 %v37
  %v88 = vunpack.c.h.b16 %v37
  %v89 = vunpack.c.l.b16 %v38
  %v90 = vunpack.c.h.b16 %v38
  %v91 = vunpack.c.l.b16 %v39
  %v92 = vunpack.c.h.b16 %v39
  %v93 = vunpack.c.l.b16 %v40
  %v94 = vunpack.c.h.b16 %v40
  %v95 = vpack.c.b16 %v63, %v59
  %v96 = vpack.c.b16 %v64, %v60
  %v97 = vpack.c.b16 %v65, %v61
  %v98 = vpack.c.b16 %v66, %v62
  %v99 = vpack.c.b16 %v71, %v67
  %v100 = vpack.c.b16 %v72, %v68
  %v101 = vpack.c.b16 %v73, %v69
  %v102 = vpack.c.b16 %v74, %v70
  %v103 = vpack.c.b16 %v79, %v75
  %v104 = vpack.c.b16 %v80, %v76
  %v105 = vpack.c.b16 %v81, %v77
  %v106 = vpack.c.b16 %v82, %v78
  %v107 = vpack.c.b16 %v87, %v83
  %v108 = vpack.c.b16 %v88, %v84
  %v109 = vpack.c.b16 %v89, %v85
  %v110 = vpack.c.b16 %v90, %v86
  %v111 = vpack.c.b16 %v91, %v91
  %v112 = vpack.c.b16 %v92, %v92
  %v113 = vpack.c.b16 %v93, %v93
  %v114 = vpack.c.b16 %v94, %v94
  %vm131 = vcmask 588800
  %v133 = vsel %vm131, %v22, 0
  %vm135 = vcmask 1043456
  %v137 = vsel %vm135, %v111, 0
  %v140 = vsel %vm135, %v112, 0
  %v143 = vsel %vm135, %v113, 0
  %v146 = vsel %vm135, %v114, 0
  %148 = vmatprep.subr.bf16.mxu0 %v96
  %149 = vmatpush1.bf16.msra.mxu0 %v95
  %150 = vmatprep.subr.bf16.mxu0 %v100
  %151 = vmatpush1.bf16.msra.mxu0 %v99
  %152 = vmatprep.subr.bf16.mxu0 %v104
  %153 = vmatpush1.bf16.msra.mxu0 %v103
  %154 = vmatprep.subr.bf16.mxu0 %v108
  %155 = vmatpush1.bf16.msra.mxu0 %v107
  %156 = vmatprep.subr.bf16.mxu0 %v140
  %157 = vmatpush1.bf16.msra.mxu0 %v137
  %158 = vmatprep.subr.bf16.mxu0 0
  %159 = vmatpush1.bf16.msra.mxu0 0
  %160 = vmatprep.subr.bf16.mxu0 0
  %161 = vmatpush1.bf16.msra.mxu0 0
  %162 = vmatprep.subr.bf16.mxu0 0
  %163 = vmatpush1.bf16.msra.mxu0 0
  %164 = vmatprep.subr.bf16.mxu0 0
  %165 = vmatpush1.bf16.msra.mxu0 0
  %166 = vmatprep.subr.bf16.mxu0 0
  %167 = vmatpush1.bf16.msra.mxu0 0
  %168 = vmatprep.subr.bf16.mxu0 0
  %169 = vmatpush1.bf16.msra.mxu0 0
  %170 = vmatprep.subr.bf16.mxu0 0
  %171 = vmatpush1.bf16.msra.mxu0 0
  %172 = vmatprep.subr.bf16.mxu0 0
  %173 = vmatpush1.bf16.msra.mxu0 0
  %174 = vmatprep.subr.bf16.mxu0 0
  %175 = vmatpush1.bf16.msra.mxu0 0
  %176 = vmatprep.subr.bf16.mxu0 0
  %177 = vmatpush1.bf16.msra.mxu0 0
  %178 = vmatprep.subr.bf16.mxu0 0
  %179 = vmatpush1.bf16.msra.mxu0 0
  %180 = vmatprep.mubr.bf16.mxu0 0
  %181 = vmatmul.mubr.bf16.gmra.mrb[0].mxu0 %v133
  %v182 = vpop.f32.mrb[0].mxu0
  %v183 = vadd.f32 0.0, %v182
  %v184 = vpop.f32.mrb[0].mxu0
  %v185 = vadd.f32 0.0, %v184
  %v186 = vpop.f32.mrb[0].mxu0
  %v187 = vpop.f32.mrb[0].mxu0
  %188 = vdwg.mxu0
  %189 = vmatprep.subr.bf16.mxu0 %v98
  %190 = vmatpush1.bf16.msra.mxu0 %v97
  %191 = vmatprep.subr.bf16.mxu0 %v102
  %192 = vmatpush1.bf16.msra.mxu0 %v101
  %193 = vmatprep.subr.bf16.mxu0 %v106
  %194 = vmatpush1.bf16.msra.mxu0 %v105
  %195 = vmatprep.subr.bf16.mxu0 %v110
  %196 = vmatpush1.bf16.msra.mxu0 %v109
  %197 = vmatprep.subr.bf16.mxu0 %v146
  %198 = vmatpush1.bf16.msra.mxu0 %v143
  %199 = vmatprep.subr.bf16.mxu0 0
  %200 = vmatpush1.bf16.msra.mxu0 0
  %201 = vmatprep.subr.bf16.mxu0 0
  %202 = vmatpush1.bf16.msra.mxu0 0
  %203 = vmatprep.subr.bf16.mxu0 0
  %204 = vmatpush1.bf16.msra.mxu0 0
  %205 = vmatprep.subr.bf16.mxu0 0
  %206 = vmatpush1.bf16.msra.mxu0 0
  %207 = vmatprep.subr.bf16.mxu0 0
  %208 = vmatpush1.bf16.msra.mxu0 0
  %209 = vmatprep.subr.bf16.mxu0 0
  %210 = vmatpush1.bf16.msra.mxu0 0
  %211 = vmatprep.subr.bf16.mxu0 0
  %212 = vmatpush1.bf16.msra.mxu0 0
  %213 = vmatprep.subr.bf16.mxu0 0
  %214 = vmatpush1.bf16.msra.mxu0 0
  %215 = vmatprep.subr.bf16.mxu0 0
  %216 = vmatpush1.bf16.msra.mxu0 0
  %217 = vmatprep.subr.bf16.mxu0 0
  %218 = vmatpush1.bf16.msra.mxu0 0
  %219 = vmatprep.subr.bf16.mxu0 0
  %220 = vmatpush1.bf16.msra.mxu0 0
  %221 = vmatprep.mubr.bf16.mxu0 0
  %222 = vmatmul.mubr.bf16.gmra.mrb[0].mxu0 %v133
  %v223 = vpop.f32.mrb[0].mxu0
  %v224 = vadd.f32 0.0, %v223
  %v225 = vpop.f32.mrb[0].mxu0
  %v226 = vadd.f32 0.0, %v225
  %v227 = vpop.f32.mrb[0].mxu0
  %v228 = vpop.f32.mrb[0].mxu0
  %229 = vdwg.mxu0
  %v230 = vld [vmem:[#allocation2] sm:$0x1]
  %232 = vset.pattern.permute.xlu0 0
  %233 = vperm.xlu0 %232, %v230
  %v234 = vpop.permute.xlu0 %233
  %v236 = vlaneseq
  %v237 = vshrl.u32 %v236, 7
  %v238 = vsub.s32 0, %v237
  %v239 = vrot.slane %v234, %v238
  %v240 = vmul.f32 %v183, %v239
  %v241 = vmul.f32 %v185, %v239
  %v242 = vmul.f32 %v224, %v239
  %v243 = vmul.f32 %v226, %v239
  %v244 = vld [vmem:[#allocation3] sm:$0x1]
  %246 = vset.pattern.permute.xlu0 0
  %247 = vperm.xlu0 %246, %v244
  %v248 = vpop.permute.xlu0 %247
  %v250 = vlaneseq
  %v251 = vshrl.u32 %v250, 7
  %v252 = vsub.s32 0, %v251
  %v253 = vrot.slane %v248, %v252
  %v254 = vadd.f32 %v240, %v253
  %v255 = vadd.f32 %v241, %v253
  %v256 = vadd.f32 %v242, %v253
  %v257 = vadd.f32 %v243, %v253
  %v258 = vsub.f32 0.0, %v254
  %v259 = vsub.f32 0.0, %v255
  %v260 = vsub.f32 0.0, %v256
  %v261 = vsub.f32 0.0, %v257
  %v262 = vmul.f32 %v258, 1.442695
  %v263 = vpow.pop %v262
  %v264 = vmul.f32 %v259, 1.442695
  %v265 = vpow.pop %v264
  %v266 = vmul.f32 %v260, 1.442695
  %v267 = vpow.pop %v266
  %v268 = vmul.f32 %v261, 1.442695
  %v269 = vpow.pop %v268
  %v270 = vadd.f32 %v263, 1.0
  %v271 = vadd.f32 %v265, 1.0
  %v272 = vadd.f32 %v267, 1.0
  %v273 = vadd.f32 %v269, 1.0
  %v274 = vrcp.pop %v270
  %v275 = vmul.f32 1.0, %v274
  %v276 = vrcp.pop %v271
  %v277 = vmul.f32 1.0, %v276
  %v278 = vrcp.pop %v272
  %v279 = vmul.f32 1.0, %v278
  %v280 = vrcp.pop %v273
  %v281 = vmul.f32 1.0, %v280
  %v286 = vcombine.low %v275, %v277
  %v287 = vcombine.low %v279, %v281
  %v289 = vunpack.c.l.s4 1966171168
  %v290 = vunpack.c.0.s8 %v289
  %v291 = vlaneseq
  %v292 = vshrl.u32 %v291, 7
  %v293 = vsub.s32 %v290, %v292
  %v294 = vrot.slane %v286, %v293
  %v296 = vunpack.c.l.s4 1966171168
  %v297 = vunpack.c.0.s8 %v296
  %v298 = vlaneseq
  %v299 = vshrl.u32 %v298, 7
  %v300 = vsub.s32 %v297, %v299
  %v301 = vrot.slane %v287, %v300
  %v302 = vcombine.low %v294, %v301
  %v304 = vunpack.c.l.s4 1966171168
  %v305 = vunpack.c.0.s8 %v304
  %v306 = vlaneseq
  %v307 = vshrl.u32 %v306, 7
  %v308 = vsub.s32 %v305, %v307
  %v309 = vrot.slane %v302, %v308
  %v311 = vlaneseq
  %vm312 = vcmp.ge.s32.totalorder %v311, 0
  %vm313 = vcmp.lt.s32.totalorder %v311, 512
  %vm314 = vmand %vm312, %vm313
  %315 = vst.msk [vmem:[%s4] sm:$0xf] %vm314, %v309
  // Predicated region
  $region18: #{bbastar_forward.26} parent=0 // pred_check
    _
  $region19: #{bbastar_forward.26} parent=0 // pred_check_branch
    %317 = sbr.rel (0) target = $region21
  $region20: #{bbastar_forward.26} parent=0 // pred_region
    _
  $region21: #{bbastar_forward.26} parent=0 // pred_fallthru
    _
  // Predicated region
  $region22: #{bbastar_forward.26} parent=0 // pred_check
    _
  $region23: #{bbastar_forward.26} parent=0 // pred_check_branch
    %319 = sbr.rel (0) target = $region25
  $region24: #{bbastar_forward.26} parent=0 // pred_region
    _
  $region25: #{bbastar_forward.26} parent=0 // pred_fallthru
    _

// kernel: squeeze.6
$region0: #{squeeze.6}
  %s0 = inlined_call_operand.vmem [shape: f32[2,1,16,16], index: 0, kind: input, shape index: {}]
  %s1 = inlined_call_operand.vmem [shape: f32[2,256], index: 1, kind: output, shape index: {}]
  $region1: #{squeeze.6} parent=0
    #allocation0 [shape = 'u8[8192]{0}', space=vmem, size = 0x2000, scoped, tag = 'scoped mem for output reshape']
    %v2 = vld [vmem:[%s0] ss:$8 sm:$0xf]
    %vm3 = vcmask 130048
    %4 = vst.msk [vmem:[#allocation0] ss:$8 sm:$0x3] %vm3, %v2
    %s5 = scalar_lea.vmem [#allocation0], 4294967281
    %6 = vst.msk [vmem:[%s5] ss:$8 sm:$0xc] %vm3, %v2
    %s7 = scalar_lea.vmem %s0, 7
    %s8 = smov 3
    %v9 = vld [vmem:[%s7] ss:$16 sm:%s8]
    %s10 = scalar_lea.vmem %s0, 4294967279
    %s11 = smov 12
    %v12 = vld [vmem:[%s10] ss:$16 sm:%s11]
    %vm13 = vcmask 1043458
    %v14 = vsel %vm13, %v12, %v9
    %15 = vrot.lane.b32.xlu0 %v14, 112
    %v16 = vpop.permute.xlu0 %15
    %vm17 = vcmask 1048448
    %18 = vst.msk [vmem:[#allocation0] sm:$0x3] %vm17, %v16
    %s19 = scalar_lea.vmem [#allocation0], 6
    %20 = vst.msk [vmem:[%s19] sm:$0xc] %vm17, %v16
    %s21 = scalar_lea.vmem %s0, 6
    %s22 = smov 3
    %v23 = vld [vmem:[%s21] ss:$16 sm:%s22]
    %s24 = scalar_lea.vmem %s0, 4294967278
    %s25 = smov 12
    %v26 = vld [vmem:[%s24] ss:$16 sm:%s25]
    %vm27 = vcmask 1043458
    %v28 = vsel %vm27, %v26, %v23
    %29 = vrot.lane.b32.xlu0 %v28, 96
    %v30 = vpop.permute.xlu0 %29
    %vm31 = vcmask 917248
    %32 = vst.msk [vmem:[#allocation0] sm:$0x3] %vm31, %v30
    %s33 = scalar_lea.vmem [#allocation0], 6
    %34 = vst.msk [vmem:[%s33] sm:$0xc] %vm31, %v30
    %s35 = scalar_lea.vmem %s0, 5
    %s36 = smov 3
    %v37 = vld [vmem:[%s35] ss:$16 sm:%s36]
    %s38 = scalar_lea.vmem %s0, 4294967277
    %s39 = smov 12
    %v40 = vld [vmem:[%s38] ss:$16 sm:%s39]
    %vm41 = vcmask 1043458
    %v42 = vsel %vm41, %v40, %v37
    %43 = vrot.lane.b32.xlu0 %v42, 80
    %v44 = vpop.permute.xlu0 %43
    %vm45 = vcmask 786048
    %46 = vst.msk [vmem:[#allocation0] sm:$0x3] %vm45, %v44
    %s47 = scalar_lea.vmem [#allocation0], 6
    %48 = vst.msk [vmem:[%s47] sm:$0xc] %vm45, %v44
    %s49 = scalar_lea.vmem %s0, 4
    %s50 = smov 3
    %v51 = vld [vmem:[%s49] ss:$16 sm:%s50]
    %s52 = scalar_lea.vmem %s0, 4294967276
    %s53 = smov 12
    %v54 = vld [vmem:[%s52] ss:$16 sm:%s53]
    %vm55 = vcmask 1043458
    %v56 = vsel %vm55, %v54, %v51
    %57 = vrot.lane.b32.xlu0 %v56, 64
    %v58 = vpop.permute.xlu0 %57
    %vm59 = vcmask 654848
    %60 = vst.msk [vmem:[#allocation0] sm:$0x3] %vm59, %v58
    %s61 = scalar_lea.vmem [#allocation0], 6
    %62 = vst.msk [vmem:[%s61] sm:$0xc] %vm59, %v58
    %s63 = scalar_lea.vmem %s0, 3
    %s64 = smov 3
    %v65 = vld [vmem:[%s63] ss:$16 sm:%s64]
    %s66 = scalar_lea.vmem %s0, 4294967275
    %s67 = smov 12
    %v68 = vld [vmem:[%s66] ss:$16 sm:%s67]
    %vm69 = vcmask 1043458
    %v70 = vsel %vm69, %v68, %v65
    %71 = vrot.lane.b32.xlu0 %v70, 48
    %v72 = vpop.permute.xlu0 %71
    %vm73 = vcmask 523648
    %74 = vst.msk [vmem:[#allocation0] sm:$0x3] %vm73, %v72
    %s75 = scalar_lea.vmem [#allocation0], 6
    %76 = vst.msk [vmem:[%s75] sm:$0xc] %vm73, %v72
    %s77 = scalar_lea.vmem %s0, 2
    %s78 = smov 3
    %v79 = vld [vmem:[%s77] ss:$16 sm:%s78]
    %s80 = scalar_lea.vmem %s0, 4294967274
    %s81 = smov 12
    %v82 = vld [vmem:[%s80] ss:$16 sm:%s81]
    %vm83 = vcmask 1043458
    %v84 = vsel %vm83, %v82, %v79
    %85 = vrot.lane.b32.xlu0 %v84, 32
    %v86 = vpop.permute.xlu0 %85
    %vm87 = vcmask 392448
    %88 = vst.msk [vmem:[#allocation0] sm:$0x3] %vm87, %v86
    %s89 = scalar_lea.vmem [#allocation0], 6
    %90 = vst.msk [vmem:[%s89] sm:$0xc] %vm87, %v86
    %s91 = scalar_lea.vmem %s0, 1
    %s92 = smov 3
    %v93 = vld [vmem:[%s91] ss:$16 sm:%s92]
    %s94 = scalar_lea.vmem %s0, 4294967273
    %s95 = smov 12
    %v96 = vld [vmem:[%s94] ss:$16 sm:%s95]
    %vm97 = vcmask 1043458
    %v98 = vsel %vm97, %v96, %v93
    %99 = vrot.lane.b32.xlu0 %v98, 16
    %v100 = vpop.permute.xlu0 %99
    %vm101 = vcmask 261248
    %102 = vst.msk [vmem:[#allocation0] sm:$0x3] %vm101, %v100
    %s103 = scalar_lea.vmem [#allocation0], 6
    %104 = vst.msk [vmem:[%s103] sm:$0xc] %vm101, %v100
    %s106 = sshllo.u32 0, 2
    %v108 = vld [vmem:[#allocation0] sm:%s106]
    %s109 = sshllo.u32 0, 2
    %110 = vst [vmem:[%s1] sm:%s109] %v108
    %s111 = scalar_lea.vmem [#allocation0], 8
    %v112 = vld [vmem:[%s111] sm:%s106]
    %s113 = sshllo.u32 0, 2
    %s114 = scalar_lea.vmem %s1, 2
    %115 = vst [vmem:[%s114] sm:%s113] %v112

// kernel: bbastar_forward.27
$region0: #{bbastar_forward.27}
  #allocation0 [shape = 'u32[]', space=smem, size = 0x4, offset = 0x4, fixed_abs, tag = 'smem constant byte address 0x4 - core index']
  #allocation1 [shape = 'u32[144,128]{1,0:T(1,128)}', space=vmem, size = 0x12000, scoped, tag = 'internal scratch']
  %s0 = inlined_call_operand.vmem [shape: f32[2,256], index: 0, kind: input, shape index: {}]
  %s1 = inlined_call_operand.vmem [shape: f32[2,256], index: 1, kind: input, shape index: {}]
  %s2 = inlined_call_operand.vmem [shape: f32[2,256], index: 2, kind: input, shape index: {}]
  %s3 = inlined_call_operand.vmem [shape: f32[2,256], index: 3, kind: input, shape index: {}]
  %s4 = inlined_call_operand.vmem [shape: f32[2,256], index: 4, kind: input, shape index: {}]
  %s5 = inlined_call_operand.vmem [shape: f32[2,256], index: 5, kind: input, shape index: {}]
  %s6 = inlined_call_operand.vmem [shape: f32[2,256], index: 6, kind: input, shape index: {}]
  %s7 = inlined_call_operand.vmem [shape: s32[2,1], index: 7, kind: input, shape index: {}]
  %s8 = inlined_call_operand.vmem [shape: f32[2,256], index: 8, kind: output, shape index: {0}]
  %s9 = inlined_call_operand.vmem [shape: f32[2,256], index: 9, kind: output, shape index: {1}]
  %10 = xla_tuple %s8, %s9
  %s11 = sld [smem:[#allocation0]]
  $region64: #{bbastar_forward.27} parent=0
    _
  %s13 = ssub.s32 1, %s11
  %s14 = scalar_select 0, %s13, %s11
  // Predicated region
  $region2: #{bbastar_forward.27} parent=0 // pred_check
    _
  $region3: #{bbastar_forward.27} parent=0 // pred_check_branch
    %16 = sbr.rel (0) target = $region5
  $region4: #{bbastar_forward.27} parent=0 // pred_region
    _
  $region5: #{bbastar_forward.27} parent=0 // pred_fallthru
    _
  // Predicated region
  $region6: #{bbastar_forward.27} parent=0 // pred_check
    _
  $region7: #{bbastar_forward.27} parent=0 // pred_check_branch
    %18 = sbr.rel (0) target = $region9
  $region8: #{bbastar_forward.27} parent=0 // pred_region
    _
  $region9: #{bbastar_forward.27} parent=0 // pred_fallthru
    _
  // Predicated region
  $region10: #{bbastar_forward.27} parent=0 // pred_check
    _
  $region11: #{bbastar_forward.27} parent=0 // pred_check_branch
    %20 = sbr.rel (0) target = $region13
  $region12: #{bbastar_forward.27} parent=0 // pred_region
    _
  $region13: #{bbastar_forward.27} parent=0 // pred_fallthru
    _
  // Predicated region
  $region14: #{bbastar_forward.27} parent=0 // pred_check
    _
  $region15: #{bbastar_forward.27} parent=0 // pred_check_branch
    %22 = sbr.rel (0) target = $region17
  $region16: #{bbastar_forward.27} parent=0 // pred_region
    _
  $region17: #{bbastar_forward.27} parent=0 // pred_fallthru
    _
  // Predicated region
  $region18: #{bbastar_forward.27} parent=0 // pred_check
    _
  $region19: #{bbastar_forward.27} parent=0 // pred_check_branch
    %24 = sbr.rel (0) target = $region21
  $region20: #{bbastar_forward.27} parent=0 // pred_region
    _
  $region21: #{bbastar_forward.27} parent=0 // pred_fallthru
    _
  // Predicated region
  $region22: #{bbastar_forward.27} parent=0 // pred_check
    _
  $region23: #{bbastar_forward.27} parent=0 // pred_check_branch
    %26 = sbr.rel (0) target = $region25
  $region24: #{bbastar_forward.27} parent=0 // pred_region
    _
  $region25: #{bbastar_forward.27} parent=0 // pred_fallthru
    _
  // Predicated region
  $region26: #{bbastar_forward.27} parent=0 // pred_check
    _
  $region27: #{bbastar_forward.27} parent=0 // pred_check_branch
    %28 = sbr.rel (0) target = $region29
  $region28: #{bbastar_forward.27} parent=0 // pred_region
    _
  $region29: #{bbastar_forward.27} parent=0 // pred_fallthru
    _
  // Predicated region
  $region30: #{bbastar_forward.27} parent=0 // pred_check
    _
  $region31: #{bbastar_forward.27} parent=0 // pred_check_branch
    %30 = sbr.rel (0) target = $region33
  $region32: #{bbastar_forward.27} parent=0 // pred_region
    _
  $region33: #{bbastar_forward.27} parent=0 // pred_fallthru
    _
  %v31 = vld [vmem:[%s0] sm:$0xf]
  %v32 = vld [vmem:[%s1] sm:$0xf]
  %v33 = vld [vmem:[%s2] sm:$0xf]
  %v34 = vld [vmem:[%s3] sm:$0xf]
  %v35 = vld [vmem:[%s4] sm:$0xf]
  %v36 = vld [vmem:[%s5] sm:$0xf]
  %v37 = vld [vmem:[%s6] sm:$0xf]
  %v38 = vld [vmem:[%s7] sm:$0x3]
  %v39 = vlaneseq
  %v40 = vand.u32 %v39, 127
  %v41 = vadd.s32 %v40, 128
  %v42 = vadd.f32 %v32, %v31
  %v43 = vcvt.s32.f32 %v38
  %45 = vset.pattern.permute.xlu0 0
  %46 = vperm.xlu0 %45, %v43
  %v47 = vpop.permute.xlu0 %46
  // While loop
  $region34: #{bbastar_forward.27} parent=0 // loop_pre_header
    _
  $region35: #{bbastar_forward.27} parent=0 // loop_header
    %v50 = vphi 0.0, %v169
    %v51 = vphi 0.0, %v170
    %v52 = vphi %v33, %v364
    %v53 = vphi 0.0, %v360
    %v54 = vphi 0.0, %v361
    %v55 = vphi %v47, %v369
    %v56 = vphi %v47, %v370
    %s57 = sphi 0, %s384
    %s58 = sphi 0.0, %s383
    %p59 = scmp.lt.s32.totalorder %s57, 64
    %p60 = scmp.lt.f32.partialorder %s58, 0.5
    %p61 = pnand %p59, %p60
    %p62 = pneg %p61
  $region36: #{bbastar_forward.27} parent=0 // loop_header_branch
    %64 = sbr.rel (%p61) target = $region40
  $region37: #{bbastar_forward.27} parent=0 // loop_body
    %v65 = vmul.f32 %v53, 0.5
    %v66 = vmul.f32 %v54, 0.5
    %v67 = vmul.f32 %v42, 0.5
    %v70 = vunpack.c.l.s4 1983009808
    %v71 = vunpack.c.0.s8 %v70
    %v72 = vlaneseq
    %v73 = vshrl.u32 %v72, 7
    %v74 = vsub.s32 %v71, %v73
    %v75 = vrot.slane %v67, %v74
    %v76 = vcombine.high %v75, %v75
    %v79 = vadd.f32 %v65, %v75
    %v80 = vadd.f32 %v66, %v76
    %vm81 = vcmp.gt.f32.partialorder %v52, 0.5
    %v84 = vcombine.low %v79, %v80
    %v86 = vunpack.c.l.s4 1983009808
    %v87 = vunpack.c.0.s8 %v86
    %v88 = vlaneseq
    %v89 = vshrl.u32 %v88, 7
    %v90 = vsub.s32 %v87, %v89
    %v91 = vrot.slane %v84, %v90
    %v93 = vsel %vm81, %v91, 1e+30
    %v96 = vunpack.c.l.s4 1983009808
    %v97 = vunpack.c.0.s8 %v96
    %v98 = vlaneseq
    %v99 = vshrl.u32 %v98, 7
    %v100 = vsub.s32 %v97, %v99
    %v101 = vrot.slane %v93, %v100
    %v102 = vcombine.high %v101, %v101
    %vm105 = vcmask 1041408
    %v106 = vsel %vm105, %v101, inf
    %v107 = vsel %vm105, %v102, inf
    %v108 = vmin.f32 %v106, %v107
    %109 = vmin.xlane.f32.xlu0 %v108
    %v110 = vpop.xlane.xlu0 %109
    %v113 = vunpack.c.l.s4 269488144
    %v114 = vunpack.c.0.s8 %v113
    %v115 = vlaneseq
    %v116 = vshrl.u32 %v115, 7
    %v117 = vsub.s32 %v114, %v116
    %v118 = vrot.slane %v110, %v117
    %vm120 = vcmp.le.f32.partialorder %v93, %v118
    %v121 = vcombine.low %v40, %v41
    %v123 = vunpack.c.l.s4 1983009808
    %v124 = vunpack.c.0.s8 %v123
    %v125 = vlaneseq
    %v126 = vshrl.u32 %v125, 7
    %v127 = vsub.s32 %v124, %v126
    %v128 = vrot.slane %v121, %v127
    %v129 = vsel %vm120, %v128, 256
    %v131 = vunpack.c.l.s4 1983009808
    %v132 = vunpack.c.0.s8 %v131
    %v133 = vlaneseq
    %v134 = vshrl.u32 %v133, 7
    %v135 = vsub.s32 %v132, %v134
    %v136 = vrot.slane %v129, %v135
    %v137 = vcombine.high %v136, %v136
    %v138 = vsel %vm105, %v136, 2147483647
    %v139 = vsel %vm105, %v137, 2147483647
    %vm140 = vcmp.lt.s32.totalorder %v138, %v139
    %v141 = vsel %vm140, %v138, %v139
    %v142 = vand.u32 %v141, 65535
    %v143 = vshra.s32 %v141, 16
    %v144 = vcvt.s32.f32 %v142
    %v145 = vcvt.s32.f32 %v143
    %146 = vmin.xlane.f32.xlu0 %v145
    %v147 = vpop.xlane.xlu0 %146
    %vm148 = vcmp.eq.f32.partialorder %v145, %v147
    %v149 = vsel %vm148, %v144, inf
    %150 = vmin.xlane.f32.xlu0 %v149
    %v151 = vpop.xlane.xlu0 %150
    %v152 = vcvt.f32.s32 %v151
    %v153 = vcvt.f32.s32 %v147
    %v154 = vshll.u32 %v153, 16
    %v155 = vadd.s32 %v154, %v152
    %vm156 = vcmp.eq.s32.totalorder %v40, %v155
    %vm157 = vcmp.eq.s32.totalorder %v41, %v155
    %v158 = vsel %vm156, 1, 0
    %v159 = vsel %vm157, 1, 0
    %v160 = vcvt.s32.f32 %v158
    %v161 = vcvt.s32.f32 %v159
    %vm162 = vcmp.ne.s32.totalorder %v155, %v38
    %v163 = vsel %vm162, 1, 0
    %v164 = vcvt.s32.f32 %v163
    %v165 = vadd.f32 %v50, %v160
    %v166 = vadd.f32 %v51, %v161
    %v167 = vmax.f32 %v165, 0.0
    %v168 = vmax.f32 %v166, 0.0
    %v169 = vmin.f32 %v167, 1.0
    %v170 = vmin.f32 %v168, 1.0
    %172 = vset.pattern.permute.xlu0 0
    %173 = vperm.xlu0 %172, %v164
    %v174 = vpop.permute.xlu0 %173
    %v176 = vmul.f32 %v174, %v160
    %v177 = vmul.f32 %v174, %v161
    %v180 = vcombine.low %v176, %v177
    %v182 = vunpack.c.l.s4 1983009808
    %v183 = vunpack.c.0.s8 %v182
    %v184 = vlaneseq
    %v185 = vshrl.u32 %v184, 7
    %v186 = vsub.s32 %v183, %v185
    %v187 = vrot.slane %v180, %v186
    %v189 = vsub.f32 %v52, %v187
    %v190 = vmax.f32 %v189, 0.0
    %v191 = vmin.f32 %v190, 1.0
    %v192 = vcvt.s32.f32 %v155
    %v195 = vcombine.low %v160, %v161
    %v197 = vunpack.c.l.s4 1983009808
    %v198 = vunpack.c.0.s8 %v197
    %v199 = vlaneseq
    %v200 = vshrl.u32 %v199, 7
    %v201 = vsub.s32 %v198, %v200
    %v202 = vrot.slane %v195, %v201
    %v204 = vmul.f32 %v36, %v202
    %v207 = vunpack.c.l.s4 1983009808
    %v208 = vunpack.c.0.s8 %v207
    %v209 = vlaneseq
    %v210 = vshrl.u32 %v209, 7
    %v211 = vsub.s32 %v208, %v210
    %v212 = vrot.slane %v204, %v211
    %v213 = vcombine.high %v212, %v212
    %v216 = vsel %vm105, %v212, 0.0
    %v217 = vsel %vm105, %v213, 0.0
    %v218 = vadd.f32 %v216, %v217
    %219 = vadd.xlane.f32.xlu0 %v218
    %v220 = vpop.xlane.xlu0 %219
    %v221 = vmul.f32 %v220, 16.0
    %v222 = vsub.f32 %v192, %v221
    %v225 = vunpack.c.l.s4 269488144
    %v226 = vunpack.c.0.s8 %v225
    %v227 = vlaneseq
    %v228 = vshrl.u32 %v227, 7
    %v229 = vsub.s32 %v226, %v228
    %v230 = vrot.slane %v220, %v229
    %v232 = vsub.f32 %v36, %v230
    %v233 = vand.u32 2147483647, %v232
    %vm234 = vcmp.le.f32.partialorder %v233, 1.5
    %v237 = vunpack.c.l.s4 269488144
    %v238 = vunpack.c.0.s8 %v237
    %v239 = vlaneseq
    %v240 = vshrl.u32 %v239, 7
    %v241 = vsub.s32 %v238, %v240
    %v242 = vrot.slane %v222, %v241
    %v244 = vsub.f32 %v37, %v242
    %v245 = vand.u32 2147483647, %v244
    %vm246 = vcmp.le.f32.partialorder %v245, 1.5
    %vm247 = vmand %vm234, %vm246
    %vm248 = vcmp.ne.s32.totalorder %v40, %v155
    %vm249 = vcmp.ne.s32.totalorder %v41, %v155
    %v250 = vsel %vm248, 1, 0
    %v251 = vsel %vm249, 1, 0
    %v252 = vcombine.low %v250, %v251
    %v254 = vunpack.c.l.s4 1983009808
    %v255 = vunpack.c.0.s8 %v254
    %v256 = vlaneseq
    %v257 = vshrl.u32 %v256, 7
    %v258 = vsub.s32 %v255, %v257
    %v259 = vrot.slane %v252, %v258
    %vm260 = vcmp.ne.s32.totalorder %v259, 0
    %vm261 = vmand %vm247, %vm260
    %v262 = vsel %vm261, 1, 0
    %v263 = vcvt.s32.f32 %v262
    %v264 = vmul.f32 %v263, %v35
    %v267 = vunpack.c.l.s4 1983009808
    %v268 = vunpack.c.0.s8 %v267
    %v269 = vlaneseq
    %v270 = vshrl.u32 %v269, 7
    %v271 = vsub.s32 %v268, %v270
    %v272 = vrot.slane %v31, %v271
    %v273 = vcombine.high %v272, %v272
    %v276 = vadd.f32 %v53, %v272
    %v277 = vadd.f32 %v54, %v273
    %v278 = vmul.f32 %v276, %v160
    %v279 = vmul.f32 %v277, %v161
    %v280 = vsel %vm105, %v278, 0.0
    %v281 = vsel %vm105, %v279, 0.0
    %v282 = vadd.f32 %v280, %v281
    %283 = vadd.xlane.f32.xlu0 %v282
    %v284 = vpop.xlane.xlu0 %283
    %v287 = vunpack.c.l.s4 1983009808
    %v288 = vunpack.c.0.s8 %v287
    %v289 = vlaneseq
    %v290 = vshrl.u32 %v289, 7
    %v291 = vsub.s32 %v288, %v290
    %v292 = vrot.slane %v263, %v291
    %v293 = vcombine.high %v292, %v292
    %v296 = vmul.f32 %v284, %v292
    %v297 = vmul.f32 %v284, %v293
    %v298 = vsub.f32 1.0, %v191
    %v299 = vsub.f32 1.0, %v169
    %v300 = vsub.f32 1.0, %v170
    %v303 = vcombine.low %v299, %v300
    %v305 = vunpack.c.l.s4 1983009808
    %v306 = vunpack.c.0.s8 %v305
    %v307 = vlaneseq
    %v308 = vshrl.u32 %v307, 7
    %v309 = vsub.s32 %v306, %v308
    %v310 = vrot.slane %v303, %v309
    %v312 = vmul.f32 %v298, %v310
    %vm313 = vcmp.gt.f32.partialorder %v53, %v296
    %vm314 = vcmp.gt.f32.partialorder %v54, %v297
    %v315 = vsel %vm313, 1, 0
    %v316 = vsel %vm314, 1, 0
    %v317 = vcvt.s32.f32 %v315
    %v318 = vcvt.s32.f32 %v316
    %v321 = vcombine.low %v317, %v318
    %v323 = vunpack.c.l.s4 1983009808
    %v324 = vunpack.c.0.s8 %v323
    %v325 = vlaneseq
    %v326 = vshrl.u32 %v325, 7
    %v327 = vsub.s32 %v324, %v326
    %v328 = vrot.slane %v321, %v327
    %v330 = vmul.f32 %v191, %v328
    %v331 = vadd.f32 %v312, %v330
    %v332 = vmul.f32 %v331, %v264
    %v335 = vunpack.c.l.s4 1983009808
    %v336 = vunpack.c.0.s8 %v335
    %v337 = vlaneseq
    %v338 = vshrl.u32 %v337, 7
    %v339 = vsub.s32 %v336, %v338
    %v340 = vrot.slane %v332, %v339
    %v341 = vcombine.high %v340, %v340
    %v344 = vmul.f32 %v296, %v340
    %v345 = vmul.f32 %v297, %v341
    %v346 = vsub.f32 1.0, %v332
    %v349 = vunpack.c.l.s4 1983009808
    %v350 = vunpack.c.0.s8 %v349
    %v351 = vlaneseq
    %v352 = vshrl.u32 %v351, 7
    %v353 = vsub.s32 %v350, %v352
    %v354 = vrot.slane %v346, %v353
    %v355 = vcombine.high %v354, %v354
    %v358 = vmul.f32 %v53, %v354
    %v359 = vmul.f32 %v54, %v355
    %v360 = vadd.f32 %v344, %v358
    %v361 = vadd.f32 %v345, %v359
    %v362 = vadd.f32 %v191, %v332
    %v363 = vmax.f32 %v362, 0.0
    %v364 = vmin.f32 %v363, 1.0
    %v365 = vmul.f32 %v192, %v340
    %v366 = vmul.f32 %v192, %v341
    %v367 = vmul.f32 %v55, %v354
    %v368 = vmul.f32 %v56, %v355
    %v369 = vadd.f32 %v365, %v367
    %v370 = vadd.f32 %v366, %v368
    %vm371 = vcmask 1024
    %v372 = vsel %vm371, %v164, 0.0
    %373 = vadd.xlane.f32.xlu0 %v372
    %v374 = vpop.xlane.xlu0 %373
    %v375 = vrot.slane %v374, 4
    %v376 = vadd.f32 %v374, %v375
    %v377 = vrot.slane %v376, 2
    %v378 = vadd.f32 %v376, %v377
    %v379 = vrot.slane %v378, 1
    %v380 = vadd.f32 %v378, %v379
    %s381 = vtos %v380
    %p382 = scmp.lt.f32.partialorder %s381, 0.5
    %s383 = scalar_select %p382, 1.0, 0.0
    %s384 = sadd.s32 %s57, 1
  $region38: #{bbastar_forward.27} parent=0 // loop_footer
    _
  $region39: #{bbastar_forward.27} parent=0 // loop_footer_branch
    %49 = sbr.rel target = $region35
  $region40: #{bbastar_forward.27} parent=0 // loop_exit
    _
  %v387 = vcombine.low %v50, %v51
  %v389 = vunpack.c.l.s4 1983009808
  %v390 = vunpack.c.0.s8 %v389
  %v391 = vlaneseq
  %v392 = vshrl.u32 %v391, 7
  %v393 = vsub.s32 %v390, %v392
  %v394 = vrot.slane %v387, %v393
  %396 = vst [vmem:[%s8] sm:$0xf] %v394
  %s397 = ssub.s32 %s57, 1
  %v400 = vunpack.c.l.s4 1983009808
  %v401 = vunpack.c.0.s8 %v400
  %v402 = vlaneseq
  %v403 = vshrl.u32 %v402, 7
  %v404 = vsub.s32 %v401, %v403
  %v405 = vrot.slane %v34, %v404
  %v406 = vcombine.high %v405, %v405
  %v409 = vmul.f32 %v55, %v405
  %v410 = vmul.f32 %v56, %v406
  %vm411 = vcmask 1041408
  %v412 = vsel %vm411, %v409, 0.0
  %v413 = vsel %vm411, %v410, 0.0
  %v414 = vadd.f32 %v412, %v413
  %415 = vadd.xlane.f32.xlu0 %v414
  %v416 = vpop.xlane.xlu0 %415
  // While loop
  $region41: #{bbastar_forward.27} parent=0 // loop_pre_header
    _
  $region42: #{bbastar_forward.27} parent=0 // loop_header
    %v418 = vphi %v34, %v443
    %v419 = vphi %v416, %v450
    %s420 = sphi 0, %s451
    %p421 = scmp.lt.s32.totalorder %s420, %s397
    %p422 = pneg %p421
  $region43: #{bbastar_forward.27} parent=0 // loop_header_branch
    %424 = sbr.rel (%p422) target = $region47
  $region44: #{bbastar_forward.27} parent=0 // loop_body
    %v425 = vcvt.f32.s32.to.zero.pseudo %v419
    %vm426 = vcmp.eq.s32.totalorder %v40, %v425
    %vm427 = vcmp.eq.s32.totalorder %v41, %v425
    %v428 = vsel %vm426, 1, 0
    %v429 = vsel %vm427, 1, 0
    %v430 = vcvt.s32.f32 %v428
    %v431 = vcvt.s32.f32 %v429
    %v434 = vcombine.low %v430, %v431
    %v436 = vunpack.c.l.s4 1983009808
    %v437 = vunpack.c.0.s8 %v436
    %v438 = vlaneseq
    %v439 = vshrl.u32 %v438, 7
    %v440 = vsub.s32 %v437, %v439
    %v441 = vrot.slane %v434, %v440
    %v443 = vmax.f32 %v418, %v441
    %v444 = vmul.f32 %v55, %v430
    %v445 = vmul.f32 %v56, %v431
    %v446 = vsel %vm411, %v444, 0.0
    %v447 = vsel %vm411, %v445, 0.0
    %v448 = vadd.f32 %v446, %v447
    %449 = vadd.xlane.f32.xlu0 %v448
    %v450 = vpop.xlane.xlu0 %449
    %s451 = sadd.s32 %s420, 1
  $region45: #{bbastar_forward.27} parent=0 // loop_footer
    _
  $region46: #{bbastar_forward.27} parent=0 // loop_footer_branch
    %417 = sbr.rel target = $region42
  $region47: #{bbastar_forward.27} parent=0 // loop_exit
    _
  %452 = vst [vmem:[%s9] sm:$0xf] %v418
  // Predicated region
  $region48: #{bbastar_forward.27} parent=0 // pred_check
    _
  $region49: #{bbastar_forward.27} parent=0 // pred_check_branch
    %454 = sbr.rel (0) target = $region51
  $region50: #{bbastar_forward.27} parent=0 // pred_region
    _
  $region51: #{bbastar_forward.27} parent=0 // pred_fallthru
    _
  // Predicated region
  $region52: #{bbastar_forward.27} parent=0 // pred_check
    _
  $region53: #{bbastar_forward.27} parent=0 // pred_check_branch
    %456 = sbr.rel (0) target = $region55
  $region54: #{bbastar_forward.27} parent=0 // pred_region
    _
  $region55: #{bbastar_forward.27} parent=0 // pred_fallthru
    _
  // Predicated region
  $region56: #{bbastar_forward.27} parent=0 // pred_check
    _
  $region57: #{bbastar_forward.27} parent=0 // pred_check_branch
    %458 = sbr.rel (0) target = $region59
  $region58: #{bbastar_forward.27} parent=0 // pred_region
    _
  $region59: #{bbastar_forward.27} parent=0 // pred_fallthru
    _
  // Predicated region
  $region60: #{bbastar_forward.27} parent=0 // pred_check
    _
  $region61: #{bbastar_forward.27} parent=0 // pred_check_branch
    %460 = sbr.rel (0) target = $region63
  $region62: #{bbastar_forward.27} parent=0 // pred_region
    _
  $region63: #{bbastar_forward.27} parent=0 // pred_fallthru
    _

</llo_original>
